<compile_context>
chip_gen: v5e
topology: v5e:2x2
jax: 0.10.0
libtpu: 0.0.40
codegen_flags: <defaults>
</compile_context>

<pallas_src>
import functools
import math

import jax
import jax.numpy as jnp
from jax import lax
from jax.experimental import pallas as pl
from jax.experimental.pallas import tpu as pltpu

BF16 = jnp.bfloat16
F32 = jnp.float32


# ----------------------------- small helpers --------------------------------

def _pick_tile(dim, candidates):
    """Largest candidate tile that evenly divides `dim`; else the full dim (single block)."""
    for c in candidates:
        if dim >= c and dim % c == 0:
            return c
    return dim


def _layernorm(z, g, b, eps):
    mean = jnp.mean(z, axis=-1, keepdims=True)
    c = z - mean
    var = jnp.mean(c * c, axis=-1, keepdims=True)
    return c * lax.rsqrt(var + eps) * g + b


def _mha_out(q, k, v, wo, num_heads, scale, bias, causal):
    """Multi-head attention fused with the output projection, all in-kernel.

    out = concat_h(softmax(q_h k_h^T * scale + bias) v_h) @ wo^T
        = sum_h softmax(.)_h v_h @ wo[:, h*Dh:(h+1)*Dh]^T
    Heads are a static, unrolled Python loop: only 2-D MXU dots, lane slices and adds
    (no 3-D transposes/reshapes, no lane concat) -> simple Mosaic lowering, no per-head
    grid axis. Softmax stats in f32; QK / PV / out-proj operands in bf16."""
    Tq, D = q.shape
    Tk = k.shape[0]
    Dh = D // num_heads
    if causal:
        row = lax.broadcasted_iota(jnp.int32, (Tq, Tk), 0)
        col = lax.broadcasted_iota(jnp.int32, (Tq, Tk), 1)
        future = col > row
    out = jnp.zeros((Tq, wo.shape[0]), F32)
    for h in range(num_heads):
        sl = slice(h * Dh, (h + 1) * Dh)
        qh = q[:, sl].astype(BF16)
        kh = k[:, sl].astype(BF16)
        vh = v[:, sl].astype(BF16)
        s = lax.dot_general(qh, kh, (((1,), (1,)), ((), ())),
                            preferred_element_type=F32) * scale                 # [Tq, Tk] f32
        if bias is not None:
            s = s + bias                      # additive float key-padding mask (+1.0 at pads)
        if causal:
            s = jnp.where(future, jnp.float32(-1e30), s)
        m = jnp.max(s, axis=-1, keepdims=True)
        p = jnp.exp(s - m)
        l = jnp.sum(p, axis=-1, keepdims=True)
        p = p * pl.reciprocal(l, approx=True)                                   # EUP slot
        oh = jnp.dot(p.astype(BF16), vh, preferred_element_type=F32)            # [Tq, Dh]
        out = out + lax.dot_general(oh.astype(BF16), wo[:, sl],
                                    (((1,), (1,)), ((), ())),
                                    preferred_element_type=F32)                 # [Tq, D_out]
    return out


def _bcast2d(shape):
    """BlockSpec for a full (grid-invariant) 2-D operand broadcast across the batch grid."""
    return pl.BlockSpec(shape, lambda b: (0, 0))


# ---------------- fused self-attention block (QKV+MHA+out-proj+res+LN) ------

def _self_attn_block_kernel(x_ref, pad_ref, wqkv_ref, bqkv_ref, wo_ref, bo_ref,
                            g_ref, be_ref, o_ref, *, num_heads, scale, eps):
    x = x_ref[...]                                                       # [T, D] bf16
    D = x.shape[-1]
    qkv = lax.dot_general(x, wqkv_ref[...], (((1,), (1,)), ((), ())),
                          preferred_element_type=F32) + bqkv_ref[...]    # [T, 3D] f32
    out = _mha_out(qkv[:, :D], qkv[:, D:2 * D], qkv[:, 2 * D:], wo_ref[...],
                   num_heads, scale, bias=pad_ref[...], causal=True) + bo_ref[...]
    z = x.astype(F32) + out
    o_ref[...] = _layernorm(z, g_ref[...], be_ref[...], eps).astype(o_ref.dtype)


def pallas_self_attn_block(x, pad_bias, wqkv, bqkv, wo, bo, g, be, *, num_heads, eps=1e-5):
    """x: [B,T,D] bf16, pad_bias: [B,1,T] f32 (additive), weights bf16 -> [B,T,D] bf16."""
    B, T, D = x.shape
    scale = 1.0 / math.sqrt(D // num_heads)
    return pl.pallas_call(
        functools.partial(_self_attn_block_kernel, num_heads=num_heads, scale=scale, eps=eps),
        out_shape=jax.ShapeDtypeStruct((B, T, D), BF16),
        grid_spec=pltpu.PrefetchScalarGridSpec(
            num_scalar_prefetch=0, grid=(B,),
            in_specs=[pl.BlockSpec((None, T, D), lambda b: (b, 0, 0)),
                      pl.BlockSpec((None, 1, T), lambda b: (b, 0, 0)),
                      _bcast2d((3 * D, D)), _bcast2d((1, 3 * D)),
                      _bcast2d((D, D)), _bcast2d((1, D)),
                      _bcast2d((1, D)), _bcast2d((1, D))],
            out_specs=pl.BlockSpec((None, T, D), lambda b: (b, 0, 0))),
        compiler_params=pltpu.CompilerParams(dimension_semantics=("parallel",)),
    )(x, pad_bias, wqkv, bqkv.reshape(1, -1), wo, bo.reshape(1, -1),
      g.reshape(1, -1), be.reshape(1, -1))


# --------------- fused cross-attention block (Q/KV+MHA+out-proj+res+LN) -----

def _cross_attn_block_kernel(x_ref, mem_ref, wq_ref, bq_ref, wkv_ref, bkv_ref,
                             wo_ref, bo_ref, g_ref, be_ref, o_ref, *, num_heads, scale, eps):
    x = x_ref[...]                                                       # [Tq, D] bf16
    mem = mem_ref[...]                                                   # [Tk, D] bf16
    D = x.shape[-1]
    q = lax.dot_general(x, wq_ref[...], (((1,), (1,)), ((), ())),
                        preferred_element_type=F32) + bq_ref[...]        # [Tq, D] f32
    kv = lax.dot_general(mem, wkv_ref[...], (((1,), (1,)), ((), ())),
                         preferred_element_type=F32) + bkv_ref[...]      # [Tk, 2D] f32
    out = _mha_out(q, kv[:, :D], kv[:, D:], wo_ref[...],
                   num_heads, scale, bias=None, causal=False) + bo_ref[...]
    z = x.astype(F32) + out
    o_ref[...] = _layernorm(z, g_ref[...], be_ref[...], eps).astype(o_ref.dtype)


def pallas_cross_attn_block(x, mem, wq, bq, wkv, bkv, wo, bo, g, be, *, num_heads, eps=1e-5):
    """x: [B,Tq,D], mem: [B,Tk,D] (both bf16), weights bf16 -> [B,Tq,D] bf16. No mask."""
    B, Tq, D = x.shape
    Tk = mem.shape[1]
    scale = 1.0 / math.sqrt(D // num_heads)
    return pl.pallas_call(
        functools.partial(_cross_attn_block_kernel, num_heads=num_heads, scale=scale, eps=eps),
        out_shape=jax.ShapeDtypeStruct((B, Tq, D), BF16),
        grid_spec=pltpu.PrefetchScalarGridSpec(
            num_scalar_prefetch=0, grid=(B,),
            in_specs=[pl.BlockSpec((None, Tq, D), lambda b: (b, 0, 0)),
                      pl.BlockSpec((None, Tk, D), lambda b: (b, 0, 0)),
                      _bcast2d((D, D)), _bcast2d((1, D)),
                      _bcast2d((2 * D, D)), _bcast2d((1, 2 * D)),
                      _bcast2d((D, D)), _bcast2d((1, D)),
                      _bcast2d((1, D)), _bcast2d((1, D))],
            out_specs=pl.BlockSpec((None, Tq, D), lambda b: (b, 0, 0))),
        compiler_params=pltpu.CompilerParams(dimension_semantics=("parallel",)),
    )(x, mem, wq, bq.reshape(1, -1), wkv, bkv.reshape(1, -1), wo, bo.reshape(1, -1),
      g.reshape(1, -1), be.reshape(1, -1))


# --------------------- fused FFN block (up+ReLU+down+res+LN) ----------------

def _ffn_block_kernel(x_ref, w1_ref, b1_ref, w2_ref, b2_ref, g_ref, be_ref, o_ref, *, eps):
    x = x_ref[...]                                                       # [T, D] bf16
    h = lax.dot_general(x, w1_ref[...], (((1,), (1,)), ((), ())),
                        preferred_element_type=F32) + b1_ref[...]        # [T, F] f32
    h = jnp.maximum(h, 0.0)
    out = lax.dot_general(h.astype(BF16), w2_ref[...], (((1,), (1,)), ((), ())),
                          preferred_element_type=F32) + b2_ref[...]      # [T, D] f32
    z = x.astype(F32) + out
    o_ref[...] = _layernorm(z, g_ref[...], be_ref[...], eps).astype(o_ref.dtype)


def pallas_ffn_block(x, w1, b1, w2, b2, g, be, *, eps=1e-5):
    """LayerNorm(x + relu(x@w1.T+b1)@w2.T+b2).  x: [B,T,D] bf16 -> [B,T,D] bf16."""
    B, T, D = x.shape
    F = w1.shape[0]
    return pl.pallas_call(
        functools.partial(_ffn_block_kernel, eps=eps),
        out_shape=jax.ShapeDtypeStruct((B, T, D), BF16),
        grid_spec=pltpu.PrefetchScalarGridSpec(
            num_scalar_prefetch=0, grid=(B,),
            in_specs=[pl.BlockSpec((None, T, D), lambda b: (b, 0, 0)),
                      _bcast2d((F, D)), _bcast2d((1, F)),
                      _bcast2d((D, F)), _bcast2d((1, D)),
                      _bcast2d((1, D)), _bcast2d((1, D))],
            out_specs=pl.BlockSpec((None, T, D), lambda b: (b, 0, 0))),
        compiler_params=pltpu.CompilerParams(dimension_semantics=("parallel",)),
    )(x, w1, b1.reshape(1, -1), w2, b2.reshape(1, -1), g.reshape(1, -1), be.reshape(1, -1))


# ----------------- general tiled Linear (+bias/ReLU) for big/standalone GEMMs

def _linear_kernel(x_ref, w_ref, b_ref, o_ref, acc_ref, *, activation):
    @pl.when(pl.program_id(2) == 0)
    def _():
        acc_ref[...] = jnp.zeros_like(acc_ref)

    # x: [tm, tk] bf16, w: [tn, tk] bf16 (PyTorch [out,in] layout -> trans-B contraction).
    acc_ref[...] += lax.dot_general(x_ref[...], w_ref[...],
                                    (((1,), (1,)), ((), ())),
                                    preferred_element_type=F32)

    @pl.when(pl.program_id(2) == pl.num_programs(2) - 1)
    def _():
        y = acc_ref[...] + b_ref[...]
        if activation == "relu":
            y = jnp.maximum(y, 0.0)
        o_ref[...] = y.astype(o_ref.dtype)


def pallas_linear(x, w, b, *, activation=None, out_dtype=BF16):
    """y = act(x @ w.T + b).  x: [M,K] bf16, w: [N,K] bf16 (PyTorch layout), b: [N] f32."""
    M, K = x.shape
    N, K2 = w.shape
    assert K == K2
    if x.dtype != BF16:
        x = x.astype(BF16)
    if w.dtype != BF16:
        w = w.astype(BF16)
    tm = _pick_tile(M, (512, 256, 128, 64, 32, 16, 8))
    tn = _pick_tile(N, (1024, 512, 256, 128))
    tk = _pick_tile(K, (512, 256, 128))
    # v7x has 2 TensorCores: guarantee >=2 parallel grid steps when possible. Halve tm (not tn)
    # so the output block stays lane-dense.
    while (M // tm) * (N // tn) < 2 and tm >= 16:
        tm //= 2
    grid = (M // tm, N // tn, K // tk)
    return pl.pallas_call(
        functools.partial(_linear_kernel, activation=activation),
        out_shape=jax.ShapeDtypeStruct((M, N), out_dtype),
        grid_spec=pltpu.PrefetchScalarGridSpec(
            num_scalar_prefetch=0, grid=grid,
            in_specs=[pl.BlockSpec((tm, tk), lambda i, j, k: (i, k)),
                      # TODO(synk): on v6e a deeper weight prefetch (pipeline_mode=pl.Buffered(3))
                      # and vmem_limit_bytes > 32MiB help once the K axis is long; defaults here.
                      pl.BlockSpec((tn, tk), lambda i, j, k: (j, k)),
                      pl.BlockSpec((1, tn), lambda i, j, k: (0, j))],
            out_specs=pl.BlockSpec((tm, tn), lambda i, j, k: (i, j)),
            scratch_shapes=[pltpu.VMEM((tm, tn), F32)]),
        compiler_params=pltpu.CompilerParams(
            dimension_semantics=("parallel", "parallel", "arbitrary")),
    )(x, w, b.reshape(1, N).astype(F32))


# ------------------------------- JAX glue -----------------------------------

def decoder_layer(x, memory, pad_bias, lp, num_heads):
    """Post-norm nn.TransformerDecoderLayer (relu activation, eval-mode dropout)."""
    sa = lp['self_attn']
    x = pallas_self_attn_block(x, pad_bias, sa['in_proj_w'], sa['in_proj_b'],
                               sa['out_w'], sa['out_b'], lp['ln1_g'], lp['ln1_b'],
                               num_heads=num_heads)
    ca = lp['cross_attn']
    x = pallas_cross_attn_block(x, memory, ca['q_w'], ca['q_b'], ca['kv_w'], ca['kv_b'],
                                ca['out_w'], ca['out_b'], lp['ln2_g'], lp['ln2_b'],
                                num_heads=num_heads)
    x = pallas_ffn_block(x, lp['ffn_w1'], lp['ffn_b1'], lp['ffn_w2'], lp['ffn_b2'],
                         lp['ln3_g'], lp['ln3_b'])
    return x


def transformer_forward(params, image, target, *, num_heads, pad_idx, patch, vocab):
    D = params['dec_pos'].shape[-1]

    # ------------------------------ Encoder -------------------------------
    # TODO(synk): the pretrained timm backbone is an arbitrary external model; it is replaced
    # by a deterministic ViT-style patch-embedding stub. The Encoder bottleneck
    # (AdaptiveAvgPool1d over channels) is linear, so it is folded into patch_w_pooled at init
    # (the CLS token is produced-and-dropped by the reference, so it is omitted entirely).
    B, C, H, W = image.shape
    P = patch
    xp = image.reshape(B, C, H // P, P, W // P, P)
    xp = xp.transpose(0, 2, 4, 1, 3, 5).reshape(B, (H // P) * (W // P), C * P * P)
    N = xp.shape[1]
    enc = pallas_linear(xp.reshape(B * N, -1).astype(BF16),
                        params['patch_w_pooled'], params['patch_b_pooled']).reshape(B, N, D)

    # ------------------------------ Decoder -------------------------------
    T = target.shape[1]
    # Mask module: the causal part is generated inside the attention kernel; the key-padding
    # part replicates `tgt_key_padding_mask=target_padding_mask.float()` -> an ADDITIVE float
    # mask (+1.0 on padded key logits), matching the reference semantics (not -inf masking).
    pad_bias = (target == pad_idx).astype(F32).reshape(B, 1, T)

    tgt = (jnp.take(params['embedding'], target, axis=0) + params['dec_pos']).astype(BF16)
    mem = (enc.astype(F32) + params['enc_pos']).astype(BF16)
    # decoder_pos_drop / encoder_pos_drop: eval-mode dropout == identity

    for lp in params['layers']:
        tgt = decoder_layer(tgt, mem, pad_bias, lp, num_heads)

    # Vocab head: weight zero-padded to a multiple of 128 at init for a lane-dense store.
    logits = pallas_linear(tgt.reshape(B * T, D), params['out_w'], params['out_b'],
                           out_dtype=F32)
    return logits[:, :vocab].reshape(B, T, vocab)


# ---------------------------- parameter init --------------------------------

def init_params(key, *, dim, num_heads, num_layers, vocab, enc_len, tgt_len, ffn,
                feat_ch, patch, in_ch):
    assert dim % num_heads == 0
    assert feat_ch % dim == 0
    keys = iter(jax.random.split(key, 64 + 32 * num_layers))

    def xavier(out_d, in_d):
        lim = math.sqrt(6.0 / (in_d + out_d))
        return jax.random.uniform(next(keys), (out_d, in_d), dtype=F32,
                                  minval=-lim, maxval=lim)

    def trunc(shape, std=0.02):
        return std * jax.random.truncated_normal(next(keys), -2.0, 2.0, shape, F32)

    layers = []
    for _ in range(num_layers):
        cross_w = xavier(3 * dim, dim)       # MHA packed in_proj init, pre-split (q | kv) so
        layers.append(dict(                  # the cross-attn kernel never slices weights.
            self_attn=dict(in_proj_w=xavier(3 * dim, dim).astype(BF16),
                           in_proj_b=jnp.zeros((3 * dim,), F32),
                           out_w=xavier(dim, dim).astype(BF16),
                           out_b=jnp.zeros((dim,), F32)),
            cross_attn=dict(q_w=cross_w[:dim].astype(BF16),
                            q_b=jnp.zeros((dim,), F32),
                            kv_w=cross_w[dim:].astype(BF16),
                            kv_b=jnp.zeros((2 * dim,), F32),
                            out_w=xavier(dim, dim).astype(BF16),
                            out_b=jnp.zeros((dim,), F32)),
            ffn_w1=xavier(ffn, dim).astype(BF16), ffn_b1=jnp.zeros((ffn,), F32),
            ffn_w2=xavier(dim, ffn).astype(BF16), ffn_b2=jnp.zeros((dim,), F32),
            ln1_g=jnp.ones((dim,), F32), ln1_b=jnp.zeros((dim,), F32),
            ln2_g=jnp.ones((dim,), F32), ln2_b=jnp.zeros((dim,), F32),
            ln3_g=jnp.ones((dim,), F32), ln3_b=jnp.zeros((dim,), F32),
        ))

    # Patch-embedding stub with AdaptiveAvgPool1d(out_dim) folded in: pooling contiguous groups
    # of k=feat_ch//dim output channels is a linear map, so it is merged into the weight.
    patch_w = xavier(feat_ch, in_ch * patch * patch)
    k = feat_ch // dim
    patch_w_pooled = patch_w.reshape(dim, k, in_ch * patch * patch).mean(axis=1).astype(BF16)
    patch_b_pooled = jnp.zeros((dim,), F32)

    # Vocab head zero-padded to a multiple of 128 (lane-dense output store; sliced in wrapper).
    vocab_pad = ((vocab + 127) // 128) * 128
    out_w = jnp.pad(xavier(vocab, dim), ((0, vocab_pad - vocab), (0, 0))).astype(BF16)
    out_b = jnp.zeros((vocab_pad,), F32)

    return dict(
        embedding=xavier(vocab, dim),
        dec_pos=trunc((1, tgt_len, dim)),      # PosEmbeddings(max_len - 1, dim)
        enc_pos=trunc((1, enc_len, dim)),      # PosEmbeddings(encoder_length, dim)
        out_w=out_w, out_b=out_b,
        patch_w_pooled=patch_w_pooled, patch_b_pooled=patch_b_pooled,
        layers=layers,
    )


# --------------------------------- main --------------------------------------

if __name__ == "__main__":
    B, IN_CH, IMG = 2, 3, 16
    PATCH = 4
    FEAT_CH = 64                   # backbone token channel width (stub)
    DIM = 32                       # features_dim / d_model
    NUM_HEADS = 4
    NUM_LAYERS = 2
    VOCAB = 50
    MAX_LEN = 9                    # target sequence length = max_len - 1 = 8
    ENC_LEN = (IMG // PATCH) ** 2  # 16 encoder tokens
    FFN = 2048                     # nn.TransformerDecoderLayer default dim_feedforward
    PAD_IDX = 0

    key = jax.random.PRNGKey(0)
    k_param, k_img, k_tgt = jax.random.split(key, 3)
    params = init_params(k_param, dim=DIM, num_heads=NUM_HEADS, num_layers=NUM_LAYERS,
                         vocab=VOCAB, enc_len=ENC_LEN, tgt_len=MAX_LEN - 1, ffn=FFN,
                         feat_ch=FEAT_CH, patch=PATCH, in_ch=IN_CH)

    image = jax.random.normal(k_img, (B, IN_CH, IMG, IMG), F32)
    target = jax.random.randint(k_tgt, (B, MAX_LEN - 1), 0, VOCAB)
    target = target.at[:, -2:].set(PAD_IDX)   # ensure some pad tokens exist

    fwd = jax.jit(functools.partial(transformer_forward, num_heads=NUM_HEADS,
                                    pad_idx=PAD_IDX, patch=PATCH, vocab=VOCAB))
    logits = fwd(params, image, target)
    jax.block_until_ready(logits)

    assert logits.shape == (B, MAX_LEN - 1, VOCAB), logits.shape
    assert bool(jnp.all(jnp.isfinite(logits)))
    print("KERNEL_OK")
</pallas_src>

<mosaic_0001>
module attributes {stable_mosaic.version = 11 : i64} {
  func.func @_self_attn_block_kernel(%arg0: i32, %arg1: memref<1x8x32xbf16, #tpu.memory_space<vmem>>, %arg2: memref<1x1x8xf32, #tpu.memory_space<vmem>>, %arg3: memref<96x32xbf16, #tpu.memory_space<vmem>>, %arg4: memref<1x96xf32, #tpu.memory_space<vmem>>, %arg5: memref<32x32xbf16, #tpu.memory_space<vmem>>, %arg6: memref<1x32xf32, #tpu.memory_space<vmem>>, %arg7: memref<1x32xf32, #tpu.memory_space<vmem>>, %arg8: memref<1x32xf32, #tpu.memory_space<vmem>>, %arg9: memref<1x8x32xbf16, #tpu.memory_space<vmem>>) attributes {dimension_semantics = [#tpu.dimension_semantics<parallel>], iteration_bounds = array<i64: 2>, scalar_prefetch = 0 : i64, scratch_operands = 0 : i64, tpu.core_type = #tpu.core_type<tc>, window_params = [{transform_indices = @transform_0, window_bounds = array<i64: 1, 8, 32>}, {transform_indices = @transform_1, window_bounds = array<i64: 1, 1, 8>}, {pipeline_mode = #tpu.pipeline_mode<synchronous>, transform_indices = @transform_2, window_bounds = array<i64: 96, 32>}, {pipeline_mode = #tpu.pipeline_mode<synchronous>, transform_indices = @transform_3, window_bounds = array<i64: 1, 96>}, {pipeline_mode = #tpu.pipeline_mode<synchronous>, transform_indices = @transform_4, window_bounds = array<i64: 32, 32>}, {pipeline_mode = #tpu.pipeline_mode<synchronous>, transform_indices = @transform_5, window_bounds = array<i64: 1, 32>}, {pipeline_mode = #tpu.pipeline_mode<synchronous>, transform_indices = @transform_6, window_bounds = array<i64: 1, 32>}, {pipeline_mode = #tpu.pipeline_mode<synchronous>, transform_indices = @transform_7, window_bounds = array<i64: 1, 32>}, {transform_indices = @transform_8, window_bounds = array<i64: 1, 8, 32>}]} {
    %c0 = arith.constant 0 : index
    %c0_0 = arith.constant 0 : index
    %c0_1 = arith.constant 0 : index
    %0 = vector.load %arg1[%c0, %c0_0, %c0_1] : memref<1x8x32xbf16, #tpu.memory_space<vmem>>, vector<1x8x32xbf16>
    %1 = vector.shape_cast %0 : vector<1x8x32xbf16> to vector<8x32xbf16>
    %c0_2 = arith.constant 0 : index
    %c0_3 = arith.constant 0 : index
    %2 = vector.load %arg3[%c0_2, %c0_3] : memref<96x32xbf16, #tpu.memory_space<vmem>>, vector<96x32xbf16>
    %cst = arith.constant dense<0.000000e+00> : vector<8x96xf32>
    %3 = tpu.matmul %1, %2, %cst {dimension_numbers = #tpu.dot_dimension_numbers<[1], [1], [0], [0], [0, 0, 1, 0], [], []>} : vector<8x32xbf16>, vector<96x32xbf16>, vector<8x96xf32> -> vector<8x96xf32>
    %c0_4 = arith.constant 0 : index
    %c0_5 = arith.constant 0 : index
    %4 = vector.load %arg4[%c0_4, %c0_5] : memref<1x96xf32, #tpu.memory_space<vmem>>, vector<1x96xf32>
    %5 = vector.broadcast %4 : vector<1x96xf32> to vector<8x96xf32>
    %6 = arith.addf %3, %5 : vector<8x96xf32>
    %7 = vector.extract_strided_slice %6 {offsets = [0, 0], sizes = [8, 32], strides = [1, 1]} : vector<8x96xf32> to vector<8x32xf32>
    %8 = vector.extract_strided_slice %6 {offsets = [0, 32], sizes = [8, 32], strides = [1, 1]} : vector<8x96xf32> to vector<8x32xf32>
    %9 = vector.extract_strided_slice %6 {offsets = [0, 64], sizes = [8, 32], strides = [1, 1]} : vector<8x96xf32> to vector<8x32xf32>
    %c0_6 = arith.constant 0 : index
    %c0_7 = arith.constant 0 : index
    %10 = vector.load %arg5[%c0_6, %c0_7] : memref<32x32xbf16, #tpu.memory_space<vmem>>, vector<32x32xbf16>
    %c0_8 = arith.constant 0 : index
    %c0_9 = arith.constant 0 : index
    %c0_10 = arith.constant 0 : index
    %11 = vector.load %arg2[%c0_8, %c0_9, %c0_10] : memref<1x1x8xf32, #tpu.memory_space<vmem>>, vector<1x1x8xf32>
    %12 = vector.shape_cast %11 : vector<1x1x8xf32> to vector<1x8xf32>
    %13 = tpu.iota {dimensions = array<i32: 0>} : vector<8x8xi32>
    %14 = tpu.iota {dimensions = array<i32: 1>} : vector<8x8xi32>
    %15 = arith.cmpi sgt, %14, %13 : vector<8x8xi32>
    %cst_11 = arith.constant 0.000000e+00 : f32
    %16 = vector.broadcast %cst_11 : f32 to vector<8x32xf32>
    %17 = vector.extract_strided_slice %7 {offsets = [0, 0], sizes = [8, 8], strides = [1, 1]} : vector<8x32xf32> to vector<8x8xf32>
    %18 = arith.truncf %17 : vector<8x8xf32> to vector<8x8xbf16>
    %19 = vector.extract_strided_slice %8 {offsets = [0, 0], sizes = [8, 8], strides = [1, 1]} : vector<8x32xf32> to vector<8x8xf32>
    %20 = arith.truncf %19 : vector<8x8xf32> to vector<8x8xbf16>
    %21 = vector.extract_strided_slice %9 {offsets = [0, 0], sizes = [8, 8], strides = [1, 1]} : vector<8x32xf32> to vector<8x8xf32>
    %22 = arith.truncf %21 : vector<8x8xf32> to vector<8x8xbf16>
    %cst_12 = arith.constant dense<0.000000e+00> : vector<8x8xf32>
    %23 = tpu.matmul %18, %20, %cst_12 {dimension_numbers = #tpu.dot_dimension_numbers<[1], [1], [0], [0], [0, 0, 1, 0], [], []>} : vector<8x8xbf16>, vector<8x8xbf16>, vector<8x8xf32> -> vector<8x8xf32>
    %cst_13 = arith.constant 0.353553385 : f32
    %24 = vector.broadcast %cst_13 : f32 to vector<8x8xf32>
    %25 = arith.mulf %23, %24 : vector<8x8xf32>
    %26 = vector.broadcast %12 : vector<1x8xf32> to vector<8x8xf32>
    %27 = arith.addf %25, %26 : vector<8x8xf32>
    %cst_14 = arith.constant -1.000000e+30 : f32
    %28 = vector.broadcast %cst_14 : f32 to vector<8x8xf32>
    %29 = arith.select %15, %28, %27 : vector<8x8xi1>, vector<8x8xf32>
    %cst_15 = arith.constant dense<0xFF800000> : vector<8xf32>
    %30 = vector.multi_reduction <maximumf>, %29, %cst_15 [1] : vector<8x8xf32> to vector<8xf32>
    %31 = vector.shape_cast %30 : vector<8xf32> to vector<8x1xf32>
    %32 = vector.broadcast %31 : vector<8x1xf32> to vector<8x8xf32>
    %33 = arith.subf %29, %32 : vector<8x8xf32>
    %34 = math.exp %33 : vector<8x8xf32>
    %cst_16 = arith.constant dense<0.000000e+00> : vector<8xf32>
    %35 = vector.multi_reduction <add>, %34, %cst_16 [1] : vector<8x8xf32> to vector<8xf32>
    %36 = vector.shape_cast %35 : vector<8xf32> to vector<8x1xf32>
    %37 = tpu.reciprocal %36 {approx = true} : vector<8x1xf32> -> vector<8x1xf32>
    %38 = vector.broadcast %37 : vector<8x1xf32> to vector<8x8xf32>
    %39 = arith.mulf %34, %38 : vector<8x8xf32>
    %40 = arith.truncf %39 : vector<8x8xf32> to vector<8x8xbf16>
    %cst_17 = arith.constant dense<0.000000e+00> : vector<8x8xf32>
    %41 = tpu.matmul %40, %22, %cst_17 {dimension_numbers = #tpu.dot_dimension_numbers<[1], [0], [0], [1], [0, 0, 1, 1], [], []>} : vector<8x8xbf16>, vector<8x8xbf16>, vector<8x8xf32> -> vector<8x8xf32>
    %42 = arith.truncf %41 : vector<8x8xf32> to vector<8x8xbf16>
    %43 = vector.extract_strided_slice %10 {offsets = [0, 0], sizes = [32, 8], strides = [1, 1]} : vector<32x32xbf16> to vector<32x8xbf16>
    %cst_18 = arith.constant dense<0.000000e+00> : vector<8x32xf32>
    %44 = tpu.matmul %42, %43, %cst_18 {dimension_numbers = #tpu.dot_dimension_numbers<[1], [1], [0], [0], [0, 0, 1, 0], [], []>} : vector<8x8xbf16>, vector<32x8xbf16>, vector<8x32xf32> -> vector<8x32xf32>
    %45 = arith.addf %16, %44 : vector<8x32xf32>
    %46 = vector.extract_strided_slice %7 {offsets = [0, 8], sizes = [8, 8], strides = [1, 1]} : vector<8x32xf32> to vector<8x8xf32>
    %47 = arith.truncf %46 : vector<8x8xf32> to vector<8x8xbf16>
    %48 = vector.extract_strided_slice %8 {offsets = [0, 8], sizes = [8, 8], strides = [1, 1]} : vector<8x32xf32> to vector<8x8xf32>
    %49 = arith.truncf %48 : vector<8x8xf32> to vector<8x8xbf16>
    %50 = vector.extract_strided_slice %9 {offsets = [0, 8], sizes = [8, 8], strides = [1, 1]} : vector<8x32xf32> to vector<8x8xf32>
    %51 = arith.truncf %50 : vector<8x8xf32> to vector<8x8xbf16>
    %cst_19 = arith.constant dense<0.000000e+00> : vector<8x8xf32>
    %52 = tpu.matmul %47, %49, %cst_19 {dimension_numbers = #tpu.dot_dimension_numbers<[1], [1], [0], [0], [0, 0, 1, 0], [], []>} : vector<8x8xbf16>, vector<8x8xbf16>, vector<8x8xf32> -> vector<8x8xf32>
    %cst_20 = arith.constant 0.353553385 : f32
    %53 = vector.broadcast %cst_20 : f32 to vector<8x8xf32>
    %54 = arith.mulf %52, %53 : vector<8x8xf32>
    %55 = vector.broadcast %12 : vector<1x8xf32> to vector<8x8xf32>
    %56 = arith.addf %54, %55 : vector<8x8xf32>
    %cst_21 = arith.constant -1.000000e+30 : f32
    %57 = vector.broadcast %cst_21 : f32 to vector<8x8xf32>
    %58 = arith.select %15, %57, %56 : vector<8x8xi1>, vector<8x8xf32>
    %cst_22 = arith.constant dense<0xFF800000> : vector<8xf32>
    %59 = vector.multi_reduction <maximumf>, %58, %cst_22 [1] : vector<8x8xf32> to vector<8xf32>
    %60 = vector.shape_cast %59 : vector<8xf32> to vector<8x1xf32>
    %61 = vector.broadcast %60 : vector<8x1xf32> to vector<8x8xf32>
    %62 = arith.subf %58, %61 : vector<8x8xf32>
    %63 = math.exp %62 : vector<8x8xf32>
    %cst_23 = arith.constant dense<0.000000e+00> : vector<8xf32>
    %64 = vector.multi_reduction <add>, %63, %cst_23 [1] : vector<8x8xf32> to vector<8xf32>
    %65 = vector.shape_cast %64 : vector<8xf32> to vector<8x1xf32>
    %66 = tpu.reciprocal %65 {approx = true} : vector<8x1xf32> -> vector<8x1xf32>
    %67 = vector.broadcast %66 : vector<8x1xf32> to vector<8x8xf32>
    %68 = arith.mulf %63, %67 : vector<8x8xf32>
    %69 = arith.truncf %68 : vector<8x8xf32> to vector<8x8xbf16>
    %cst_24 = arith.constant dense<0.000000e+00> : vector<8x8xf32>
    %70 = tpu.matmul %69, %51, %cst_24 {dimension_numbers = #tpu.dot_dimension_numbers<[1], [0], [0], [1], [0, 0, 1, 1], [], []>} : vector<8x8xbf16>, vector<8x8xbf16>, vector<8x8xf32> -> vector<8x8xf32>
    %71 = arith.truncf %70 : vector<8x8xf32> to vector<8x8xbf16>
    %72 = vector.extract_strided_slice %10 {offsets = [0, 8], sizes = [32, 8], strides = [1, 1]} : vector<32x32xbf16> to vector<32x8xbf16>
    %cst_25 = arith.constant dense<0.000000e+00> : vector<8x32xf32>
    %73 = tpu.matmul %71, %72, %cst_25 {dimension_numbers = #tpu.dot_dimension_numbers<[1], [1], [0], [0], [0, 0, 1, 0], [], []>} : vector<8x8xbf16>, vector<32x8xbf16>, vector<8x32xf32> -> vector<8x32xf32>
    %74 = arith.addf %45, %73 : vector<8x32xf32>
    %75 = vector.extract_strided_slice %7 {offsets = [0, 16], sizes = [8, 8], strides = [1, 1]} : vector<8x32xf32> to vector<8x8xf32>
    %76 = arith.truncf %75 : vector<8x8xf32> to vector<8x8xbf16>
    %77 = vector.extract_strided_slice %8 {offsets = [0, 16], sizes = [8, 8], strides = [1, 1]} : vector<8x32xf32> to vector<8x8xf32>
    %78 = arith.truncf %77 : vector<8x8xf32> to vector<8x8xbf16>
    %79 = vector.extract_strided_slice %9 {offsets = [0, 16], sizes = [8, 8], strides = [1, 1]} : vector<8x32xf32> to vector<8x8xf32>
    %80 = arith.truncf %79 : vector<8x8xf32> to vector<8x8xbf16>
    %cst_26 = arith.constant dense<0.000000e+00> : vector<8x8xf32>
    %81 = tpu.matmul %76, %78, %cst_26 {dimension_numbers = #tpu.dot_dimension_numbers<[1], [1], [0], [0], [0, 0, 1, 0], [], []>} : vector<8x8xbf16>, vector<8x8xbf16>, vector<8x8xf32> -> vector<8x8xf32>
    %cst_27 = arith.constant 0.353553385 : f32
    %82 = vector.broadcast %cst_27 : f32 to vector<8x8xf32>
    %83 = arith.mulf %81, %82 : vector<8x8xf32>
    %84 = vector.broadcast %12 : vector<1x8xf32> to vector<8x8xf32>
    %85 = arith.addf %83, %84 : vector<8x8xf32>
    %cst_28 = arith.constant -1.000000e+30 : f32
    %86 = vector.broadcast %cst_28 : f32 to vector<8x8xf32>
    %87 = arith.select %15, %86, %85 : vector<8x8xi1>, vector<8x8xf32>
    %cst_29 = arith.constant dense<0xFF800000> : vector<8xf32>
    %88 = vector.multi_reduction <maximumf>, %87, %cst_29 [1] : vector<8x8xf32> to vector<8xf32>
    %89 = vector.shape_cast %88 : vector<8xf32> to vector<8x1xf32>
    %90 = vector.broadcast %89 : vector<8x1xf32> to vector<8x8xf32>
    %91 = arith.subf %87, %90 : vector<8x8xf32>
    %92 = math.exp %91 : vector<8x8xf32>
    %cst_30 = arith.constant dense<0.000000e+00> : vector<8xf32>
    %93 = vector.multi_reduction <add>, %92, %cst_30 [1] : vector<8x8xf32> to vector<8xf32>
    %94 = vector.shape_cast %93 : vector<8xf32> to vector<8x1xf32>
    %95 = tpu.reciprocal %94 {approx = true} : vector<8x1xf32> -> vector<8x1xf32>
    %96 = vector.broadcast %95 : vector<8x1xf32> to vector<8x8xf32>
    %97 = arith.mulf %92, %96 : vector<8x8xf32>
    %98 = arith.truncf %97 : vector<8x8xf32> to vector<8x8xbf16>
    %cst_31 = arith.constant dense<0.000000e+00> : vector<8x8xf32>
    %99 = tpu.matmul %98, %80, %cst_31 {dimension_numbers = #tpu.dot_dimension_numbers<[1], [0], [0], [1], [0, 0, 1, 1], [], []>} : vector<8x8xbf16>, vector<8x8xbf16>, vector<8x8xf32> -> vector<8x8xf32>
    %100 = arith.truncf %99 : vector<8x8xf32> to vector<8x8xbf16>
    %101 = vector.extract_strided_slice %10 {offsets = [0, 16], sizes = [32, 8], strides = [1, 1]} : vector<32x32xbf16> to vector<32x8xbf16>
    %cst_32 = arith.constant dense<0.000000e+00> : vector<8x32xf32>
    %102 = tpu.matmul %100, %101, %cst_32 {dimension_numbers = #tpu.dot_dimension_numbers<[1], [1], [0], [0], [0, 0, 1, 0], [], []>} : vector<8x8xbf16>, vector<32x8xbf16>, vector<8x32xf32> -> vector<8x32xf32>
    %103 = arith.addf %74, %102 : vector<8x32xf32>
    %104 = vector.extract_strided_slice %7 {offsets = [0, 24], sizes = [8, 8], strides = [1, 1]} : vector<8x32xf32> to vector<8x8xf32>
    %105 = arith.truncf %104 : vector<8x8xf32> to vector<8x8xbf16>
    %106 = vector.extract_strided_slice %8 {offsets = [0, 24], sizes = [8, 8], strides = [1, 1]} : vector<8x32xf32> to vector<8x8xf32>
    %107 = arith.truncf %106 : vector<8x8xf32> to vector<8x8xbf16>
    %108 = vector.extract_strided_slice %9 {offsets = [0, 24], sizes = [8, 8], strides = [1, 1]} : vector<8x32xf32> to vector<8x8xf32>
    %109 = arith.truncf %108 : vector<8x8xf32> to vector<8x8xbf16>
    %cst_33 = arith.constant dense<0.000000e+00> : vector<8x8xf32>
    %110 = tpu.matmul %105, %107, %cst_33 {dimension_numbers = #tpu.dot_dimension_numbers<[1], [1], [0], [0], [0, 0, 1, 0], [], []>} : vector<8x8xbf16>, vector<8x8xbf16>, vector<8x8xf32> -> vector<8x8xf32>
    %cst_34 = arith.constant 0.353553385 : f32
    %111 = vector.broadcast %cst_34 : f32 to vector<8x8xf32>
    %112 = arith.mulf %110, %111 : vector<8x8xf32>
    %113 = vector.broadcast %12 : vector<1x8xf32> to vector<8x8xf32>
    %114 = arith.addf %112, %113 : vector<8x8xf32>
    %cst_35 = arith.constant -1.000000e+30 : f32
    %115 = vector.broadcast %cst_35 : f32 to vector<8x8xf32>
    %116 = arith.select %15, %115, %114 : vector<8x8xi1>, vector<8x8xf32>
    %cst_36 = arith.constant dense<0xFF800000> : vector<8xf32>
    %117 = vector.multi_reduction <maximumf>, %116, %cst_36 [1] : vector<8x8xf32> to vector<8xf32>
    %118 = vector.shape_cast %117 : vector<8xf32> to vector<8x1xf32>
    %119 = vector.broadcast %118 : vector<8x1xf32> to vector<8x8xf32>
    %120 = arith.subf %116, %119 : vector<8x8xf32>
    %121 = math.exp %120 : vector<8x8xf32>
    %cst_37 = arith.constant dense<0.000000e+00> : vector<8xf32>
    %122 = vector.multi_reduction <add>, %121, %cst_37 [1] : vector<8x8xf32> to vector<8xf32>
    %123 = vector.shape_cast %122 : vector<8xf32> to vector<8x1xf32>
    %124 = tpu.reciprocal %123 {approx = true} : vector<8x1xf32> -> vector<8x1xf32>
    %125 = vector.broadcast %124 : vector<8x1xf32> to vector<8x8xf32>
    %126 = arith.mulf %121, %125 : vector<8x8xf32>
    %127 = arith.truncf %126 : vector<8x8xf32> to vector<8x8xbf16>
    %cst_38 = arith.constant dense<0.000000e+00> : vector<8x8xf32>
    %128 = tpu.matmul %127, %109, %cst_38 {dimension_numbers = #tpu.dot_dimension_numbers<[1], [0], [0], [1], [0, 0, 1, 1], [], []>} : vector<8x8xbf16>, vector<8x8xbf16>, vector<8x8xf32> -> vector<8x8xf32>
    %129 = arith.truncf %128 : vector<8x8xf32> to vector<8x8xbf16>
    %130 = vector.extract_strided_slice %10 {offsets = [0, 24], sizes = [32, 8], strides = [1, 1]} : vector<32x32xbf16> to vector<32x8xbf16>
    %cst_39 = arith.constant dense<0.000000e+00> : vector<8x32xf32>
    %131 = tpu.matmul %129, %130, %cst_39 {dimension_numbers = #tpu.dot_dimension_numbers<[1], [1], [0], [0], [0, 0, 1, 0], [], []>} : vector<8x8xbf16>, vector<32x8xbf16>, vector<8x32xf32> -> vector<8x32xf32>
    %132 = arith.addf %103, %131 : vector<8x32xf32>
    %c0_40 = arith.constant 0 : index
    %c0_41 = arith.constant 0 : index
    %133 = vector.load %arg6[%c0_40, %c0_41] : memref<1x32xf32, #tpu.memory_space<vmem>>, vector<1x32xf32>
    %134 = vector.broadcast %133 : vector<1x32xf32> to vector<8x32xf32>
    %135 = arith.addf %132, %134 : vector<8x32xf32>
    %136 = arith.extf %1 : vector<8x32xbf16> to vector<8x32xf32>
    %137 = arith.addf %136, %135 : vector<8x32xf32>
    %c0_42 = arith.constant 0 : index
    %c0_43 = arith.constant 0 : index
    %138 = vector.load %arg7[%c0_42, %c0_43] : memref<1x32xf32, #tpu.memory_space<vmem>>, vector<1x32xf32>
    %c0_44 = arith.constant 0 : index
    %c0_45 = arith.constant 0 : index
    %139 = vector.load %arg8[%c0_44, %c0_45] : memref<1x32xf32, #tpu.memory_space<vmem>>, vector<1x32xf32>
    %cst_46 = arith.constant dense<0.000000e+00> : vector<8xf32>
    %140 = vector.multi_reduction <add>, %137, %cst_46 [1] : vector<8x32xf32> to vector<8xf32>
    %141 = vector.shape_cast %140 : vector<8xf32> to vector<8x1xf32>
    %cst_47 = arith.constant 3.200000e+01 : f32
    %142 = vector.broadcast %cst_47 : f32 to vector<8x1xf32>
    %143 = arith.divf %141, %142 : vector<8x1xf32>
    %144 = vector.broadcast %143 : vector<8x1xf32> to vector<8x32xf32>
    %145 = arith.subf %137, %144 : vector<8x32xf32>
    %146 = arith.mulf %145, %145 : vector<8x32xf32>
    %cst_48 = arith.constant dense<0.000000e+00> : vector<8xf32>
    %147 = vector.multi_reduction <add>, %146, %cst_48 [1] : vector<8x32xf32> to vector<8xf32>
    %148 = vector.shape_cast %147 : vector<8xf32> to vector<8x1xf32>
    %cst_49 = arith.constant 3.200000e+01 : f32
    %149 = vector.broadcast %cst_49 : f32 to vector<8x1xf32>
    %150 = arith.divf %148, %149 : vector<8x1xf32>
    %cst_50 = arith.constant 9.99999974E-6 : f32
    %151 = vector.broadcast %cst_50 : f32 to vector<8x1xf32>
    %152 = arith.addf %150, %151 : vector<8x1xf32>
    %153 = math.rsqrt %152 : vector<8x1xf32>
    %154 = vector.broadcast %153 : vector<8x1xf32> to vector<8x32xf32>
    %155 = arith.mulf %145, %154 : vector<8x32xf32>
    %156 = vector.broadcast %138 : vector<1x32xf32> to vector<8x32xf32>
    %157 = arith.mulf %155, %156 : vector<8x32xf32>
    %158 = vector.broadcast %139 : vector<1x32xf32> to vector<8x32xf32>
    %159 = arith.addf %157, %158 : vector<8x32xf32>
    %160 = arith.truncf %159 : vector<8x32xf32> to vector<8x32xbf16>
    %c0_51 = arith.constant 0 : index
    %c0_52 = arith.constant 0 : index
    %c0_53 = arith.constant 0 : index
    %161 = vector.load %arg9[%c0_51, %c0_52, %c0_53] : memref<1x8x32xbf16, #tpu.memory_space<vmem>>, vector<1x8x32xbf16>
    %162 = vector.shape_cast %161 : vector<1x8x32xbf16> to vector<8x32xbf16>
    %163 = vector.shape_cast %160 : vector<8x32xbf16> to vector<1x8x32xbf16>
    tpu.vector_store %arg9[%c0_51, %c0_52, %c0_53], %163 {strides = array<i32>} : memref<1x8x32xbf16, #tpu.memory_space<vmem>>, vector<1x8x32xbf16>,
    return
  }
  func.func @transform_0(%arg0: i32) -> (i32, i32, i32) {
    %c0_i32 = arith.constant 0 : i32
    %c0_i32_0 = arith.constant 0 : i32
    %c0_i32_1 = arith.constant 0 : i32
    return %arg0, %c0_i32, %c0_i32_0 : i32, i32, i32
  }
  func.func @transform_1(%arg0: i32) -> (i32, i32, i32) {
    %c0_i32 = arith.constant 0 : i32
    %c0_i32_0 = arith.constant 0 : i32
    %c0_i32_1 = arith.constant 0 : i32
    return %arg0, %c0_i32, %c0_i32_0 : i32, i32, i32
  }
  func.func @transform_2(%arg0: i32) -> (i32, i32) {
    %c0_i32 = arith.constant 0 : i32
    %c0_i32_0 = arith.constant 0 : i32
    %c0_i32_1 = arith.constant 0 : i32
    return %c0_i32, %c0_i32_0 : i32, i32
  }
  func.func @transform_3(%arg0: i32) -> (i32, i32) {
    %c0_i32 = arith.constant 0 : i32
    %c0_i32_0 = arith.constant 0 : i32
    %c0_i32_1 = arith.constant 0 : i32
    return %c0_i32, %c0_i32_0 : i32, i32
  }
  func.func @transform_4(%arg0: i32) -> (i32, i32) {
    %c0_i32 = arith.constant 0 : i32
    %c0_i32_0 = arith.constant 0 : i32
    %c0_i32_1 = arith.constant 0 : i32
    return %c0_i32, %c0_i32_0 : i32, i32
  }
  func.func @transform_5(%arg0: i32) -> (i32, i32) {
    %c0_i32 = arith.constant 0 : i32
    %c0_i32_0 = arith.constant 0 : i32
    %c0_i32_1 = arith.constant 0 : i32
    return %c0_i32, %c0_i32_0 : i32, i32
  }
  func.func @transform_6(%arg0: i32) -> (i32, i32) {
    %c0_i32 = arith.constant 0 : i32
    %c0_i32_0 = arith.constant 0 : i32
    %c0_i32_1 = arith.constant 0 : i32
    return %c0_i32, %c0_i32_0 : i32, i32
  }
  func.func @transform_7(%arg0: i32) -> (i32, i32) {
    %c0_i32 = arith.constant 0 : i32
    %c0_i32_0 = arith.constant 0 : i32
    %c0_i32_1 = arith.constant 0 : i32
    return %c0_i32, %c0_i32_0 : i32, i32
  }
  func.func @transform_8(%arg0: i32) -> (i32, i32, i32) {
    %c0_i32 = arith.constant 0 : i32
    %c0_i32_0 = arith.constant 0 : i32
    %c0_i32_1 = arith.constant 0 : i32
    return %arg0, %c0_i32, %c0_i32_0 : i32, i32, i32
  }
}

module attributes {stable_mosaic.version = 11 : i64} {
  func.func @_linear_kernel(%arg0: i32, %arg1: i32, %arg2: i32, %arg3: memref<16x48xbf16, #tpu.memory_space<vmem>>, %arg4: memref<32x48xbf16, #tpu.memory_space<vmem>>, %arg5: memref<1x32xf32, #tpu.memory_space<vmem>>, %arg6: memref<16x32xbf16, #tpu.memory_space<vmem>>, %arg7: memref<16x32xf32, #tpu.memory_space<vmem>>) attributes {dimension_semantics = [#tpu.dimension_semantics<parallel>, #tpu.dimension_semantics<parallel>, #tpu.dimension_semantics<arbitrary>], iteration_bounds = array<i64: 2, 1, 1>, scalar_prefetch = 0 : i64, scratch_operands = 1 : i64, tpu.core_type = #tpu.core_type<tc>, window_params = [{transform_indices = @transform_0, window_bounds = array<i64: 16, 48>}, {transform_indices = @transform_1, window_bounds = array<i64: 32, 48>}, {transform_indices = @transform_2, window_bounds = array<i64: 1, 32>}, {transform_indices = @transform_3, window_bounds = array<i64: 16, 32>}]} {
    %c0_i32 = arith.constant 0 : i32
    %0 = arith.cmpi eq, %arg2, %c0_i32 : i32
    %1 = arith.extui %0 : i1 to i32
    %c0_i32_0 = arith.constant 0 : i32
    %2 = arith.cmpi ne, %1, %c0_i32_0 : i32
    scf.if %2 {
      %cst_10 = arith.constant 0.000000e+00 : f32
      %12 = vector.broadcast %cst_10 : f32 to vector<16x32xf32>
      %c0_11 = arith.constant 0 : index
      %c0_12 = arith.constant 0 : index
      %13 = vector.load %arg7[%c0_11, %c0_12] : memref<16x32xf32, #tpu.memory_space<vmem>>, vector<16x32xf32>
      tpu.vector_store %arg7[%c0_11, %c0_12], %12 {strides = array<i32>} : memref<16x32xf32, #tpu.memory_space<vmem>>, vector<16x32xf32>,
    } else {
    }
    %c0 = arith.constant 0 : index
    %c0_1 = arith.constant 0 : index
    %3 = vector.load %arg7[%c0, %c0_1] : memref<16x32xf32, #tpu.memory_space<vmem>>, vector<16x32xf32>
    %c0_2 = arith.constant 0 : index
    %c0_3 = arith.constant 0 : index
    %4 = vector.load %arg3[%c0_2, %c0_3] : memref<16x48xbf16, #tpu.memory_space<vmem>>, vector<16x48xbf16>
    %c0_4 = arith.constant 0 : index
    %c0_5 = arith.constant 0 : index
    %5 = vector.load %arg4[%c0_4, %c0_5] : memref<32x48xbf16, #tpu.memory_space<vmem>>, vector<32x48xbf16>
    %cst = arith.constant dense<0.000000e+00> : vector<16x32xf32>
    %6 = tpu.matmul %4, %5, %cst {dimension_numbers = #tpu.dot_dimension_numbers<[1], [1], [0], [0], [0, 0, 1, 0], [], []>} : vector<16x48xbf16>, vector<32x48xbf16>, vector<16x32xf32> -> vector<16x32xf32>
    %7 = arith.addf %3, %6 : vector<16x32xf32>
    %c0_6 = arith.constant 0 : index
    %c0_7 = arith.constant 0 : index
    %8 = vector.load %arg7[%c0_6, %c0_7] : memref<16x32xf32, #tpu.memory_space<vmem>>, vector<16x32xf32>
    tpu.vector_store %arg7[%c0_6, %c0_7], %7 {strides = array<i32>} : memref<16x32xf32, #tpu.memory_space<vmem>>, vector<16x32xf32>,
    %c0_i32_8 = arith.constant 0 : i32
    %9 = arith.cmpi eq, %arg2, %c0_i32_8 : i32
    %10 = arith.extui %9 : i1 to i32
    %c0_i32_9 = arith.constant 0 : i32
    %11 = arith.cmpi ne, %10, %c0_i32_9 : i32
    scf.if %11 {
      %c0_10 = arith.constant 0 : index
      %c0_11 = arith.constant 0 : index
      %12 = vector.load %arg7[%c0_10, %c0_11] : memref<16x32xf32, #tpu.memory_space<vmem>>, vector<16x32xf32>
      %c0_12 = arith.constant 0 : index
      %c0_13 = arith.constant 0 : index
      %13 = vector.load %arg5[%c0_12, %c0_13] : memref<1x32xf32, #tpu.memory_space<vmem>>, vector<1x32xf32>
      %14 = vector.broadcast %13 : vector<1x32xf32> to vector<16x32xf32>
      %15 = arith.addf %12, %14 : vector<16x32xf32>
      %16 = arith.truncf %15 : vector<16x32xf32> to vector<16x32xbf16>
      %c0_14 = arith.constant 0 : index
      %c0_15 = arith.constant 0 : index
      %17 = vector.load %arg6[%c0_14, %c0_15] : memref<16x32xbf16, #tpu.memory_space<vmem>>, vector<16x32xbf16>
      tpu.vector_store %arg6[%c0_14, %c0_15], %16 {strides = array<i32>} : memref<16x32xbf16, #tpu.memory_space<vmem>>, vector<16x32xbf16>,
    } else {
    }
    return
  }
  func.func @transform_0(%arg0: i32, %arg1: i32, %arg2: i32) -> (i32, i32) {
    %c0_i32 = arith.constant 0 : i32
    return %arg0, %arg2 : i32, i32
  }
  func.func @transform_1(%arg0: i32, %arg1: i32, %arg2: i32) -> (i32, i32) {
    %c0_i32 = arith.constant 0 : i32
    return %arg1, %arg2 : i32, i32
  }
  func.func @transform_2(%arg0: i32, %arg1: i32, %arg2: i32) -> (i32, i32) {
    %c0_i32 = arith.constant 0 : i32
    %c0_i32_0 = arith.constant 0 : i32
    return %c0_i32, %arg1 : i32, i32
  }
  func.func @transform_3(%arg0: i32, %arg1: i32, %arg2: i32) -> (i32, i32) {
    %c0_i32 = arith.constant 0 : i32
    return %arg0, %arg1 : i32, i32
  }
}

module attributes {stable_mosaic.version = 11 : i64} {
  func.func @_cross_attn_block_kernel(%arg0: i32, %arg1: memref<1x8x32xbf16, #tpu.memory_space<vmem>>, %arg2: memref<1x16x32xbf16, #tpu.memory_space<vmem>>, %arg3: memref<32x32xbf16, #tpu.memory_space<vmem>>, %arg4: memref<1x32xf32, #tpu.memory_space<vmem>>, %arg5: memref<64x32xbf16, #tpu.memory_space<vmem>>, %arg6: memref<1x64xf32, #tpu.memory_space<vmem>>, %arg7: memref<32x32xbf16, #tpu.memory_space<vmem>>, %arg8: memref<1x32xf32, #tpu.memory_space<vmem>>, %arg9: memref<1x32xf32, #tpu.memory_space<vmem>>, %arg10: memref<1x32xf32, #tpu.memory_space<vmem>>, %arg11: memref<1x8x32xbf16, #tpu.memory_space<vmem>>) attributes {dimension_semantics = [#tpu.dimension_semantics<parallel>], iteration_bounds = array<i64: 2>, scalar_prefetch = 0 : i64, scratch_operands = 0 : i64, tpu.core_type = #tpu.core_type<tc>, window_params = [{transform_indices = @transform_0, window_bounds = array<i64: 1, 8, 32>}, {transform_indices = @transform_1, window_bounds = array<i64: 1, 16, 32>}, {pipeline_mode = #tpu.pipeline_mode<synchronous>, transform_indices = @transform_2, window_bounds = array<i64: 32, 32>}, {pipeline_mode = #tpu.pipeline_mode<synchronous>, transform_indices = @transform_3, window_bounds = array<i64: 1, 32>}, {pipeline_mode = #tpu.pipeline_mode<synchronous>, transform_indices = @transform_4, window_bounds = array<i64: 64, 32>}, {pipeline_mode = #tpu.pipeline_mode<synchronous>, transform_indices = @transform_5, window_bounds = array<i64: 1, 64>}, {pipeline_mode = #tpu.pipeline_mode<synchronous>, transform_indices = @transform_6, window_bounds = array<i64: 32, 32>}, {pipeline_mode = #tpu.pipeline_mode<synchronous>, transform_indices = @transform_7, window_bounds = array<i64: 1, 32>}, {pipeline_mode = #tpu.pipeline_mode<synchronous>, transform_indices = @transform_8, window_bounds = array<i64: 1, 32>}, {pipeline_mode = #tpu.pipeline_mode<synchronous>, transform_indices = @transform_9, window_bounds = array<i64: 1, 32>}, {transform_indices = @transform_10, window_bounds = array<i64: 1, 8, 32>}]} {
    %c0 = arith.constant 0 : index
    %c0_0 = arith.constant 0 : index
    %c0_1 = arith.constant 0 : index
    %0 = vector.load %arg1[%c0, %c0_0, %c0_1] : memref<1x8x32xbf16, #tpu.memory_space<vmem>>, vector<1x8x32xbf16>
    %1 = vector.shape_cast %0 : vector<1x8x32xbf16> to vector<8x32xbf16>
    %c0_2 = arith.constant 0 : index
    %c0_3 = arith.constant 0 : index
    %c0_4 = arith.constant 0 : index
    %2 = vector.load %arg2[%c0_2, %c0_3, %c0_4] : memref<1x16x32xbf16, #tpu.memory_space<vmem>>, vector<1x16x32xbf16>
    %3 = vector.shape_cast %2 : vector<1x16x32xbf16> to vector<16x32xbf16>
    %c0_5 = arith.constant 0 : index
    %c0_6 = arith.constant 0 : index
    %4 = vector.load %arg3[%c0_5, %c0_6] : memref<32x32xbf16, #tpu.memory_space<vmem>>, vector<32x32xbf16>
    %cst = arith.constant dense<0.000000e+00> : vector<8x32xf32>
    %5 = tpu.matmul %1, %4, %cst {dimension_numbers = #tpu.dot_dimension_numbers<[1], [1], [0], [0], [0, 0, 1, 0], [], []>} : vector<8x32xbf16>, vector<32x32xbf16>, vector<8x32xf32> -> vector<8x32xf32>
    %c0_7 = arith.constant 0 : index
    %c0_8 = arith.constant 0 : index
    %6 = vector.load %arg4[%c0_7, %c0_8] : memref<1x32xf32, #tpu.memory_space<vmem>>, vector<1x32xf32>
    %7 = vector.broadcast %6 : vector<1x32xf32> to vector<8x32xf32>
    %8 = arith.addf %5, %7 : vector<8x32xf32>
    %c0_9 = arith.constant 0 : index
    %c0_10 = arith.constant 0 : index
    %9 = vector.load %arg5[%c0_9, %c0_10] : memref<64x32xbf16, #tpu.memory_space<vmem>>, vector<64x32xbf16>
    %cst_11 = arith.constant dense<0.000000e+00> : vector<16x64xf32>
    %10 = tpu.matmul %3, %9, %cst_11 {dimension_numbers = #tpu.dot_dimension_numbers<[1], [1], [0], [0], [0, 0, 1, 0], [], []>} : vector<16x32xbf16>, vector<64x32xbf16>, vector<16x64xf32> -> vector<16x64xf32>
    %c0_12 = arith.constant 0 : index
    %c0_13 = arith.constant 0 : index
    %11 = vector.load %arg6[%c0_12, %c0_13] : memref<1x64xf32, #tpu.memory_space<vmem>>, vector<1x64xf32>
    %12 = vector.broadcast %11 : vector<1x64xf32> to vector<16x64xf32>
    %13 = arith.addf %10, %12 : vector<16x64xf32>
    %14 = vector.extract_strided_slice %13 {offsets = [0, 0], sizes = [16, 32], strides = [1, 1]} : vector<16x64xf32> to vector<16x32xf32>
    %15 = vector.extract_strided_slice %13 {offsets = [0, 32], sizes = [16, 32], strides = [1, 1]} : vector<16x64xf32> to vector<16x32xf32>
    %c0_14 = arith.constant 0 : index
    %c0_15 = arith.constant 0 : index
    %16 = vector.load %arg7[%c0_14, %c0_15] : memref<32x32xbf16, #tpu.memory_space<vmem>>, vector<32x32xbf16>
    %cst_16 = arith.constant 0.000000e+00 : f32
    %17 = vector.broadcast %cst_16 : f32 to vector<8x32xf32>
    %18 = vector.extract_strided_slice %8 {offsets = [0, 0], sizes = [8, 8], strides = [1, 1]} : vector<8x32xf32> to vector<8x8xf32>
    %19 = arith.truncf %18 : vector<8x8xf32> to vector<8x8xbf16>
    %20 = vector.extract_strided_slice %14 {offsets = [0, 0], sizes = [16, 8], strides = [1, 1]} : vector<16x32xf32> to vector<16x8xf32>
    %21 = arith.truncf %20 : vector<16x8xf32> to vector<16x8xbf16>
    %22 = vector.extract_strided_slice %15 {offsets = [0, 0], sizes = [16, 8], strides = [1, 1]} : vector<16x32xf32> to vector<16x8xf32>
    %23 = arith.truncf %22 : vector<16x8xf32> to vector<16x8xbf16>
    %cst_17 = arith.constant dense<0.000000e+00> : vector<8x16xf32>
    %24 = tpu.matmul %19, %21, %cst_17 {dimension_numbers = #tpu.dot_dimension_numbers<[1], [1], [0], [0], [0, 0, 1, 0], [], []>} : vector<8x8xbf16>, vector<16x8xbf16>, vector<8x16xf32> -> vector<8x16xf32>
    %cst_18 = arith.constant 0.353553385 : f32
    %25 = vector.broadcast %cst_18 : f32 to vector<8x16xf32>
    %26 = arith.mulf %24, %25 : vector<8x16xf32>
    %cst_19 = arith.constant dense<0xFF800000> : vector<8xf32>
    %27 = vector.multi_reduction <maximumf>, %26, %cst_19 [1] : vector<8x16xf32> to vector<8xf32>
    %28 = vector.shape_cast %27 : vector<8xf32> to vector<8x1xf32>
    %29 = vector.broadcast %28 : vector<8x1xf32> to vector<8x16xf32>
    %30 = arith.subf %26, %29 : vector<8x16xf32>
    %31 = math.exp %30 : vector<8x16xf32>
    %cst_20 = arith.constant dense<0.000000e+00> : vector<8xf32>
    %32 = vector.multi_reduction <add>, %31, %cst_20 [1] : vector<8x16xf32> to vector<8xf32>
    %33 = vector.shape_cast %32 : vector<8xf32> to vector<8x1xf32>
    %34 = tpu.reciprocal %33 {approx = true} : vector<8x1xf32> -> vector<8x1xf32>
    %35 = vector.broadcast %34 : vector<8x1xf32> to vector<8x16xf32>
    %36 = arith.mulf %31, %35 : vector<8x16xf32>
    %37 = arith.truncf %36 : vector<8x16xf32> to vector<8x16xbf16>
    %cst_21 = arith.constant dense<0.000000e+00> : vector<8x8xf32>
    %38 = tpu.matmul %37, %23, %cst_21 {dimension_numbers = #tpu.dot_dimension_numbers<[1], [0], [0], [1], [0, 0, 1, 1], [], []>} : vector<8x16xbf16>, vector<16x8xbf16>, vector<8x8xf32> -> vector<8x8xf32>
    %39 = arith.truncf %38 : vector<8x8xf32> to vector<8x8xbf16>
    %40 = vector.extract_strided_slice %16 {offsets = [0, 0], sizes = [32, 8], strides = [1, 1]} : vector<32x32xbf16> to vector<32x8xbf16>
    %cst_22 = arith.constant dense<0.000000e+00> : vector<8x32xf32>
    %41 = tpu.matmul %39, %40, %cst_22 {dimension_numbers = #tpu.dot_dimension_numbers<[1], [1], [0], [0], [0, 0, 1, 0], [], []>} : vector<8x8xbf16>, vector<32x8xbf16>, vector<8x32xf32> -> vector<8x32xf32>
    %42 = arith.addf %17, %41 : vector<8x32xf32>
    %43 = vector.extract_strided_slice %8 {offsets = [0, 8], sizes = [8, 8], strides = [1, 1]} : vector<8x32xf32> to vector<8x8xf32>
    %44 = arith.truncf %43 : vector<8x8xf32> to vector<8x8xbf16>
    %45 = vector.extract_strided_slice %14 {offsets = [0, 8], sizes = [16, 8], strides = [1, 1]} : vector<16x32xf32> to vector<16x8xf32>
    %46 = arith.truncf %45 : vector<16x8xf32> to vector<16x8xbf16>
    %47 = vector.extract_strided_slice %15 {offsets = [0, 8], sizes = [16, 8], strides = [1, 1]} : vector<16x32xf32> to vector<16x8xf32>
    %48 = arith.truncf %47 : vector<16x8xf32> to vector<16x8xbf16>
    %cst_23 = arith.constant dense<0.000000e+00> : vector<8x16xf32>
    %49 = tpu.matmul %44, %46, %cst_23 {dimension_numbers = #tpu.dot_dimension_numbers<[1], [1], [0], [0], [0, 0, 1, 0], [], []>} : vector<8x8xbf16>, vector<16x8xbf16>, vector<8x16xf32> -> vector<8x16xf32>
    %cst_24 = arith.constant 0.353553385 : f32
    %50 = vector.broadcast %cst_24 : f32 to vector<8x16xf32>
    %51 = arith.mulf %49, %50 : vector<8x16xf32>
    %cst_25 = arith.constant dense<0xFF800000> : vector<8xf32>
    %52 = vector.multi_reduction <maximumf>, %51, %cst_25 [1] : vector<8x16xf32> to vector<8xf32>
    %53 = vector.shape_cast %52 : vector<8xf32> to vector<8x1xf32>
    %54 = vector.broadcast %53 : vector<8x1xf32> to vector<8x16xf32>
    %55 = arith.subf %51, %54 : vector<8x16xf32>
    %56 = math.exp %55 : vector<8x16xf32>
    %cst_26 = arith.constant dense<0.000000e+00> : vector<8xf32>
    %57 = vector.multi_reduction <add>, %56, %cst_26 [1] : vector<8x16xf32> to vector<8xf32>
    %58 = vector.shape_cast %57 : vector<8xf32> to vector<8x1xf32>
    %59 = tpu.reciprocal %58 {approx = true} : vector<8x1xf32> -> vector<8x1xf32>
    %60 = vector.broadcast %59 : vector<8x1xf32> to vector<8x16xf32>
    %61 = arith.mulf %56, %60 : vector<8x16xf32>
    %62 = arith.truncf %61 : vector<8x16xf32> to vector<8x16xbf16>
    %cst_27 = arith.constant dense<0.000000e+00> : vector<8x8xf32>
    %63 = tpu.matmul %62, %48, %cst_27 {dimension_numbers = #tpu.dot_dimension_numbers<[1], [0], [0], [1], [0, 0, 1, 1], [], []>} : vector<8x16xbf16>, vector<16x8xbf16>, vector<8x8xf32> -> vector<8x8xf32>
    %64 = arith.truncf %63 : vector<8x8xf32> to vector<8x8xbf16>
    %65 = vector.extract_strided_slice %16 {offsets = [0, 8], sizes = [32, 8], strides = [1, 1]} : vector<32x32xbf16> to vector<32x8xbf16>
    %cst_28 = arith.constant dense<0.000000e+00> : vector<8x32xf32>
    %66 = tpu.matmul %64, %65, %cst_28 {dimension_numbers = #tpu.dot_dimension_numbers<[1], [1], [0], [0], [0, 0, 1, 0], [], []>} : vector<8x8xbf16>, vector<32x8xbf16>, vector<8x32xf32> -> vector<8x32xf32>
    %67 = arith.addf %42, %66 : vector<8x32xf32>
    %68 = vector.extract_strided_slice %8 {offsets = [0, 16], sizes = [8, 8], strides = [1, 1]} : vector<8x32xf32> to vector<8x8xf32>
    %69 = arith.truncf %68 : vector<8x8xf32> to vector<8x8xbf16>
    %70 = vector.extract_strided_slice %14 {offsets = [0, 16], sizes = [16, 8], strides = [1, 1]} : vector<16x32xf32> to vector<16x8xf32>
    %71 = arith.truncf %70 : vector<16x8xf32> to vector<16x8xbf16>
    %72 = vector.extract_strided_slice %15 {offsets = [0, 16], sizes = [16, 8], strides = [1, 1]} : vector<16x32xf32> to vector<16x8xf32>
    %73 = arith.truncf %72 : vector<16x8xf32> to vector<16x8xbf16>
    %cst_29 = arith.constant dense<0.000000e+00> : vector<8x16xf32>
    %74 = tpu.matmul %69, %71, %cst_29 {dimension_numbers = #tpu.dot_dimension_numbers<[1], [1], [0], [0], [0, 0, 1, 0], [], []>} : vector<8x8xbf16>, vector<16x8xbf16>, vector<8x16xf32> -> vector<8x16xf32>
    %cst_30 = arith.constant 0.353553385 : f32
    %75 = vector.broadcast %cst_30 : f32 to vector<8x16xf32>
    %76 = arith.mulf %74, %75 : vector<8x16xf32>
    %cst_31 = arith.constant dense<0xFF800000> : vector<8xf32>
    %77 = vector.multi_reduction <maximumf>, %76, %cst_31 [1] : vector<8x16xf32> to vector<8xf32>
    %78 = vector.shape_cast %77 : vector<8xf32> to vector<8x1xf32>
    %79 = vector.broadcast %78 : vector<8x1xf32> to vector<8x16xf32>
    %80 = arith.subf %76, %79 : vector<8x16xf32>
    %81 = math.exp %80 : vector<8x16xf32>
    %cst_32 = arith.constant dense<0.000000e+00> : vector<8xf32>
    %82 = vector.multi_reduction <add>, %81, %cst_32 [1] : vector<8x16xf32> to vector<8xf32>
    %83 = vector.shape_cast %82 : vector<8xf32> to vector<8x1xf32>
    %84 = tpu.reciprocal %83 {approx = true} : vector<8x1xf32> -> vector<8x1xf32>
    %85 = vector.broadcast %84 : vector<8x1xf32> to vector<8x16xf32>
    %86 = arith.mulf %81, %85 : vector<8x16xf32>
    %87 = arith.truncf %86 : vector<8x16xf32> to vector<8x16xbf16>
    %cst_33 = arith.constant dense<0.000000e+00> : vector<8x8xf32>
    %88 = tpu.matmul %87, %73, %cst_33 {dimension_numbers = #tpu.dot_dimension_numbers<[1], [0], [0], [1], [0, 0, 1, 1], [], []>} : vector<8x16xbf16>, vector<16x8xbf16>, vector<8x8xf32> -> vector<8x8xf32>
    %89 = arith.truncf %88 : vector<8x8xf32> to vector<8x8xbf16>
    %90 = vector.extract_strided_slice %16 {offsets = [0, 16], sizes = [32, 8], strides = [1, 1]} : vector<32x32xbf16> to vector<32x8xbf16>
    %cst_34 = arith.constant dense<0.000000e+00> : vector<8x32xf32>
    %91 = tpu.matmul %89, %90, %cst_34 {dimension_numbers = #tpu.dot_dimension_numbers<[1], [1], [0], [0], [0, 0, 1, 0], [], []>} : vector<8x8xbf16>, vector<32x8xbf16>, vector<8x32xf32> -> vector<8x32xf32>
    %92 = arith.addf %67, %91 : vector<8x32xf32>
    %93 = vector.extract_strided_slice %8 {offsets = [0, 24], sizes = [8, 8], strides = [1, 1]} : vector<8x32xf32> to vector<8x8xf32>
    %94 = arith.truncf %93 : vector<8x8xf32> to vector<8x8xbf16>
    %95 = vector.extract_strided_slice %14 {offsets = [0, 24], sizes = [16, 8], strides = [1, 1]} : vector<16x32xf32> to vector<16x8xf32>
    %96 = arith.truncf %95 : vector<16x8xf32> to vector<16x8xbf16>
    %97 = vector.extract_strided_slice %15 {offsets = [0, 24], sizes = [16, 8], strides = [1, 1]} : vector<16x32xf32> to vector<16x8xf32>
    %98 = arith.truncf %97 : vector<16x8xf32> to vector<16x8xbf16>
    %cst_35 = arith.constant dense<0.000000e+00> : vector<8x16xf32>
    %99 = tpu.matmul %94, %96, %cst_35 {dimension_numbers = #tpu.dot_dimension_numbers<[1], [1], [0], [0], [0, 0, 1, 0], [], []>} : vector<8x8xbf16>, vector<16x8xbf16>, vector<8x16xf32> -> vector<8x16xf32>
    %cst_36 = arith.constant 0.353553385 : f32
    %100 = vector.broadcast %cst_36 : f32 to vector<8x16xf32>
    %101 = arith.mulf %99, %100 : vector<8x16xf32>
    %cst_37 = arith.constant dense<0xFF800000> : vector<8xf32>
    %102 = vector.multi_reduction <maximumf>, %101, %cst_37 [1] : vector<8x16xf32> to vector<8xf32>
    %103 = vector.shape_cast %102 : vector<8xf32> to vector<8x1xf32>
    %104 = vector.broadcast %103 : vector<8x1xf32> to vector<8x16xf32>
    %105 = arith.subf %101, %104 : vector<8x16xf32>
    %106 = math.exp %105 : vector<8x16xf32>
    %cst_38 = arith.constant dense<0.000000e+00> : vector<8xf32>
    %107 = vector.multi_reduction <add>, %106, %cst_38 [1] : vector<8x16xf32> to vector<8xf32>
    %108 = vector.shape_cast %107 : vector<8xf32> to vector<8x1xf32>
    %109 = tpu.reciprocal %108 {approx = true} : vector<8x1xf32> -> vector<8x1xf32>
    %110 = vector.broadcast %109 : vector<8x1xf32> to vector<8x16xf32>
    %111 = arith.mulf %106, %110 : vector<8x16xf32>
    %112 = arith.truncf %111 : vector<8x16xf32> to vector<8x16xbf16>
    %cst_39 = arith.constant dense<0.000000e+00> : vector<8x8xf32>
    %113 = tpu.matmul %112, %98, %cst_39 {dimension_numbers = #tpu.dot_dimension_numbers<[1], [0], [0], [1], [0, 0, 1, 1], [], []>} : vector<8x16xbf16>, vector<16x8xbf16>, vector<8x8xf32> -> vector<8x8xf32>
    %114 = arith.truncf %113 : vector<8x8xf32> to vector<8x8xbf16>
    %115 = vector.extract_strided_slice %16 {offsets = [0, 24], sizes = [32, 8], strides = [1, 1]} : vector<32x32xbf16> to vector<32x8xbf16>
    %cst_40 = arith.constant dense<0.000000e+00> : vector<8x32xf32>
    %116 = tpu.matmul %114, %115, %cst_40 {dimension_numbers = #tpu.dot_dimension_numbers<[1], [1], [0], [0], [0, 0, 1, 0], [], []>} : vector<8x8xbf16>, vector<32x8xbf16>, vector<8x32xf32> -> vector<8x32xf32>
    %117 = arith.addf %92, %116 : vector<8x32xf32>
    %c0_41 = arith.constant 0 : index
    %c0_42 = arith.constant 0 : index
    %118 = vector.load %arg8[%c0_41, %c0_42] : memref<1x32xf32, #tpu.memory_space<vmem>>, vector<1x32xf32>
    %119 = vector.broadcast %118 : vector<1x32xf32> to vector<8x32xf32>
    %120 = arith.addf %117, %119 : vector<8x32xf32>
    %121 = arith.extf %1 : vector<8x32xbf16> to vector<8x32xf32>
    %122 = arith.addf %121, %120 : vector<8x32xf32>
    %c0_43 = arith.constant 0 : index
    %c0_44 = arith.constant 0 : index
    %123 = vector.load %arg9[%c0_43, %c0_44] : memref<1x32xf32, #tpu.memory_space<vmem>>, vector<1x32xf32>
    %c0_45 = arith.constant 0 : index
    %c0_46 = arith.constant 0 : index
    %124 = vector.load %arg10[%c0_45, %c0_46] : memref<1x32xf32, #tpu.memory_space<vmem>>, vector<1x32xf32>
    %cst_47 = arith.constant dense<0.000000e+00> : vector<8xf32>
    %125 = vector.multi_reduction <add>, %122, %cst_47 [1] : vector<8x32xf32> to vector<8xf32>
    %126 = vector.shape_cast %125 : vector<8xf32> to vector<8x1xf32>
    %cst_48 = arith.constant 3.200000e+01 : f32
    %127 = vector.broadcast %cst_48 : f32 to vector<8x1xf32>
    %128 = arith.divf %126, %127 : vector<8x1xf32>
    %129 = vector.broadcast %128 : vector<8x1xf32> to vector<8x32xf32>
    %130 = arith.subf %122, %129 : vector<8x32xf32>
    %131 = arith.mulf %130, %130 : vector<8x32xf32>
    %cst_49 = arith.constant dense<0.000000e+00> : vector<8xf32>
    %132 = vector.multi_reduction <add>, %131, %cst_49 [1] : vector<8x32xf32> to vector<8xf32>
    %133 = vector.shape_cast %132 : vector<8xf32> to vector<8x1xf32>
    %cst_50 = arith.constant 3.200000e+01 : f32
    %134 = vector.broadcast %cst_50 : f32 to vector<8x1xf32>
    %135 = arith.divf %133, %134 : vector<8x1xf32>
    %cst_51 = arith.constant 9.99999974E-6 : f32
    %136 = vector.broadcast %cst_51 : f32 to vector<8x1xf32>
    %137 = arith.addf %135, %136 : vector<8x1xf32>
    %138 = math.rsqrt %137 : vector<8x1xf32>
    %139 = vector.broadcast %138 : vector<8x1xf32> to vector<8x32xf32>
    %140 = arith.mulf %130, %139 : vector<8x32xf32>
    %141 = vector.broadcast %123 : vector<1x32xf32> to vector<8x32xf32>
    %142 = arith.mulf %140, %141 : vector<8x32xf32>
    %143 = vector.broadcast %124 : vector<1x32xf32> to vector<8x32xf32>
    %144 = arith.addf %142, %143 : vector<8x32xf32>
    %145 = arith.truncf %144 : vector<8x32xf32> to vector<8x32xbf16>
    %c0_52 = arith.constant 0 : index
    %c0_53 = arith.constant 0 : index
    %c0_54 = arith.constant 0 : index
    %146 = vector.load %arg11[%c0_52, %c0_53, %c0_54] : memref<1x8x32xbf16, #tpu.memory_space<vmem>>, vector<1x8x32xbf16>
    %147 = vector.shape_cast %146 : vector<1x8x32xbf16> to vector<8x32xbf16>
    %148 = vector.shape_cast %145 : vector<8x32xbf16> to vector<1x8x32xbf16>
    tpu.vector_store %arg11[%c0_52, %c0_53, %c0_54], %148 {strides = array<i32>} : memref<1x8x32xbf16, #tpu.memory_space<vmem>>, vector<1x8x32xbf16>,
    return
  }
  func.func @transform_0(%arg0: i32) -> (i32, i32, i32) {
    %c0_i32 = arith.constant 0 : i32
    %c0_i32_0 = arith.constant 0 : i32
    %c0_i32_1 = arith.constant 0 : i32
    return %arg0, %c0_i32, %c0_i32_0 : i32, i32, i32
  }
  func.func @transform_1(%arg0: i32) -> (i32, i32, i32) {
    %c0_i32 = arith.constant 0 : i32
    %c0_i32_0 = arith.constant 0 : i32
    %c0_i32_1 = arith.constant 0 : i32
    return %arg0, %c0_i32, %c0_i32_0 : i32, i32, i32
  }
  func.func @transform_2(%arg0: i32) -> (i32, i32) {
    %c0_i32 = arith.constant 0 : i32
    %c0_i32_0 = arith.constant 0 : i32
    %c0_i32_1 = arith.constant 0 : i32
    return %c0_i32, %c0_i32_0 : i32, i32
  }
  func.func @transform_3(%arg0: i32) -> (i32, i32) {
    %c0_i32 = arith.constant 0 : i32
    %c0_i32_0 = arith.constant 0 : i32
    %c0_i32_1 = arith.constant 0 : i32
    return %c0_i32, %c0_i32_0 : i32, i32
  }
  func.func @transform_4(%arg0: i32) -> (i32, i32) {
    %c0_i32 = arith.constant 0 : i32
    %c0_i32_0 = arith.constant 0 : i32
    %c0_i32_1 = arith.constant 0 : i32
    return %c0_i32, %c0_i32_0 : i32, i32
  }
  func.func @transform_5(%arg0: i32) -> (i32, i32) {
    %c0_i32 = arith.constant 0 : i32
    %c0_i32_0 = arith.constant 0 : i32
    %c0_i32_1 = arith.constant 0 : i32
    return %c0_i32, %c0_i32_0 : i32, i32
  }
  func.func @transform_6(%arg0: i32) -> (i32, i32) {
    %c0_i32 = arith.constant 0 : i32
    %c0_i32_0 = arith.constant 0 : i32
    %c0_i32_1 = arith.constant 0 : i32
    return %c0_i32, %c0_i32_0 : i32, i32
  }
  func.func @transform_7(%arg0: i32) -> (i32, i32) {
    %c0_i32 = arith.constant 0 : i32
    %c0_i32_0 = arith.constant 0 : i32
    %c0_i32_1 = arith.constant 0 : i32
    return %c0_i32, %c0_i32_0 : i32, i32
  }
  func.func @transform_8(%arg0: i32) -> (i32, i32) {
    %c0_i32 = arith.constant 0 : i32
    %c0_i32_0 = arith.constant 0 : i32
    %c0_i32_1 = arith.constant 0 : i32
    return %c0_i32, %c0_i32_0 : i32, i32
  }
  func.func @transform_9(%arg0: i32) -> (i32, i32) {
    %c0_i32 = arith.constant 0 : i32
    %c0_i32_0 = arith.constant 0 : i32
    %c0_i32_1 = arith.constant 0 : i32
    return %c0_i32, %c0_i32_0 : i32, i32
  }
  func.func @transform_10(%arg0: i32) -> (i32, i32, i32) {
    %c0_i32 = arith.constant 0 : i32
    %c0_i32_0 = arith.constant 0 : i32
    %c0_i32_1 = arith.constant 0 : i32
    return %arg0, %c0_i32, %c0_i32_0 : i32, i32, i32
  }
}

module attributes {stable_mosaic.version = 11 : i64} {
  func.func @_ffn_block_kernel(%arg0: i32, %arg1: memref<1x8x32xbf16, #tpu.memory_space<vmem>>, %arg2: memref<2048x32xbf16, #tpu.memory_space<vmem>>, %arg3: memref<1x2048xf32, #tpu.memory_space<vmem>>, %arg4: memref<32x2048xbf16, #tpu.memory_space<vmem>>, %arg5: memref<1x32xf32, #tpu.memory_space<vmem>>, %arg6: memref<1x32xf32, #tpu.memory_space<vmem>>, %arg7: memref<1x32xf32, #tpu.memory_space<vmem>>, %arg8: memref<1x8x32xbf16, #tpu.memory_space<vmem>>) attributes {dimension_semantics = [#tpu.dimension_semantics<parallel>], iteration_bounds = array<i64: 2>, scalar_prefetch = 0 : i64, scratch_operands = 0 : i64, tpu.core_type = #tpu.core_type<tc>, window_params = [{transform_indices = @transform_0, window_bounds = array<i64: 1, 8, 32>}, {pipeline_mode = #tpu.pipeline_mode<synchronous>, transform_indices = @transform_1, window_bounds = array<i64: 2048, 32>}, {pipeline_mode = #tpu.pipeline_mode<synchronous>, transform_indices = @transform_2, window_bounds = array<i64: 1, 2048>}, {pipeline_mode = #tpu.pipeline_mode<synchronous>, transform_indices = @transform_3, window_bounds = array<i64: 32, 2048>}, {pipeline_mode = #tpu.pipeline_mode<synchronous>, transform_indices = @transform_4, window_bounds = array<i64: 1, 32>}, {pipeline_mode = #tpu.pipeline_mode<synchronous>, transform_indices = @transform_5, window_bounds = array<i64: 1, 32>}, {pipeline_mode = #tpu.pipeline_mode<synchronous>, transform_indices = @transform_6, window_bounds = array<i64: 1, 32>}, {transform_indices = @transform_7, window_bounds = array<i64: 1, 8, 32>}]} {
    %c0 = arith.constant 0 : index
    %c0_0 = arith.constant 0 : index
    %c0_1 = arith.constant 0 : index
    %0 = vector.load %arg1[%c0, %c0_0, %c0_1] : memref<1x8x32xbf16, #tpu.memory_space<vmem>>, vector<1x8x32xbf16>
    %1 = vector.shape_cast %0 : vector<1x8x32xbf16> to vector<8x32xbf16>
    %c0_2 = arith.constant 0 : index
    %c0_3 = arith.constant 0 : index
    %2 = vector.load %arg2[%c0_2, %c0_3] : memref<2048x32xbf16, #tpu.memory_space<vmem>>, vector<2048x32xbf16>
    %cst = arith.constant dense<0.000000e+00> : vector<8x2048xf32>
    %3 = tpu.matmul %1, %2, %cst {dimension_numbers = #tpu.dot_dimension_numbers<[1], [1], [0], [0], [0, 0, 1, 0], [], []>} : vector<8x32xbf16>, vector<2048x32xbf16>, vector<8x2048xf32> -> vector<8x2048xf32>
    %c0_4 = arith.constant 0 : index
    %c0_5 = arith.constant 0 : index
    %4 = vector.load %arg3[%c0_4, %c0_5] : memref<1x2048xf32, #tpu.memory_space<vmem>>, vector<1x2048xf32>
    %5 = vector.broadcast %4 : vector<1x2048xf32> to vector<8x2048xf32>
    %6 = arith.addf %3, %5 : vector<8x2048xf32>
    %cst_6 = arith.constant 0.000000e+00 : f32
    %7 = vector.broadcast %cst_6 : f32 to vector<8x2048xf32>
    %8 = arith.maximumf %6, %7 : vector<8x2048xf32>
    %9 = arith.truncf %8 : vector<8x2048xf32> to vector<8x2048xbf16>
    %c0_7 = arith.constant 0 : index
    %c0_8 = arith.constant 0 : index
    %10 = vector.load %arg4[%c0_7, %c0_8] : memref<32x2048xbf16, #tpu.memory_space<vmem>>, vector<32x2048xbf16>
    %cst_9 = arith.constant dense<0.000000e+00> : vector<8x32xf32>
    %11 = tpu.matmul %9, %10, %cst_9 {dimension_numbers = #tpu.dot_dimension_numbers<[1], [1], [0], [0], [0, 0, 1, 0], [], []>} : vector<8x2048xbf16>, vector<32x2048xbf16>, vector<8x32xf32> -> vector<8x32xf32>
    %c0_10 = arith.constant 0 : index
    %c0_11 = arith.constant 0 : index
    %12 = vector.load %arg5[%c0_10, %c0_11] : memref<1x32xf32, #tpu.memory_space<vmem>>, vector<1x32xf32>
    %13 = vector.broadcast %12 : vector<1x32xf32> to vector<8x32xf32>
    %14 = arith.addf %11, %13 : vector<8x32xf32>
    %15 = arith.extf %1 : vector<8x32xbf16> to vector<8x32xf32>
    %16 = arith.addf %15, %14 : vector<8x32xf32>
    %c0_12 = arith.constant 0 : index
    %c0_13 = arith.constant 0 : index
    %17 = vector.load %arg6[%c0_12, %c0_13] : memref<1x32xf32, #tpu.memory_space<vmem>>, vector<1x32xf32>
    %c0_14 = arith.constant 0 : index
    %c0_15 = arith.constant 0 : index
    %18 = vector.load %arg7[%c0_14, %c0_15] : memref<1x32xf32, #tpu.memory_space<vmem>>, vector<1x32xf32>
    %cst_16 = arith.constant dense<0.000000e+00> : vector<8xf32>
    %19 = vector.multi_reduction <add>, %16, %cst_16 [1] : vector<8x32xf32> to vector<8xf32>
    %20 = vector.shape_cast %19 : vector<8xf32> to vector<8x1xf32>
    %cst_17 = arith.constant 3.200000e+01 : f32
    %21 = vector.broadcast %cst_17 : f32 to vector<8x1xf32>
    %22 = arith.divf %20, %21 : vector<8x1xf32>
    %23 = vector.broadcast %22 : vector<8x1xf32> to vector<8x32xf32>
    %24 = arith.subf %16, %23 : vector<8x32xf32>
    %25 = arith.mulf %24, %24 : vector<8x32xf32>
    %cst_18 = arith.constant dense<0.000000e+00> : vector<8xf32>
    %26 = vector.multi_reduction <add>, %25, %cst_18 [1] : vector<8x32xf32> to vector<8xf32>
    %27 = vector.shape_cast %26 : vector<8xf32> to vector<8x1xf32>
    %cst_19 = arith.constant 3.200000e+01 : f32
    %28 = vector.broadcast %cst_19 : f32 to vector<8x1xf32>
    %29 = arith.divf %27, %28 : vector<8x1xf32>
    %cst_20 = arith.constant 9.99999974E-6 : f32
    %30 = vector.broadcast %cst_20 : f32 to vector<8x1xf32>
    %31 = arith.addf %29, %30 : vector<8x1xf32>
    %32 = math.rsqrt %31 : vector<8x1xf32>
    %33 = vector.broadcast %32 : vector<8x1xf32> to vector<8x32xf32>
    %34 = arith.mulf %24, %33 : vector<8x32xf32>
    %35 = vector.broadcast %17 : vector<1x32xf32> to vector<8x32xf32>
    %36 = arith.mulf %34, %35 : vector<8x32xf32>
    %37 = vector.broadcast %18 : vector<1x32xf32> to vector<8x32xf32>
    %38 = arith.addf %36, %37 : vector<8x32xf32>
    %39 = arith.truncf %38 : vector<8x32xf32> to vector<8x32xbf16>
    %c0_21 = arith.constant 0 : index
    %c0_22 = arith.constant 0 : index
    %c0_23 = arith.constant 0 : index
    %40 = vector.load %arg8[%c0_21, %c0_22, %c0_23] : memref<1x8x32xbf16, #tpu.memory_space<vmem>>, vector<1x8x32xbf16>
    %41 = vector.shape_cast %40 : vector<1x8x32xbf16> to vector<8x32xbf16>
    %42 = vector.shape_cast %39 : vector<8x32xbf16> to vector<1x8x32xbf16>
    tpu.vector_store %arg8[%c0_21, %c0_22, %c0_23], %42 {strides = array<i32>} : memref<1x8x32xbf16, #tpu.memory_space<vmem>>, vector<1x8x32xbf16>,
    return
  }
  func.func @transform_0(%arg0: i32) -> (i32, i32, i32) {
    %c0_i32 = arith.constant 0 : i32
    %c0_i32_0 = arith.constant 0 : i32
    %c0_i32_1 = arith.constant 0 : i32
    return %arg0, %c0_i32, %c0_i32_0 : i32, i32, i32
  }
  func.func @transform_1(%arg0: i32) -> (i32, i32) {
    %c0_i32 = arith.constant 0 : i32
    %c0_i32_0 = arith.constant 0 : i32
    %c0_i32_1 = arith.constant 0 : i32
    return %c0_i32, %c0_i32_0 : i32, i32
  }
  func.func @transform_2(%arg0: i32) -> (i32, i32) {
    %c0_i32 = arith.constant 0 : i32
    %c0_i32_0 = arith.constant 0 : i32
    %c0_i32_1 = arith.constant 0 : i32
    return %c0_i32, %c0_i32_0 : i32, i32
  }
  func.func @transform_3(%arg0: i32) -> (i32, i32) {
    %c0_i32 = arith.constant 0 : i32
    %c0_i32_0 = arith.constant 0 : i32
    %c0_i32_1 = arith.constant 0 : i32
    return %c0_i32, %c0_i32_0 : i32, i32
  }
  func.func @transform_4(%arg0: i32) -> (i32, i32) {
    %c0_i32 = arith.constant 0 : i32
    %c0_i32_0 = arith.constant 0 : i32
    %c0_i32_1 = arith.constant 0 : i32
    return %c0_i32, %c0_i32_0 : i32, i32
  }
  func.func @transform_5(%arg0: i32) -> (i32, i32) {
    %c0_i32 = arith.constant 0 : i32
    %c0_i32_0 = arith.constant 0 : i32
    %c0_i32_1 = arith.constant 0 : i32
    return %c0_i32, %c0_i32_0 : i32, i32
  }
  func.func @transform_6(%arg0: i32) -> (i32, i32) {
    %c0_i32 = arith.constant 0 : i32
    %c0_i32_0 = arith.constant 0 : i32
    %c0_i32_1 = arith.constant 0 : i32
    return %c0_i32, %c0_i32_0 : i32, i32
  }
  func.func @transform_7(%arg0: i32) -> (i32, i32, i32) {
    %c0_i32 = arith.constant 0 : i32
    %c0_i32_0 = arith.constant 0 : i32
    %c0_i32_1 = arith.constant 0 : i32
    return %arg0, %c0_i32, %c0_i32_0 : i32, i32, i32
  }
}

module attributes {stable_mosaic.version = 11 : i64} {
  func.func @_linear_kernel(%arg0: i32, %arg1: i32, %arg2: i32, %arg3: memref<8x32xbf16, #tpu.memory_space<vmem>>, %arg4: memref<128x32xbf16, #tpu.memory_space<vmem>>, %arg5: memref<1x128xf32, #tpu.memory_space<vmem>>, %arg6: memref<8x128xf32, #tpu.memory_space<vmem>>, %arg7: memref<8x128xf32, #tpu.memory_space<vmem>>) attributes {dimension_semantics = [#tpu.dimension_semantics<parallel>, #tpu.dimension_semantics<parallel>, #tpu.dimension_semantics<arbitrary>], iteration_bounds = array<i64: 2, 1, 1>, scalar_prefetch = 0 : i64, scratch_operands = 1 : i64, tpu.core_type = #tpu.core_type<tc>, window_params = [{transform_indices = @transform_0, window_bounds = array<i64: 8, 32>}, {transform_indices = @transform_1, window_bounds = array<i64: 128, 32>}, {transform_indices = @transform_2, window_bounds = array<i64: 1, 128>}, {transform_indices = @transform_3, window_bounds = array<i64: 8, 128>}]} {
    %c0_i32 = arith.constant 0 : i32
    %0 = arith.cmpi eq, %arg2, %c0_i32 : i32
    %1 = arith.extui %0 : i1 to i32
    %c0_i32_0 = arith.constant 0 : i32
    %2 = arith.cmpi ne, %1, %c0_i32_0 : i32
    scf.if %2 {
      %cst_10 = arith.constant 0.000000e+00 : f32
      %12 = vector.broadcast %cst_10 : f32 to vector<8x128xf32>
      %c0_11 = arith.constant 0 : index
      %c0_12 = arith.constant 0 : index
      %13 = vector.load %arg7[%c0_11, %c0_12] : memref<8x128xf32, #tpu.memory_space<vmem>>, vector<8x128xf32>
      tpu.vector_store %arg7[%c0_11, %c0_12], %12 {strides = array<i32>} : memref<8x128xf32, #tpu.memory_space<vmem>>, vector<8x128xf32>,
    } else {
    }
    %c0 = arith.constant 0 : index
    %c0_1 = arith.constant 0 : index
    %3 = vector.load %arg7[%c0, %c0_1] : memref<8x128xf32, #tpu.memory_space<vmem>>, vector<8x128xf32>
    %c0_2 = arith.constant 0 : index
    %c0_3 = arith.constant 0 : index
    %4 = vector.load %arg3[%c0_2, %c0_3] : memref<8x32xbf16, #tpu.memory_space<vmem>>, vector<8x32xbf16>
    %c0_4 = arith.constant 0 : index
    %c0_5 = arith.constant 0 : index
    %5 = vector.load %arg4[%c0_4, %c0_5] : memref<128x32xbf16, #tpu.memory_space<vmem>>, vector<128x32xbf16>
    %cst = arith.constant dense<0.000000e+00> : vector<8x128xf32>
    %6 = tpu.matmul %4, %5, %cst {dimension_numbers = #tpu.dot_dimension_numbers<[1], [1], [0], [0], [0, 0, 1, 0], [], []>} : vector<8x32xbf16>, vector<128x32xbf16>, vector<8x128xf32> -> vector<8x128xf32>
    %7 = arith.addf %3, %6 : vector<8x128xf32>
    %c0_6 = arith.constant 0 : index
    %c0_7 = arith.constant 0 : index
    %8 = vector.load %arg7[%c0_6, %c0_7] : memref<8x128xf32, #tpu.memory_space<vmem>>, vector<8x128xf32>
    tpu.vector_store %arg7[%c0_6, %c0_7], %7 {strides = array<i32>} : memref<8x128xf32, #tpu.memory_space<vmem>>, vector<8x128xf32>,
    %c0_i32_8 = arith.constant 0 : i32
    %9 = arith.cmpi eq, %arg2, %c0_i32_8 : i32
    %10 = arith.extui %9 : i1 to i32
    %c0_i32_9 = arith.constant 0 : i32
    %11 = arith.cmpi ne, %10, %c0_i32_9 : i32
    scf.if %11 {
      %c0_10 = arith.constant 0 : index
      %c0_11 = arith.constant 0 : index
      %12 = vector.load %arg7[%c0_10, %c0_11] : memref<8x128xf32, #tpu.memory_space<vmem>>, vector<8x128xf32>
      %c0_12 = arith.constant 0 : index
      %c0_13 = arith.constant 0 : index
      %13 = vector.load %arg5[%c0_12, %c0_13] : memref<1x128xf32, #tpu.memory_space<vmem>>, vector<1x128xf32>
      %14 = vector.broadcast %13 : vector<1x128xf32> to vector<8x128xf32>
      %15 = arith.addf %12, %14 : vector<8x128xf32>
      %c0_14 = arith.constant 0 : index
      %c0_15 = arith.constant 0 : index
      %16 = vector.load %arg6[%c0_14, %c0_15] : memref<8x128xf32, #tpu.memory_space<vmem>>, vector<8x128xf32>
      tpu.vector_store %arg6[%c0_14, %c0_15], %15 {strides = array<i32>} : memref<8x128xf32, #tpu.memory_space<vmem>>, vector<8x128xf32>,
    } else {
    }
    return
  }
  func.func @transform_0(%arg0: i32, %arg1: i32, %arg2: i32) -> (i32, i32) {
    %c0_i32 = arith.constant 0 : i32
    return %arg0, %arg2 : i32, i32
  }
  func.func @transform_1(%arg0: i32, %arg1: i32, %arg2: i32) -> (i32, i32) {
    %c0_i32 = arith.constant 0 : i32
    return %arg1, %arg2 : i32, i32
  }
  func.func @transform_2(%arg0: i32, %arg1: i32, %arg2: i32) -> (i32, i32) {
    %c0_i32 = arith.constant 0 : i32
    %c0_i32_0 = arith.constant 0 : i32
    return %c0_i32, %arg1 : i32, i32
  }
  func.func @transform_3(%arg0: i32, %arg1: i32, %arg2: i32) -> (i32, i32) {
    %c0_i32 = arith.constant 0 : i32
    return %arg0, %arg1 : i32, i32
  }
}

</mosaic_0001>

<llo_original>
// kernel: transformer_forward.8
$region0: #{transformer_forward.8}
  #allocation0 [shape = 'u32[]', space=smem, size = 0x4, offset = 0x4, fixed_abs, tag = 'smem constant byte address 0x4 - core index']
  #allocation1 [shape = 'u32[72,128]{1,0:T(1,128)}', space=vmem, size = 0x9000, scoped, tag = 'internal scratch']
  #allocation2 [shape = 'f32[16,32]{1,0:T(8,128)}', space=vmem, size = 0x2000, scoped, tag = 'scratch operand']
  %s0 = inlined_call_operand.vmem [shape: bf16[32,48], index: 0, kind: input, shape index: {}]
  %s1 = inlined_call_operand.vmem [shape: bf16[32,48], index: 1, kind: input, shape index: {}]
  %s2 = inlined_call_operand.vmem [shape: f32[1,32], index: 2, kind: input, shape index: {}]
  %s3 = inlined_call_operand.vmem [shape: bf16[32,32], index: 3, kind: output, shape index: {}]
  %s4 = sld [smem:[#allocation0]]
  $region53: #{transformer_forward.8} parent=0
    _
  %s6 = ssub.s32 1, %s4
  %s7 = scalar_select 0, %s6, %s4
  loop: start=0, step=1, limit=4
  $region2: #{transformer_forward.8} parent=0 // loop_pre_header
    _
  $region3: #{transformer_forward.8} parent=0 // loop_header
    %s9 = sphi 0, %s13
    %p10 = scmp.ge.s32.totalorder %s9, 4
    %s16 = sphi 0, %s35
    %s17 = sphi 0, %s31
    %s18 = sphi 0, %s27
    %s19 = sphi 0, %s16
    %s20 = sphi 0, %s17
    %s21 = sphi 0, %s18
    %s22 = sphi 0, %s19
    %s23 = sphi 0, %s20
    %s24 = sphi 0, %s21
    %s40 = sphi 0, %s42
    %s43 = sphi 0, %s40
    %s44 = sphi 0, %s43
    %s60 = sphi 0, %s44
    %s68 = sphi 0, %s70
    %s71 = sphi 0, %s68
    %s72 = sphi 0, %s71
    %s88 = sphi 0, %s72
    %s94 = sphi 0, %s96
    %s97 = sphi 0, %s94
    %s98 = sphi 0, %s97
    %s114 = sphi 0, %s98
    %s122 = sphi 0, %s124
    %s125 = sphi 0, %s122
    %s126 = sphi 0, %s125
    %s142 = sphi 0, %s126
  $region4: #{transformer_forward.8} parent=0 // loop_header_branch
    %12 = sbr.rel (%p10) target = $region8
  $region5: #{transformer_forward.8} parent=0 // loop_body
    %s14 = ssub.s32 %s9, 1
    %s15 = ssub.s32 %s9, 2
    %s25 = sadd.s32 1, %s18
    %p26 = scmp.ge.s32.totalorder %s25, 1
    %s27 = scalar_select %p26, 0, %s25
    %s28 = sadd.s32 1, %s17
    %s29 = scalar_select %p26, %s28, %s17
    %p30 = scmp.ge.s32.totalorder %s29, 1
    %s31 = scalar_select %p30, 0, %s29
    %s32 = sadd.s32 1, %s16
    %s33 = scalar_select %p30, %s32, %s16
    %p34 = scmp.ge.s32.totalorder %s33, 2
    %s35 = scalar_select %p34, 0, %s33
    %s36 = ssub.s32 %s16, %s35
    %s37 = ssub.s32 %s18, %s27
    %s38 = sor.u32 %s36, %s37
    %p39 = scmp.eq.s32.totalorder %s38, 0
    %s41 = sadd.s32 %s40, 1
    %s42 = scalar_select %p39, %s40, %s41
    %p45 = pneg %p39
    %p46 = scmp.eq.s32.totalorder %s9, 1
    %p47 = por %p45, %p46
    %p48 = scmp.ne.s32.totalorder %s40, %s43
    %p49 = scmp.eq.s32.totalorder %s9, 0
    %p50 = por %p48, %p49
    %p51 = scmp.ne.s32.totalorder %s40, %s43
    %p52 = scmp.eq.s32.totalorder %s14, 1
    %p53 = por %p51, %p52
    %p54 = scmp.ne.s32.totalorder %s43, %s44
    %p55 = scmp.eq.s32.totalorder %s14, 0
    %p56 = por %p54, %p55
    %p57 = scmp.ne.s32.totalorder %s43, %s44
    %p58 = scmp.eq.s32.totalorder %s15, 1
    %p59 = por %p57, %p58
    %p61 = scmp.ne.s32.totalorder %s44, %s60
    %p62 = scmp.eq.s32.totalorder %s15, 0
    %p63 = por %p61, %p62
    %s64 = ssub.s32 %s17, %s31
    %s65 = ssub.s32 %s18, %s27
    %s66 = sor.u32 %s64, %s65
    %p67 = scmp.eq.s32.totalorder %s66, 0
    %s69 = sadd.s32 %s68, 1
    %s70 = scalar_select %p67, %s68, %s69
    %p73 = pneg %p67
    %p74 = scmp.eq.s32.totalorder %s9, 1
    %p75 = por %p73, %p74
    %p76 = scmp.ne.s32.totalorder %s68, %s71
    %p77 = scmp.eq.s32.totalorder %s9, 0
    %p78 = por %p76, %p77
    %p79 = scmp.ne.s32.totalorder %s68, %s71
    %p80 = scmp.eq.s32.totalorder %s14, 1
    %p81 = por %p79, %p80
    %p82 = scmp.ne.s32.totalorder %s71, %s72
    %p83 = scmp.eq.s32.totalorder %s14, 0
    %p84 = por %p82, %p83
    %p85 = scmp.ne.s32.totalorder %s71, %s72
    %p86 = scmp.eq.s32.totalorder %s15, 1
    %p87 = por %p85, %p86
    %p89 = scmp.ne.s32.totalorder %s72, %s88
    %p90 = scmp.eq.s32.totalorder %s15, 0
    %p91 = por %p89, %p90
    %s92 = ssub.s32 %s17, %s31
    %p93 = scmp.eq.s32.totalorder %s92, 0
    %s95 = sadd.s32 %s94, 1
    %s96 = scalar_select %p93, %s94, %s95
    %p99 = pneg %p93
    %p100 = scmp.eq.s32.totalorder %s9, 1
    %p101 = por %p99, %p100
    %p102 = scmp.ne.s32.totalorder %s94, %s97
    %p103 = scmp.eq.s32.totalorder %s9, 0
    %p104 = por %p102, %p103
    %p105 = scmp.ne.s32.totalorder %s94, %s97
    %p106 = scmp.eq.s32.totalorder %s14, 1
    %p107 = por %p105, %p106
    %p108 = scmp.ne.s32.totalorder %s97, %s98
    %p109 = scmp.eq.s32.totalorder %s14, 0
    %p110 = por %p108, %p109
    %p111 = scmp.ne.s32.totalorder %s97, %s98
    %p112 = scmp.eq.s32.totalorder %s15, 1
    %p113 = por %p111, %p112
    %p115 = scmp.ne.s32.totalorder %s98, %s114
    %p116 = scmp.eq.s32.totalorder %s15, 0
    %p117 = por %p115, %p116
    %s118 = ssub.s32 %s16, %s35
    %s119 = ssub.s32 %s17, %s31
    %s120 = sor.u32 %s118, %s119
    %p121 = scmp.eq.s32.totalorder %s120, 0
    %s123 = sadd.s32 %s122, 1
    %s124 = scalar_select %p121, %s122, %s123
    %p127 = pneg %p121
    %p128 = scmp.eq.s32.totalorder %s9, 1
    %p129 = por %p127, %p128
    %p130 = scmp.ne.s32.totalorder %s122, %s125
    %p131 = scmp.eq.s32.totalorder %s9, 0
    %p132 = por %p130, %p131
    %p133 = scmp.ne.s32.totalorder %s122, %s125
    %p134 = scmp.eq.s32.totalorder %s14, 1
    %p135 = por %p133, %p134
    %p136 = scmp.ne.s32.totalorder %s125, %s126
    %p137 = scmp.eq.s32.totalorder %s14, 0
    %p138 = por %p136, %p137
    %p139 = scmp.ne.s32.totalorder %s125, %s126
    %p140 = scmp.eq.s32.totalorder %s15, 1
    %p141 = por %p139, %p140
    %p143 = scmp.ne.s32.totalorder %s126, %s142
    %p144 = scmp.eq.s32.totalorder %s15, 0
    %p145 = por %p143, %p144
    %p146 = scmp.le.s32.totalorder 1, %s9
    %p147 = scmp.lt.s32.totalorder %s9, 3
    %p148 = pnand %p146, %p147
    %p149 = pneg %p148
    // Predicated region
    $region9: #{transformer_forward.8} parent=5 // pred_check
      _
    $region10: #{transformer_forward.8} parent=5 // pred_check_branch
      %151 = sbr.rel (%p148) target = $region12
    $region11: #{transformer_forward.8} parent=5 // pred_region
      %s152 = ssub.s32 %s9, 1
      // Predicated region
      $region13: #{transformer_forward.8} parent=11 // pred_check
        %p153 = pneg %p84
      $region14: #{transformer_forward.8} parent=11 // pred_check_branch
        %155 = sbr.rel (%p153) target = $region16
      $region15: #{transformer_forward.8} parent=11 // pred_region
        %s156 = smul.u32 4, %s20
        %p157 = scmp.lt.s32.totalorder %s156, 3
        %s158 = scalar_select %p157, %s156, 3
        %p159 = scmp.lt.s32.totalorder %s21, 0
        %s160 = scalar_select %p159, %s21, 0
        %s161 = sadd.s32 %s160, %s158
        %s162 = smul.addr %s161, 4
        %s163 = scalar_lea.vmem %s1, %s162
        %s164 = smul.u32 4, %s20
      $region16: #{transformer_forward.8} parent=11 // pred_fallthru
        _
      // Predicated region
      $region17: #{transformer_forward.8} parent=11 // pred_check
        %p165 = pneg %p110
      $region18: #{transformer_forward.8} parent=11 // pred_check_branch
        %167 = sbr.rel (%p165) target = $region20
      $region19: #{transformer_forward.8} parent=11 // pred_region
        %p168 = scmp.lt.s32.totalorder %s20, 0
        %s169 = scalar_select %p168, %s20, 0
        %s170 = scalar_lea.vmem %s2, %s169
      $region20: #{transformer_forward.8} parent=11 // pred_fallthru
        _
    $region12: #{transformer_forward.8} parent=5 // pred_fallthru
      _
    %p171 = scmp.lt.s32.totalorder %s9, 2
    // Predicated region
    $region21: #{transformer_forward.8} parent=5 // pred_check
      %p172 = pneg %p171
    $region22: #{transformer_forward.8} parent=5 // pred_check_branch
      %174 = sbr.rel (%p172) target = $region24
    $region23: #{transformer_forward.8} parent=5 // pred_region
      // Predicated region
      $region25: #{transformer_forward.8} parent=23 // pred_check
        %p175 = pneg %p50
      $region26: #{transformer_forward.8} parent=23 // pred_check_branch
        %177 = sbr.rel (%p175) target = $region28
      $region27: #{transformer_forward.8} parent=23 // pred_region
        %s178 = smul.u32 2, %s16
        %p179 = scmp.lt.s32.totalorder %s178, 3
        %s180 = scalar_select %p179, %s178, 3
        %p181 = scmp.lt.s32.totalorder %s18, 0
        %s182 = scalar_select %p181, %s18, 0
        %s183 = sadd.s32 %s182, %s180
        %s184 = smul.addr %s183, 4
        %s185 = scalar_lea.vmem %s0, %s184
        %s186 = smul.u32 2, %s16
      $region28: #{transformer_forward.8} parent=23 // pred_fallthru
        _
    $region24: #{transformer_forward.8} parent=5 // pred_fallthru
      _
    %p187 = scmp.le.s32.totalorder 1, %s9
    %p188 = scmp.lt.s32.totalorder %s9, 3
    %p189 = pnand %p187, %p188
    %p190 = pneg %p189
    // Predicated region
    $region29: #{transformer_forward.8} parent=5 // pred_check
      _
    $region30: #{transformer_forward.8} parent=5 // pred_check_branch
      %192 = sbr.rel (%p189) target = $region32
    $region31: #{transformer_forward.8} parent=5 // pred_region
      %s193 = ssub.s32 %s9, 1
      %s194 = smul.u32 2, %s19
      %p195 = scmp.lt.s32.totalorder %s194, 3
      %s196 = scalar_select %p195, %s194, 3
      %p197 = scmp.lt.s32.totalorder %s21, 0
      %s198 = scalar_select %p197, %s21, 0
      %s199 = sadd.s32 %s198, %s196
      %s200 = smul.addr %s199, 4
      %s201 = scalar_lea.vmem %s0, %s200
      %p202 = pneg %p56
      %p203 = pneg %p53
      %s204 = smul.u32 4, %s20
      %p205 = scmp.lt.s32.totalorder %s204, 3
      %s206 = scalar_select %p205, %s204, 3
      %p207 = scmp.lt.s32.totalorder %s21, 0
      %s208 = scalar_select %p207, %s21, 0
      %s209 = sadd.s32 %s208, %s206
      %s210 = smul.addr %s209, 4
      %s211 = scalar_lea.vmem %s1, %s210
      %p212 = pneg %p84
      %p213 = pneg %p81
      %p214 = scmp.lt.s32.totalorder %s20, 0
      %s215 = scalar_select %p214, %s20, 0
      %s216 = scalar_lea.vmem %s2, %s215
      %p217 = pneg %p110
      %p218 = pneg %p107
      %p219 = pneg %p138
      %p220 = pneg %p135
      %s221 = smul.u32 2, %s19
      %p222 = scmp.lt.s32.totalorder %s221, 3
      %s223 = scalar_select %p222, %s221, 3
      %p224 = scmp.lt.s32.totalorder %s20, 0
      %s225 = scalar_select %p224, %s20, 0
      %s226 = sadd.s32 %s225, %s223
      %s227 = smul.addr %s226, 4
      %s228 = scalar_lea.vmem %s3, %s227
      %s229 = smul.u32 2, %s19
      %p230 = scmp.lt.s32.totalorder %s229, 3
      %s231 = scalar_select %p230, %s229, 3
      %p232 = scmp.lt.s32.totalorder %s21, 0
      %s233 = scalar_select %p232, %s21, 0
      %s234 = sadd.s32 %s233, %s231
      %s235 = smul.addr %s234, 4
      %s236 = scalar_lea.vmem %s0, %s235
      %s237 = smul.u32 2, %s19
      %s238 = smul.u32 4, %s20
      %p239 = scmp.lt.s32.totalorder %s238, 3
      %s240 = scalar_select %p239, %s238, 3
      %p241 = scmp.lt.s32.totalorder %s21, 0
      %s242 = scalar_select %p241, %s21, 0
      %s243 = sadd.s32 %s242, %s240
      %s244 = smul.addr %s243, 4
      %s245 = scalar_lea.vmem %s1, %s244
      %s246 = smul.u32 4, %s20
      %p247 = scmp.lt.s32.totalorder %s20, 0
      %s248 = scalar_select %p247, %s20, 0
      %s249 = scalar_lea.vmem %s2, %s248
      %s250 = smul.u32 2, %s19
      %p251 = scmp.lt.s32.totalorder %s250, 3
      %s252 = scalar_select %p251, %s250, 3
      %p253 = scmp.lt.s32.totalorder %s20, 0
      %s254 = scalar_select %p253, %s20, 0
      %s255 = sadd.s32 %s254, %s252
      %s256 = smul.addr %s255, 4
      %s257 = scalar_lea.vmem %s3, %s256
      %s258 = smul.u32 2, %s19
      %p260 = scmp.eq.s32.totalorder %s21, 0
      // Predicated region
      $region33: #{transformer_forward.8} parent=31 // pred_check
        %p261 = pneg %p260
      $region34: #{transformer_forward.8} parent=31 // pred_check_branch
        %263 = sbr.rel (%p261) target = $region36
      $region35: #{transformer_forward.8} parent=31 // pred_region
        %vm264 = vcmask 261120
        %265 = vst.msk [vmem:[#allocation2] sm:$0xff] %vm264, 0.0
        %266 = vst.msk [vmem:[#allocation2 + $0x8] sm:$0xff] %vm264, 0.0
      $region36: #{transformer_forward.8} parent=31 // pred_fallthru
        _
      %v267 = vld [vmem:[#allocation2] sm:$0xff]
      %v268 = vld [vmem:[#allocation2 + $0x8] sm:$0xff]
      %v269 = vld [vmem:[%s236] sm:$0xf]
      %v270 = vld [vmem:[%s236 + $0x4] sm:$0xf]
      %v271 = vld [vmem:[%s245] sm:$0xf]
      %v272 = vld [vmem:[%s245 + $0x4] sm:$0xf]
      %v273 = vld [vmem:[%s245 + $0x8] sm:$0xf]
      %v274 = vld [vmem:[%s245 + $0xc] sm:$0xf]
      %v277 = vunpack.c.l.b16 %v269
      %v278 = vunpack.c.l.b16 %v270
      %v279 = vpack.c.b16 %v278, %v277
      %v284 = vunpack.c.l.b16 %v271
      %v285 = vunpack.c.l.b16 %v272
      %v286 = vunpack.c.l.b16 %v273
      %v287 = vunpack.c.l.b16 %v274
      %v288 = vpack.c.b16 %v285, %v284
      %v289 = vpack.c.b16 %v287, %v286
      %vm290 = vcmask 392192
      %v292 = vsel %vm290, %v279, 0
      %v295 = vsel %vm290, %v288, 0
      %v298 = vsel %vm290, %v289, 0
      %300 = vmatpush.bf16.xpose.msra.mxu0 0
      %301 = vmatpush.bf16.xpose.msra.mxu0 0
      %302 = vmatpush.bf16.xpose.msra.mxu0 0
      %303 = vmatpush.bf16.xpose.msra.mxu0 0
      %304 = vmatpush.bf16.xpose.msra.mxu0 0
      %305 = vmatpush.bf16.xpose.msra.mxu0 0
      %306 = vmatpush.bf16.xpose.msra.mxu0 %v298
      %307 = vmatpush.bf16.xpose.msra.mxu0 %v295
      %308 = vmatmul.bf16.gmra.mxu0 %v292
      %v309 = vpop.f32.mrf.mxu0
      %v310 = vadd.f32 0.0, %v309
      %v311 = vpop.f32.mrf.mxu0
      %v312 = vadd.f32 0.0, %v311
      %313 = vdwg.mxu0
      %v314 = vadd.f32 %v267, %v310
      %v315 = vadd.f32 %v268, %v312
      %vm316 = vcmask 261120
      %317 = vst.msk [vmem:[#allocation2] sm:$0xff] %vm316, %v314
      %318 = vst.msk [vmem:[#allocation2 + $0x8] sm:$0xff] %vm316, %v315
      // Predicated region
      $region37: #{transformer_forward.8} parent=31 // pred_check
        %p319 = pneg %p260
      $region38: #{transformer_forward.8} parent=31 // pred_check_branch
        %321 = sbr.rel (%p319) target = $region40
      $region39: #{transformer_forward.8} parent=31 // pred_region
        %v322 = vld [vmem:[#allocation2] sm:$0xff]
        %v323 = vld [vmem:[#allocation2 + $0x8] sm:$0xff]
        %v324 = vld [vmem:[%s249] sm:$0x1]
        %v326 = vperm.slane %v324, 0
        %v328 = vadd.f32 %v322, %v326
        %v329 = vadd.f32 %v323, %v326
        %v330 = vpack.c.bf16 %v328, %v328
        %v331 = vpack.c.bf16 %v329, %v329
        %vm332 = vcmask 257024
        %333 = vst.msk [vmem:[%s257] sm:$0xf] %vm332, %v330
        %334 = vst.msk [vmem:[%s257 + $0x4] sm:$0xf] %vm332, %v331
      $region40: #{transformer_forward.8} parent=31 // pred_fallthru
        _
      %s335 = smul.u32 2, %s19
      %p336 = scmp.lt.s32.totalorder %s335, 3
      %s337 = scalar_select %p336, %s335, 3
      %p338 = scmp.lt.s32.totalorder %s20, 0
      %s339 = scalar_select %p338, %s20, 0
      %s340 = sadd.s32 %s339, %s337
      %s341 = smul.addr %s340, 4
      %s342 = scalar_lea.vmem %s3, %s341
      // Predicated region
      $region41: #{transformer_forward.8} parent=31 // pred_check
        %p343 = pneg %p135
      $region42: #{transformer_forward.8} parent=31 // pred_check_branch
        %345 = sbr.rel (%p343) target = $region44
      $region43: #{transformer_forward.8} parent=31 // pred_region
        %s346 = smul.u32 2, %s19
      $region44: #{transformer_forward.8} parent=31 // pred_fallthru
        _
    $region32: #{transformer_forward.8} parent=5 // pred_fallthru
      _
    %p347 = scmp.le.s32.totalorder 2, %s9
    // Predicated region
    $region45: #{transformer_forward.8} parent=5 // pred_check
      %p348 = pneg %p347
    $region46: #{transformer_forward.8} parent=5 // pred_check_branch
      %350 = sbr.rel (%p348) target = $region48
    $region47: #{transformer_forward.8} parent=5 // pred_region
      %s351 = ssub.s32 %s9, 2
      // Predicated region
      $region49: #{transformer_forward.8} parent=47 // pred_check
        %p352 = pneg %p141
      $region50: #{transformer_forward.8} parent=47 // pred_check_branch
        %354 = sbr.rel (%p352) target = $region52
      $region51: #{transformer_forward.8} parent=47 // pred_region
        %s355 = smul.u32 2, %s22
        %p356 = scmp.lt.s32.totalorder %s355, 3
        %s357 = scalar_select %p356, %s355, 3
        %p358 = scmp.lt.s32.totalorder %s23, 0
        %s359 = scalar_select %p358, %s23, 0
        %s360 = sadd.s32 %s359, %s357
        %s361 = smul.addr %s360, 4
        %s362 = scalar_lea.vmem %s3, %s361
      $region52: #{transformer_forward.8} parent=47 // pred_fallthru
        _
    $region48: #{transformer_forward.8} parent=5 // pred_fallthru
      _
  $region6: #{transformer_forward.8} parent=0 // loop_footer
    %s13 = sadd.s32 1, %s9
  $region7: #{transformer_forward.8} parent=0 // loop_footer_branch
    %8 = sbr.rel target = $region3
  $region8: #{transformer_forward.8} parent=0 // loop_exit
    _

// kernel: transformer_forward.9
$region0: #{transformer_forward.9}
  #allocation0 [shape = 'u32[]', space=smem, size = 0x4, offset = 0x4, fixed_abs, tag = 'smem constant byte address 0x4 - core index']
  #allocation1 [shape = 'u32[72,128]{1,0:T(1,128)}', space=vmem, size = 0x9000, scoped, tag = 'internal scratch']
  %s0 = inlined_call_operand.vmem [shape: bf16[2,8,32], index: 0, kind: input, shape index: {}]
  %s1 = inlined_call_operand.vmem [shape: f32[2,1,8], index: 1, kind: input, shape index: {}]
  %s2 = inlined_call_operand.vmem [shape: bf16[96,32], index: 2, kind: input, shape index: {}]
  %s3 = inlined_call_operand.vmem [shape: f32[1,96], index: 3, kind: input, shape index: {}]
  %s4 = inlined_call_operand.vmem [shape: bf16[32,32], index: 4, kind: input, shape index: {}]
  %s5 = inlined_call_operand.vmem [shape: f32[1,32], index: 5, kind: input, shape index: {}]
  %s6 = inlined_call_operand.vmem [shape: f32[1,32], index: 6, kind: input, shape index: {}]
  %s7 = inlined_call_operand.vmem [shape: f32[1,32], index: 7, kind: input, shape index: {}]
  %s8 = inlined_call_operand.vmem [shape: bf16[2,8,32], index: 8, kind: output, shape index: {}]
  %s9 = sld [smem:[#allocation0]]
  $region65: #{transformer_forward.9} parent=0
    _
  %s11 = ssub.s32 1, %s9
  %s12 = scalar_select 0, %s11, %s9
  loop: start=0, step=1, limit=4
  $region2: #{transformer_forward.9} parent=0 // loop_pre_header
    _
  $region3: #{transformer_forward.9} parent=0 // loop_header
    %s14 = sphi 0, %s18
    %p15 = scmp.ge.s32.totalorder %s14, 4
    %s24 = sphi 0, %s26
    %s27 = sphi 0, %s24
    %s28 = sphi 0, %s27
    %s44 = sphi 0, %s28
    %s50 = sphi 0, %s52
    %s53 = sphi 0, %s50
    %s54 = sphi 0, %s53
    %s70 = sphi 0, %s54
    %s74 = sphi 0, %s74
    %s76 = sphi 0, %s74
    %s77 = sphi 0, %s76
    %s91 = sphi 0, %s77
    %s95 = sphi 0, %s95
    %s97 = sphi 0, %s95
    %s98 = sphi 0, %s97
    %s112 = sphi 0, %s98
    %s116 = sphi 0, %s116
    %s118 = sphi 0, %s116
    %s119 = sphi 0, %s118
    %s133 = sphi 0, %s119
    %s137 = sphi 0, %s137
    %s139 = sphi 0, %s137
    %s140 = sphi 0, %s139
    %s154 = sphi 0, %s140
    %s158 = sphi 0, %s158
    %s160 = sphi 0, %s158
    %s161 = sphi 0, %s160
    %s175 = sphi 0, %s161
    %s179 = sphi 0, %s179
    %s181 = sphi 0, %s179
    %s182 = sphi 0, %s181
    %s196 = sphi 0, %s182
    %s202 = sphi 0, %s204
    %s205 = sphi 0, %s202
    %s206 = sphi 0, %s205
    %s222 = sphi 0, %s206
  $region4: #{transformer_forward.9} parent=0 // loop_header_branch
    %17 = sbr.rel (%p15) target = $region8
  $region5: #{transformer_forward.9} parent=0 // loop_body
    %s19 = ssub.s32 %s14, 1
    %s20 = ssub.s32 %s14, 2
    %s21 = sadd.s32 %s14, 1
    %s22 = ssub.s32 %s14, %s21
    %p23 = scmp.eq.s32.totalorder %s22, 0
    %s25 = sadd.s32 %s24, 1
    %s26 = scalar_select %p23, %s24, %s25
    %p29 = pneg %p23
    %p30 = scmp.eq.s32.totalorder %s14, 1
    %p31 = por %p29, %p30
    %p32 = scmp.ne.s32.totalorder %s24, %s27
    %p33 = scmp.eq.s32.totalorder %s14, 0
    %p34 = por %p32, %p33
    %p35 = scmp.ne.s32.totalorder %s24, %s27
    %p36 = scmp.eq.s32.totalorder %s19, 1
    %p37 = por %p35, %p36
    %p38 = scmp.ne.s32.totalorder %s27, %s28
    %p39 = scmp.eq.s32.totalorder %s19, 0
    %p40 = por %p38, %p39
    %p41 = scmp.ne.s32.totalorder %s27, %s28
    %p42 = scmp.eq.s32.totalorder %s20, 1
    %p43 = por %p41, %p42
    %p45 = scmp.ne.s32.totalorder %s28, %s44
    %p46 = scmp.eq.s32.totalorder %s20, 0
    %p47 = por %p45, %p46
    %s48 = ssub.s32 %s14, %s21
    %p49 = scmp.eq.s32.totalorder %s48, 0
    %s51 = sadd.s32 %s50, 1
    %s52 = scalar_select %p49, %s50, %s51
    %p55 = pneg %p49
    %p56 = scmp.eq.s32.totalorder %s14, 1
    %p57 = por %p55, %p56
    %p58 = scmp.ne.s32.totalorder %s50, %s53
    %p59 = scmp.eq.s32.totalorder %s14, 0
    %p60 = por %p58, %p59
    %p61 = scmp.ne.s32.totalorder %s50, %s53
    %p62 = scmp.eq.s32.totalorder %s19, 1
    %p63 = por %p61, %p62
    %p64 = scmp.ne.s32.totalorder %s53, %s54
    %p65 = scmp.eq.s32.totalorder %s19, 0
    %p66 = por %p64, %p65
    %p67 = scmp.ne.s32.totalorder %s53, %s54
    %p68 = scmp.eq.s32.totalorder %s20, 1
    %p69 = por %p67, %p68
    %p71 = scmp.ne.s32.totalorder %s54, %s70
    %p72 = scmp.eq.s32.totalorder %s20, 0
    %p73 = por %p71, %p72
    %s75 = sadd.s32 %s74, 1
    %p78 = scmp.eq.s32.totalorder %s14, 1
    %p79 = scmp.ne.s32.totalorder %s74, %s76
    %p80 = scmp.eq.s32.totalorder %s14, 0
    %p81 = por %p79, %p80
    %p82 = scmp.ne.s32.totalorder %s74, %s76
    %p83 = scmp.eq.s32.totalorder %s19, 1
    %p84 = por %p82, %p83
    %p85 = scmp.ne.s32.totalorder %s76, %s77
    %p86 = scmp.eq.s32.totalorder %s19, 0
    %p87 = por %p85, %p86
    %p88 = scmp.ne.s32.totalorder %s76, %s77
    %p89 = scmp.eq.s32.totalorder %s20, 1
    %p90 = por %p88, %p89
    %p92 = scmp.ne.s32.totalorder %s77, %s91
    %p93 = scmp.eq.s32.totalorder %s20, 0
    %p94 = por %p92, %p93
    %s96 = sadd.s32 %s95, 1
    %p99 = scmp.eq.s32.totalorder %s14, 1
    %p100 = scmp.ne.s32.totalorder %s95, %s97
    %p101 = scmp.eq.s32.totalorder %s14, 0
    %p102 = por %p100, %p101
    %p103 = scmp.ne.s32.totalorder %s95, %s97
    %p104 = scmp.eq.s32.totalorder %s19, 1
    %p105 = por %p103, %p104
    %p106 = scmp.ne.s32.totalorder %s97, %s98
    %p107 = scmp.eq.s32.totalorder %s19, 0
    %p108 = por %p106, %p107
    %p109 = scmp.ne.s32.totalorder %s97, %s98
    %p110 = scmp.eq.s32.totalorder %s20, 1
    %p111 = por %p109, %p110
    %p113 = scmp.ne.s32.totalorder %s98, %s112
    %p114 = scmp.eq.s32.totalorder %s20, 0
    %p115 = por %p113, %p114
    %s117 = sadd.s32 %s116, 1
    %p120 = scmp.eq.s32.totalorder %s14, 1
    %p121 = scmp.ne.s32.totalorder %s116, %s118
    %p122 = scmp.eq.s32.totalorder %s14, 0
    %p123 = por %p121, %p122
    %p124 = scmp.ne.s32.totalorder %s116, %s118
    %p125 = scmp.eq.s32.totalorder %s19, 1
    %p126 = por %p124, %p125
    %p127 = scmp.ne.s32.totalorder %s118, %s119
    %p128 = scmp.eq.s32.totalorder %s19, 0
    %p129 = por %p127, %p128
    %p130 = scmp.ne.s32.totalorder %s118, %s119
    %p131 = scmp.eq.s32.totalorder %s20, 1
    %p132 = por %p130, %p131
    %p134 = scmp.ne.s32.totalorder %s119, %s133
    %p135 = scmp.eq.s32.totalorder %s20, 0
    %p136 = por %p134, %p135
    %s138 = sadd.s32 %s137, 1
    %p141 = scmp.eq.s32.totalorder %s14, 1
    %p142 = scmp.ne.s32.totalorder %s137, %s139
    %p143 = scmp.eq.s32.totalorder %s14, 0
    %p144 = por %p142, %p143
    %p145 = scmp.ne.s32.totalorder %s137, %s139
    %p146 = scmp.eq.s32.totalorder %s19, 1
    %p147 = por %p145, %p146
    %p148 = scmp.ne.s32.totalorder %s139, %s140
    %p149 = scmp.eq.s32.totalorder %s19, 0
    %p150 = por %p148, %p149
    %p151 = scmp.ne.s32.totalorder %s139, %s140
    %p152 = scmp.eq.s32.totalorder %s20, 1
    %p153 = por %p151, %p152
    %p155 = scmp.ne.s32.totalorder %s140, %s154
    %p156 = scmp.eq.s32.totalorder %s20, 0
    %p157 = por %p155, %p156
    %s159 = sadd.s32 %s158, 1
    %p162 = scmp.eq.s32.totalorder %s14, 1
    %p163 = scmp.ne.s32.totalorder %s158, %s160
    %p164 = scmp.eq.s32.totalorder %s14, 0
    %p165 = por %p163, %p164
    %p166 = scmp.ne.s32.totalorder %s158, %s160
    %p167 = scmp.eq.s32.totalorder %s19, 1
    %p168 = por %p166, %p167
    %p169 = scmp.ne.s32.totalorder %s160, %s161
    %p170 = scmp.eq.s32.totalorder %s19, 0
    %p171 = por %p169, %p170
    %p172 = scmp.ne.s32.totalorder %s160, %s161
    %p173 = scmp.eq.s32.totalorder %s20, 1
    %p174 = por %p172, %p173
    %p176 = scmp.ne.s32.totalorder %s161, %s175
    %p177 = scmp.eq.s32.totalorder %s20, 0
    %p178 = por %p176, %p177
    %s180 = sadd.s32 %s179, 1
    %p183 = scmp.eq.s32.totalorder %s14, 1
    %p184 = scmp.ne.s32.totalorder %s179, %s181
    %p185 = scmp.eq.s32.totalorder %s14, 0
    %p186 = por %p184, %p185
    %p187 = scmp.ne.s32.totalorder %s179, %s181
    %p188 = scmp.eq.s32.totalorder %s19, 1
    %p189 = por %p187, %p188
    %p190 = scmp.ne.s32.totalorder %s181, %s182
    %p191 = scmp.eq.s32.totalorder %s19, 0
    %p192 = por %p190, %p191
    %p193 = scmp.ne.s32.totalorder %s181, %s182
    %p194 = scmp.eq.s32.totalorder %s20, 1
    %p195 = por %p193, %p194
    %p197 = scmp.ne.s32.totalorder %s182, %s196
    %p198 = scmp.eq.s32.totalorder %s20, 0
    %p199 = por %p197, %p198
    %s200 = ssub.s32 %s14, %s21
    %p201 = scmp.eq.s32.totalorder %s200, 0
    %s203 = sadd.s32 %s202, 1
    %s204 = scalar_select %p201, %s202, %s203
    %p207 = pneg %p201
    %p208 = scmp.eq.s32.totalorder %s14, 1
    %p209 = por %p207, %p208
    %p210 = scmp.ne.s32.totalorder %s202, %s205
    %p211 = scmp.eq.s32.totalorder %s14, 0
    %p212 = por %p210, %p211
    %p213 = scmp.ne.s32.totalorder %s202, %s205
    %p214 = scmp.eq.s32.totalorder %s19, 1
    %p215 = por %p213, %p214
    %p216 = scmp.ne.s32.totalorder %s205, %s206
    %p217 = scmp.eq.s32.totalorder %s19, 0
    %p218 = por %p216, %p217
    %p219 = scmp.ne.s32.totalorder %s205, %s206
    %p220 = scmp.eq.s32.totalorder %s20, 1
    %p221 = por %p219, %p220
    %p223 = scmp.ne.s32.totalorder %s206, %s222
    %p224 = scmp.eq.s32.totalorder %s20, 0
    %p225 = por %p223, %p224
    %p226 = scmp.le.s32.totalorder 1, %s14
    %p227 = scmp.lt.s32.totalorder %s14, 3
    %p228 = pnand %p226, %p227
    %p229 = pneg %p228
    // Predicated region
    $region9: #{transformer_forward.9} parent=5 // pred_check
      _
    $region10: #{transformer_forward.9} parent=5 // pred_check_branch
      %231 = sbr.rel (%p228) target = $region12
    $region11: #{transformer_forward.9} parent=5 // pred_region
      %s232 = ssub.s32 %s14, 1
      // Predicated region
      $region13: #{transformer_forward.9} parent=11 // pred_check
        %p233 = pneg %p87
      $region14: #{transformer_forward.9} parent=11 // pred_check_branch
        %235 = sbr.rel (%p233) target = $region16
      $region15: #{transformer_forward.9} parent=11 // pred_region
        _
      $region16: #{transformer_forward.9} parent=11 // pred_fallthru
        _
      // Predicated region
      $region17: #{transformer_forward.9} parent=11 // pred_check
        %p236 = pneg %p108
      $region18: #{transformer_forward.9} parent=11 // pred_check_branch
        %238 = sbr.rel (%p236) target = $region20
      $region19: #{transformer_forward.9} parent=11 // pred_region
        _
      $region20: #{transformer_forward.9} parent=11 // pred_fallthru
        _
      // Predicated region
      $region21: #{transformer_forward.9} parent=11 // pred_check
        %p239 = pneg %p129
      $region22: #{transformer_forward.9} parent=11 // pred_check_branch
        %241 = sbr.rel (%p239) target = $region24
      $region23: #{transformer_forward.9} parent=11 // pred_region
        _
      $region24: #{transformer_forward.9} parent=11 // pred_fallthru
        _
      // Predicated region
      $region25: #{transformer_forward.9} parent=11 // pred_check
        %p242 = pneg %p150
      $region26: #{transformer_forward.9} parent=11 // pred_check_branch
        %244 = sbr.rel (%p242) target = $region28
      $region27: #{transformer_forward.9} parent=11 // pred_region
        _
      $region28: #{transformer_forward.9} parent=11 // pred_fallthru
        _
      // Predicated region
      $region29: #{transformer_forward.9} parent=11 // pred_check
        %p245 = pneg %p171
      $region30: #{transformer_forward.9} parent=11 // pred_check_branch
        %247 = sbr.rel (%p245) target = $region32
      $region31: #{transformer_forward.9} parent=11 // pred_region
        _
      $region32: #{transformer_forward.9} parent=11 // pred_fallthru
        _
      // Predicated region
      $region33: #{transformer_forward.9} parent=11 // pred_check
        %p248 = pneg %p192
      $region34: #{transformer_forward.9} parent=11 // pred_check_branch
        %250 = sbr.rel (%p248) target = $region36
      $region35: #{transformer_forward.9} parent=11 // pred_region
        _
      $region36: #{transformer_forward.9} parent=11 // pred_fallthru
        _
    $region12: #{transformer_forward.9} parent=5 // pred_fallthru
      _
    %p251 = scmp.lt.s32.totalorder %s14, 2
    // Predicated region
    $region37: #{transformer_forward.9} parent=5 // pred_check
      %p252 = pneg %p251
    $region38: #{transformer_forward.9} parent=5 // pred_check_branch
      %254 = sbr.rel (%p252) target = $region40
    $region39: #{transformer_forward.9} parent=5 // pred_region
      // Predicated region
      $region41: #{transformer_forward.9} parent=39 // pred_check
        %p255 = pneg %p34
      $region42: #{transformer_forward.9} parent=39 // pred_check_branch
        %257 = sbr.rel (%p255) target = $region44
      $region43: #{transformer_forward.9} parent=39 // pred_region
        %p258 = scmp.lt.s32.totalorder %s14, 1
        %s259 = scalar_select %p258, %s14, 1
        %s260 = smul.addr %s259, 4
        %s261 = scalar_lea.vmem %s0, %s260
      $region44: #{transformer_forward.9} parent=39 // pred_fallthru
        _
      // Predicated region
      $region45: #{transformer_forward.9} parent=39 // pred_check
        %p262 = pneg %p60
      $region46: #{transformer_forward.9} parent=39 // pred_check_branch
        %264 = sbr.rel (%p262) target = $region48
      $region47: #{transformer_forward.9} parent=39 // pred_region
        %p265 = scmp.lt.s32.totalorder %s14, 1
        %s266 = scalar_select %p265, %s14, 1
        %s267 = scalar_lea.vmem %s1, %s266
      $region48: #{transformer_forward.9} parent=39 // pred_fallthru
        _
    $region40: #{transformer_forward.9} parent=5 // pred_fallthru
      _
    %p268 = scmp.le.s32.totalorder 1, %s14
    %p269 = scmp.lt.s32.totalorder %s14, 3
    %p270 = pnand %p268, %p269
    %p271 = pneg %p270
    // Predicated region
    $region49: #{transformer_forward.9} parent=5 // pred_check
      _
    $region50: #{transformer_forward.9} parent=5 // pred_check_branch
      %273 = sbr.rel (%p270) target = $region52
    $region51: #{transformer_forward.9} parent=5 // pred_region
      %s274 = ssub.s32 %s14, 1
      %p275 = scmp.lt.s32.totalorder %s19, 1
      %s276 = scalar_select %p275, %s19, 1
      %s277 = smul.addr %s276, 4
      %s278 = scalar_lea.vmem %s0, %s277
      %p279 = pneg %p40
      %p280 = pneg %p37
      %p281 = scmp.lt.s32.totalorder %s19, 1
      %s282 = scalar_select %p281, %s19, 1
      %s283 = scalar_lea.vmem %s1, %s282
      %p284 = pneg %p66
      %p285 = pneg %p63
      %p286 = pneg %p87
      %p287 = pneg %p84
      %p288 = pneg %p108
      %p289 = pneg %p105
      %p290 = pneg %p129
      %p291 = pneg %p126
      %p292 = pneg %p150
      %p293 = pneg %p147
      %p294 = pneg %p171
      %p295 = pneg %p168
      %p296 = pneg %p192
      %p297 = pneg %p189
      %p298 = pneg %p218
      %p299 = pneg %p215
      %p300 = scmp.lt.s32.totalorder %s19, 1
      %s301 = scalar_select %p300, %s19, 1
      %s302 = smul.addr %s301, 4
      %s303 = scalar_lea.vmem %s8, %s302
      %p304 = scmp.lt.s32.totalorder %s19, 1
      %s305 = scalar_select %p304, %s19, 1
      %s306 = smul.addr %s305, 4
      %s307 = scalar_lea.vmem %s0, %s306
      %p308 = scmp.lt.s32.totalorder %s19, 1
      %s309 = scalar_select %p308, %s19, 1
      %s310 = scalar_lea.vmem %s1, %s309
      %p311 = scmp.lt.s32.totalorder %s19, 1
      %s312 = scalar_select %p311, %s19, 1
      %s313 = smul.addr %s312, 4
      %s314 = scalar_lea.vmem %s8, %s313
      %v316 = vld [vmem:[%s307] sm:$0xf]
      %v317 = vld [vmem:[%s2] sm:$0xf]
      %v318 = vld [vmem:[%s2 + $0x4] sm:$0xf]
      %v319 = vld [vmem:[%s2 + $0x8] sm:$0xf]
      %v320 = vld [vmem:[%s2 + $0xc] sm:$0xf]
      %v321 = vld [vmem:[%s2 + $0x10] sm:$0xf]
      %v322 = vld [vmem:[%s2 + $0x14] sm:$0xf]
      %v323 = vld [vmem:[%s2 + $0x18] sm:$0xf]
      %v324 = vld [vmem:[%s2 + $0x1c] sm:$0xf]
      %v325 = vld [vmem:[%s2 + $0x20] sm:$0xf]
      %v326 = vld [vmem:[%s2 + $0x24] sm:$0xf]
      %v327 = vld [vmem:[%s2 + $0x28] sm:$0xf]
      %v328 = vld [vmem:[%s2 + $0x2c] sm:$0xf]
      %v329 = vld [vmem:[%s3] sm:$0x1]
      %v331 = vperm.slane %v329, 0
      %v345 = vunpack.c.l.b16 %v317
      %v346 = vunpack.c.l.b16 %v318
      %v347 = vunpack.c.l.b16 %v319
      %v348 = vunpack.c.l.b16 %v320
      %v349 = vunpack.c.l.b16 %v321
      %v350 = vunpack.c.l.b16 %v322
      %v351 = vunpack.c.l.b16 %v323
      %v352 = vunpack.c.l.b16 %v324
      %v353 = vunpack.c.l.b16 %v325
      %v354 = vunpack.c.l.b16 %v326
      %v355 = vunpack.c.l.b16 %v327
      %v356 = vunpack.c.l.b16 %v328
      %v357 = vpack.c.b16 %v346, %v345
      %v358 = vpack.c.b16 %v348, %v347
      %v359 = vpack.c.b16 %v350, %v349
      %v360 = vpack.c.b16 %v352, %v351
      %v361 = vpack.c.b16 %v354, %v353
      %v362 = vpack.c.b16 %v356, %v355
      %vm363 = vcmask 261120
      %v365 = vsel %vm363, %v316, 0
      %v368 = vsel %vm363, %v357, 0
      %v371 = vsel %vm363, %v358, 0
      %v374 = vsel %vm363, %v359, 0
      %v377 = vsel %vm363, %v360, 0
      %v380 = vsel %vm363, %v361, 0
      %v383 = vsel %vm363, %v362, 0
      %385 = vmatpush.bf16.xpose.msra.mxu0 0
      %386 = vmatpush.bf16.xpose.msra.mxu0 0
      %387 = vmatpush.bf16.xpose.msra.mxu0 %v383
      %388 = vmatpush.bf16.xpose.msra.mxu0 %v380
      %389 = vmatpush.bf16.xpose.msra.mxu0 %v377
      %390 = vmatpush.bf16.xpose.msra.mxu0 %v374
      %391 = vmatpush.bf16.xpose.msra.mxu0 %v371
      %392 = vmatpush.bf16.xpose.msra.mxu0 %v368
      %393 = vmatmul.bf16.gmra.mxu0 %v365
      %v394 = vpop.f32.mrf.mxu0
      %v395 = vadd.f32 %v331, %v394
      %v396 = vpop.f32.mrf.mxu0
      %397 = vdwg.mxu0
      %v398 = vld [vmem:[%s4] sm:$0xf]
      %v399 = vld [vmem:[%s4 + $0x4] sm:$0xf]
      %v400 = vld [vmem:[%s4 + $0x8] sm:$0xf]
      %v401 = vld [vmem:[%s4 + $0xc] sm:$0xf]
      %v402 = vld [vmem:[%s310] sm:$0x1]
      %v403 = vlaneseq
      %v404 = vshrl.u32 %v403, 7
      %v405 = vlaneseq
      %v406 = vand.u32 %v405, 127
      %vm407 = vcmp.gt.s32.totalorder %v406, %v404
      %v408 = vpack.c.bf16 %v395, %v395
      %410 = vrot.lane.b32.xlu0 %v408, 96
      %v411 = vpop.permute.xlu0 %410
      %vm412 = vcmask 64512
      %v414 = vsel %vm412, %v408, 0
      %v417 = vsel %vm412, %v411, 0
      %419 = vmatpush.bf16.xpose.msra.mxu0 0
      %420 = vmatpush.bf16.xpose.msra.mxu0 0
      %421 = vmatpush.bf16.xpose.msra.mxu0 0
      %422 = vmatpush.bf16.xpose.msra.mxu0 0
      %423 = vmatpush.bf16.xpose.msra.mxu0 0
      %424 = vmatpush.bf16.xpose.msra.mxu0 0
      %425 = vmatpush.bf16.xpose.msra.mxu0 0
      %426 = vmatpush.bf16.xpose.msra.mxu0 %v417
      %427 = vmatmul.bf16.gmra.mxu0 %v414
      %v428 = vpop.f32.mrf.mxu0
      %v429 = vadd.f32 0.0, %v428
      %v430 = vpop.f32.mrf.mxu0
      %431 = vdwg.mxu0
      %v432 = vmul.f32 %v429, 0.35355338
      %v434 = vperm.slane %v402, 0
      %v436 = vadd.f32 %v432, %v434
      %v437 = vsel %vm407, -1e+30, %v436
      %v438 = vsel %vm412, %v437, -inf
      %439 = vmax.xlane.f32.xlu0 %v438
      %v440 = vpop.xlane.xlu0 %439
      %v441 = vsub.f32 %v437, %v440
      %v442 = vmul.f32 %v441, 1.442695
      %v443 = vpow.pop %v442
      %v444 = vsel %vm412, %v443, 0.0
      %445 = vadd.xlane.f32.xlu0 %v444
      %v446 = vpop.xlane.xlu0 %445
      %v447 = vrcp.pop %v446
      %v448 = vmul.f32 %v443, %v447
      %v449 = vpack.c.bf16 %v448, %v448
      %450 = vrot.lane.b32.xlu0 %v408, 64
      %v451 = vpop.permute.xlu0 %450
      %v453 = vsel %vm412, %v449, 0
      %vm455 = vcmask 1043456
      %v457 = vsel %vm455, %v451, 0
      %459 = vmatpush.bf16.msra.mxu0 0
      %460 = vmatpush.bf16.msra.mxu0 0
      %461 = vmatpush.bf16.msra.mxu0 0
      %462 = vmatpush.bf16.msra.mxu0 0
      %463 = vmatpush.bf16.msra.mxu0 0
      %464 = vmatpush.bf16.msra.mxu0 0
      %465 = vmatpush.bf16.msra.mxu0 0
      %466 = vmatpush.bf16.msra.mxu0 %v457
      %467 = vmatmul.bf16.gmra.mxu0 %v453
      %v468 = vpop.f32.mrf.mxu0
      %v469 = vadd.f32 0.0, %v468
      %v470 = vpop.f32.mrf.mxu0
      %471 = vdwg.mxu0
      %v472 = vpack.c.bf16 %v469, %v469
      %473 = vrot.lane.b32.xlu0 %v408, 120
      %v474 = vpop.permute.xlu0 %473
      %475 = vrot.lane.b32.xlu0 %v408, 88
      %v476 = vpop.permute.xlu0 %475
      %v478 = vsel %vm412, %v474, 0
      %v481 = vsel %vm412, %v476, 0
      %483 = vmatpush.bf16.xpose.msra.mxu0 0
      %484 = vmatpush.bf16.xpose.msra.mxu0 0
      %485 = vmatpush.bf16.xpose.msra.mxu0 0
      %486 = vmatpush.bf16.xpose.msra.mxu0 0
      %487 = vmatpush.bf16.xpose.msra.mxu0 0
      %488 = vmatpush.bf16.xpose.msra.mxu0 0
      %489 = vmatpush.bf16.xpose.msra.mxu0 0
      %490 = vmatpush.bf16.xpose.msra.mxu0 %v481
      %491 = vmatmul.bf16.gmra.mxu0 %v478
      %v492 = vpop.f32.mrf.mxu0
      %v493 = vadd.f32 0.0, %v492
      %v494 = vpop.f32.mrf.mxu0
      %495 = vdwg.mxu0
      %v496 = vmul.f32 %v493, 0.35355338
      %v497 = vadd.f32 %v496, %v434
      %v498 = vsel %vm407, -1e+30, %v497
      %v499 = vsel %vm412, %v498, -inf
      %500 = vmax.xlane.f32.xlu0 %v499
      %v501 = vpop.xlane.xlu0 %500
      %v502 = vsub.f32 %v498, %v501
      %v503 = vmul.f32 %v502, 1.442695
      %v504 = vpow.pop %v503
      %v505 = vsel %vm412, %v504, 0.0
      %506 = vadd.xlane.f32.xlu0 %v505
      %v507 = vpop.xlane.xlu0 %506
      %v508 = vrcp.pop %v507
      %v509 = vmul.f32 %v504, %v508
      %v510 = vpack.c.bf16 %v509, %v509
      %511 = vrot.lane.b32.xlu0 %v408, 56
      %v512 = vpop.permute.xlu0 %511
      %v514 = vsel %vm412, %v510, 0
      %v517 = vsel %vm455, %v512, 0
      %519 = vmatpush.bf16.msra.mxu0 0
      %520 = vmatpush.bf16.msra.mxu0 0
      %521 = vmatpush.bf16.msra.mxu0 0
      %522 = vmatpush.bf16.msra.mxu0 0
      %523 = vmatpush.bf16.msra.mxu0 0
      %524 = vmatpush.bf16.msra.mxu0 0
      %525 = vmatpush.bf16.msra.mxu0 0
      %526 = vmatpush.bf16.msra.mxu0 %v517
      %527 = vmatmul.bf16.gmra.mxu0 %v514
      %v528 = vpop.f32.mrf.mxu0
      %v529 = vadd.f32 0.0, %v528
      %v530 = vpop.f32.mrf.mxu0
      %531 = vdwg.mxu0
      %v532 = vpack.c.bf16 %v529, %v529
      %v537 = vunpack.c.l.b16 %v398
      %v538 = vunpack.c.l.b16 %v399
      %v539 = vunpack.c.l.b16 %v400
      %v540 = vunpack.c.l.b16 %v401
      %v541 = vpack.c.b16 %v538, %v537
      %v542 = vpack.c.b16 %v540, %v539
      %543 = vrot.lane.b32.xlu0 %v541, 120
      %v544 = vpop.permute.xlu0 %543
      %545 = vrot.lane.b32.xlu0 %v542, 120
      %v546 = vpop.permute.xlu0 %545
      %v548 = vsel %vm412, %v532, 0
      %v551 = vsel %vm412, %v544, 0
      %v554 = vsel %vm412, %v546, 0
      %556 = vmatpush.bf16.xpose.msra.mxu0 0
      %557 = vmatpush.bf16.xpose.msra.mxu0 0
      %558 = vmatpush.bf16.xpose.msra.mxu0 0
      %559 = vmatpush.bf16.xpose.msra.mxu0 0
      %560 = vmatpush.bf16.xpose.msra.mxu0 0
      %561 = vmatpush.bf16.xpose.msra.mxu0 0
      %562 = vmatpush.bf16.xpose.msra.mxu0 %v554
      %563 = vmatpush.bf16.xpose.msra.mxu0 %v551
      %564 = vmatmul.bf16.gmra.mxu0 %v548
      %v565 = vpop.f32.mrf.mxu0
      %v566 = vadd.f32 0.0, %v565
      %v567 = vpop.f32.mrf.mxu0
      %568 = vdwg.mxu0
      %v570 = vsel %vm412, %v472, 0
      %v573 = vsel %vm412, %v541, 0
      %v576 = vsel %vm412, %v542, 0
      %578 = vmatpush.bf16.xpose.msra.mxu0 0
      %579 = vmatpush.bf16.xpose.msra.mxu0 0
      %580 = vmatpush.bf16.xpose.msra.mxu0 0
      %581 = vmatpush.bf16.xpose.msra.mxu0 0
      %582 = vmatpush.bf16.xpose.msra.mxu0 0
      %583 = vmatpush.bf16.xpose.msra.mxu0 0
      %584 = vmatpush.bf16.xpose.msra.mxu0 %v576
      %585 = vmatpush.bf16.xpose.msra.mxu0 %v573
      %586 = vmatmul.bf16.gmra.mxu0 %v570
      %v587 = vpop.f32.mrf.mxu0
      %v588 = vadd.f32 %v566, %v587
      %v589 = vpop.f32.mrf.mxu0
      %590 = vdwg.mxu0
      %591 = vrot.lane.b32.xlu0 %v408, 112
      %v592 = vpop.permute.xlu0 %591
      %593 = vrot.lane.b32.xlu0 %v408, 80
      %v594 = vpop.permute.xlu0 %593
      %v596 = vsel %vm412, %v592, 0
      %v599 = vsel %vm412, %v594, 0
      %601 = vmatpush.bf16.xpose.msra.mxu0 0
      %602 = vmatpush.bf16.xpose.msra.mxu0 0
      %603 = vmatpush.bf16.xpose.msra.mxu0 0
      %604 = vmatpush.bf16.xpose.msra.mxu0 0
      %605 = vmatpush.bf16.xpose.msra.mxu0 0
      %606 = vmatpush.bf16.xpose.msra.mxu0 0
      %607 = vmatpush.bf16.xpose.msra.mxu0 0
      %608 = vmatpush.bf16.xpose.msra.mxu0 %v599
      %609 = vmatmul.bf16.gmra.mxu0 %v596
      %v610 = vpop.f32.mrf.mxu0
      %v611 = vadd.f32 0.0, %v610
      %v612 = vpop.f32.mrf.mxu0
      %613 = vdwg.mxu0
      %v614 = vmul.f32 %v611, 0.35355338
      %v615 = vadd.f32 %v614, %v434
      %v616 = vsel %vm407, -1e+30, %v615
      %v617 = vsel %vm412, %v616, -inf
      %618 = vmax.xlane.f32.xlu0 %v617
      %v619 = vpop.xlane.xlu0 %618
      %v620 = vsub.f32 %v616, %v619
      %v621 = vmul.f32 %v620, 1.442695
      %v622 = vpow.pop %v621
      %v623 = vsel %vm412, %v622, 0.0
      %624 = vadd.xlane.f32.xlu0 %v623
      %v625 = vpop.xlane.xlu0 %624
      %v626 = vrcp.pop %v625
      %v627 = vmul.f32 %v622, %v626
      %v628 = vpack.c.bf16 %v627, %v627
      %629 = vrot.lane.b32.xlu0 %v408, 48
      %v630 = vpop.permute.xlu0 %629
      %v632 = vsel %vm412, %v628, 0
      %v635 = vsel %vm455, %v630, 0
      %637 = vmatpush.bf16.msra.mxu0 0
      %638 = vmatpush.bf16.msra.mxu0 0
      %639 = vmatpush.bf16.msra.mxu0 0
      %640 = vmatpush.bf16.msra.mxu0 0
      %641 = vmatpush.bf16.msra.mxu0 0
      %642 = vmatpush.bf16.msra.mxu0 0
      %643 = vmatpush.bf16.msra.mxu0 0
      %644 = vmatpush.bf16.msra.mxu0 %v635
      %645 = vmatmul.bf16.gmra.mxu0 %v632
      %v646 = vpop.f32.mrf.mxu0
      %v647 = vadd.f32 0.0, %v646
      %v648 = vpop.f32.mrf.mxu0
      %649 = vdwg.mxu0
      %v650 = vpack.c.bf16 %v647, %v647
      %651 = vrot.lane.b32.xlu0 %v541, 112
      %v652 = vpop.permute.xlu0 %651
      %653 = vrot.lane.b32.xlu0 %v542, 112
      %v654 = vpop.permute.xlu0 %653
      %v656 = vsel %vm412, %v650, 0
      %v659 = vsel %vm412, %v652, 0
      %v662 = vsel %vm412, %v654, 0
      %664 = vmatpush.bf16.xpose.msra.mxu0 0
      %665 = vmatpush.bf16.xpose.msra.mxu0 0
      %666 = vmatpush.bf16.xpose.msra.mxu0 0
      %667 = vmatpush.bf16.xpose.msra.mxu0 0
      %668 = vmatpush.bf16.xpose.msra.mxu0 0
      %669 = vmatpush.bf16.xpose.msra.mxu0 0
      %670 = vmatpush.bf16.xpose.msra.mxu0 %v662
      %671 = vmatpush.bf16.xpose.msra.mxu0 %v659
      %672 = vmatmul.bf16.gmra.mxu0 %v656
      %v673 = vpop.f32.mrf.mxu0
      %v674 = vadd.f32 0.0, %v673
      %v675 = vpop.f32.mrf.mxu0
      %676 = vdwg.mxu0
      %v677 = vadd.f32 %v588, %v674
      %678 = vrot.lane.b32.xlu0 %v408, 104
      %v679 = vpop.permute.xlu0 %678
      %680 = vrot.lane.b32.xlu0 %v408, 72
      %v681 = vpop.permute.xlu0 %680
      %v683 = vsel %vm412, %v679, 0
      %v686 = vsel %vm412, %v681, 0
      %688 = vmatpush.bf16.xpose.msra.mxu0 0
      %689 = vmatpush.bf16.xpose.msra.mxu0 0
      %690 = vmatpush.bf16.xpose.msra.mxu0 0
      %691 = vmatpush.bf16.xpose.msra.mxu0 0
      %692 = vmatpush.bf16.xpose.msra.mxu0 0
      %693 = vmatpush.bf16.xpose.msra.mxu0 0
      %694 = vmatpush.bf16.xpose.msra.mxu0 0
      %695 = vmatpush.bf16.xpose.msra.mxu0 %v686
      %696 = vmatmul.bf16.gmra.mxu0 %v683
      %v697 = vpop.f32.mrf.mxu0
      %v698 = vadd.f32 0.0, %v697
      %v699 = vpop.f32.mrf.mxu0
      %700 = vdwg.mxu0
      %v701 = vmul.f32 %v698, 0.35355338
      %v702 = vadd.f32 %v701, %v434
      %v703 = vsel %vm407, -1e+30, %v702
      %v704 = vsel %vm412, %v703, -inf
      %705 = vmax.xlane.f32.xlu0 %v704
      %v706 = vpop.xlane.xlu0 %705
      %v707 = vsub.f32 %v703, %v706
      %v708 = vmul.f32 %v707, 1.442695
      %v709 = vpow.pop %v708
      %v710 = vsel %vm412, %v709, 0.0
      %711 = vadd.xlane.f32.xlu0 %v710
      %v712 = vpop.xlane.xlu0 %711
      %v713 = vrcp.pop %v712
      %v714 = vmul.f32 %v709, %v713
      %v715 = vpack.c.bf16 %v714, %v714
      %716 = vrot.lane.b32.xlu0 %v408, 40
      %v717 = vpop.permute.xlu0 %716
      %v719 = vsel %vm412, %v715, 0
      %v722 = vsel %vm455, %v717, 0
      %724 = vmatpush.bf16.msra.mxu0 0
      %725 = vmatpush.bf16.msra.mxu0 0
      %726 = vmatpush.bf16.msra.mxu0 0
      %727 = vmatpush.bf16.msra.mxu0 0
      %728 = vmatpush.bf16.msra.mxu0 0
      %729 = vmatpush.bf16.msra.mxu0 0
      %730 = vmatpush.bf16.msra.mxu0 0
      %731 = vmatpush.bf16.msra.mxu0 %v722
      %732 = vmatmul.bf16.gmra.mxu0 %v719
      %v733 = vpop.f32.mrf.mxu0
      %v734 = vadd.f32 0.0, %v733
      %v735 = vpop.f32.mrf.mxu0
      %736 = vdwg.mxu0
      %v737 = vpack.c.bf16 %v734, %v734
      %738 = vrot.lane.b32.xlu0 %v541, 104
      %v739 = vpop.permute.xlu0 %738
      %740 = vrot.lane.b32.xlu0 %v542, 104
      %v741 = vpop.permute.xlu0 %740
      %v743 = vsel %vm412, %v737, 0
      %v746 = vsel %vm412, %v739, 0
      %v749 = vsel %vm412, %v741, 0
      %751 = vmatpush.bf16.xpose.msra.mxu0 0
      %752 = vmatpush.bf16.xpose.msra.mxu0 0
      %753 = vmatpush.bf16.xpose.msra.mxu0 0
      %754 = vmatpush.bf16.xpose.msra.mxu0 0
      %755 = vmatpush.bf16.xpose.msra.mxu0 0
      %756 = vmatpush.bf16.xpose.msra.mxu0 0
      %757 = vmatpush.bf16.xpose.msra.mxu0 %v749
      %758 = vmatpush.bf16.xpose.msra.mxu0 %v746
      %759 = vmatmul.bf16.gmra.mxu0 %v743
      %v760 = vpop.f32.mrf.mxu0
      %v761 = vadd.f32 0.0, %v760
      %v762 = vpop.f32.mrf.mxu0
      %763 = vdwg.mxu0
      %v764 = vadd.f32 %v677, %v761
      %v765 = vld [vmem:[%s5] sm:$0x1]
      %v767 = vperm.slane %v765, 0
      %v769 = vadd.f32 %v764, %v767
      %v770 = vunpack.c.l.bf16 %v316
      %v771 = vadd.f32 %v770, %v769
      %v772 = vld [vmem:[%s6] sm:$0x1]
      %v773 = vld [vmem:[%s7] sm:$0x1]
      %v774 = vsel %vm363, %v771, 0.0
      %775 = vadd.xlane.f32.xlu0 %v774
      %v776 = vpop.xlane.xlu0 %775
      %v777 = vrcp.pop 32.0
      %v778 = vmul.f32 32.0, %v777
      %v779 = vsub.f32 1.0, %v778
      %v780 = vmul.f32 %v777, %v779
      %v781 = vadd.f32 %v777, %v780
      %vm782 = vweird.f32 %v777
      %v783 = vsel %vm782, %v777, %v781
      %v784 = vmul.f32 %v776, %v783
      %v785 = vsub.f32 %v771, %v784
      %v786 = vmul.f32 %v785, %v785
      %v787 = vsel %vm363, %v786, 0.0
      %788 = vadd.xlane.f32.xlu0 %v787
      %v789 = vpop.xlane.xlu0 %788
      %v790 = vmul.f32 %v789, %v783
      %v791 = vadd.f32 %v790, 1e-05
      %v792 = vrsqrt.pop %v791
      %v793 = vmul.f32 %v792, %v791
      %v794 = vmul.f32 %v793, %v792
      %v795 = vmul.f32 0.5, %v794
      %v796 = vsub.f32 1.5, %v795
      %v797 = vmul.f32 %v792, %v796
      %vm798 = vweird.f32 %v791
      %vm799 = vweird.f32 %v792
      %vm800 = vmor %vm798, %vm799
      %v801 = vsel %vm800, %v792, %v797
      %v802 = vmul.f32 %v785, %v801
      %v804 = vperm.slane %v772, 0
      %v806 = vmul.f32 %v802, %v804
      %v808 = vperm.slane %v773, 0
      %v810 = vadd.f32 %v806, %v808
      %v811 = vpack.c.bf16 %v810, %v810
      %vm812 = vcmask 257024
      %813 = vst.msk [vmem:[%s314] sm:$0xf] %vm812, %v811
      %p814 = scmp.lt.s32.totalorder %s19, 1
      %s815 = scalar_select %p814, %s19, 1
      %s816 = smul.addr %s815, 4
      %s817 = scalar_lea.vmem %s8, %s816
      // Predicated region
      $region53: #{transformer_forward.9} parent=51 // pred_check
        %p818 = pneg %p215
      $region54: #{transformer_forward.9} parent=51 // pred_check_branch
        %820 = sbr.rel (%p818) target = $region56
      $region55: #{transformer_forward.9} parent=51 // pred_region
        _
      $region56: #{transformer_forward.9} parent=51 // pred_fallthru
        _
    $region52: #{transformer_forward.9} parent=5 // pred_fallthru
      _
    %p821 = scmp.le.s32.totalorder 2, %s14
    // Predicated region
    $region57: #{transformer_forward.9} parent=5 // pred_check
      %p822 = pneg %p821
    $region58: #{transformer_forward.9} parent=5 // pred_check_branch
      %824 = sbr.rel (%p822) target = $region60
    $region59: #{transformer_forward.9} parent=5 // pred_region
      %s825 = ssub.s32 %s14, 2
      // Predicated region
      $region61: #{transformer_forward.9} parent=59 // pred_check
        %p826 = pneg %p221
      $region62: #{transformer_forward.9} parent=59 // pred_check_branch
        %828 = sbr.rel (%p826) target = $region64
      $region63: #{transformer_forward.9} parent=59 // pred_region
        %p829 = scmp.lt.s32.totalorder %s20, 1
        %s830 = scalar_select %p829, %s20, 1
        %s831 = smul.addr %s830, 4
        %s832 = scalar_lea.vmem %s8, %s831
      $region64: #{transformer_forward.9} parent=59 // pred_fallthru
        _
    $region60: #{transformer_forward.9} parent=5 // pred_fallthru
      _
  $region6: #{transformer_forward.9} parent=0 // loop_footer
    %s18 = sadd.s32 1, %s14
  $region7: #{transformer_forward.9} parent=0 // loop_footer_branch
    %13 = sbr.rel target = $region3
  $region8: #{transformer_forward.9} parent=0 // loop_exit
    _

// kernel: transformer_forward.10
$region0: #{transformer_forward.10}
  #allocation0 [shape = 'u32[]', space=smem, size = 0x4, offset = 0x4, fixed_abs, tag = 'smem constant byte address 0x4 - core index']
  #allocation1 [shape = 'u32[72,128]{1,0:T(1,128)}', space=vmem, size = 0x9000, scoped, tag = 'internal scratch']
  %s0 = inlined_call_operand.vmem [shape: bf16[2,8,32], index: 0, kind: input, shape index: {}]
  %s1 = inlined_call_operand.vmem [shape: bf16[2,16,32], index: 1, kind: input, shape index: {}]
  %s2 = inlined_call_operand.vmem [shape: bf16[32,32], index: 2, kind: input, shape index: {}]
  %s3 = inlined_call_operand.vmem [shape: f32[1,32], index: 3, kind: input, shape index: {}]
  %s4 = inlined_call_operand.vmem [shape: bf16[64,32], index: 4, kind: input, shape index: {}]
  %s5 = inlined_call_operand.vmem [shape: f32[1,64], index: 5, kind: input, shape index: {}]
  %s6 = inlined_call_operand.vmem [shape: bf16[32,32], index: 6, kind: input, shape index: {}]
  %s7 = inlined_call_operand.vmem [shape: f32[1,32], index: 7, kind: input, shape index: {}]
  %s8 = inlined_call_operand.vmem [shape: f32[1,32], index: 8, kind: input, shape index: {}]
  %s9 = inlined_call_operand.vmem [shape: f32[1,32], index: 9, kind: input, shape index: {}]
  %s10 = inlined_call_operand.vmem [shape: bf16[2,8,32], index: 10, kind: output, shape index: {}]
  %s11 = sld [smem:[#allocation0]]
  $region73: #{transformer_forward.10} parent=0
    _
  %s13 = ssub.s32 1, %s11
  %s14 = scalar_select 0, %s13, %s11
  loop: start=0, step=1, limit=4
  $region2: #{transformer_forward.10} parent=0 // loop_pre_header
    _
  $region3: #{transformer_forward.10} parent=0 // loop_header
    %s16 = sphi 0, %s20
    %p17 = scmp.ge.s32.totalorder %s16, 4
    %s26 = sphi 0, %s28
    %s29 = sphi 0, %s26
    %s30 = sphi 0, %s29
    %s46 = sphi 0, %s30
    %s52 = sphi 0, %s54
    %s55 = sphi 0, %s52
    %s56 = sphi 0, %s55
    %s72 = sphi 0, %s56
    %s76 = sphi 0, %s76
    %s78 = sphi 0, %s76
    %s79 = sphi 0, %s78
    %s93 = sphi 0, %s79
    %s97 = sphi 0, %s97
    %s99 = sphi 0, %s97
    %s100 = sphi 0, %s99
    %s114 = sphi 0, %s100
    %s118 = sphi 0, %s118
    %s120 = sphi 0, %s118
    %s121 = sphi 0, %s120
    %s135 = sphi 0, %s121
    %s139 = sphi 0, %s139
    %s141 = sphi 0, %s139
    %s142 = sphi 0, %s141
    %s156 = sphi 0, %s142
    %s160 = sphi 0, %s160
    %s162 = sphi 0, %s160
    %s163 = sphi 0, %s162
    %s177 = sphi 0, %s163
    %s181 = sphi 0, %s181
    %s183 = sphi 0, %s181
    %s184 = sphi 0, %s183
    %s198 = sphi 0, %s184
    %s202 = sphi 0, %s202
    %s204 = sphi 0, %s202
    %s205 = sphi 0, %s204
    %s219 = sphi 0, %s205
    %s223 = sphi 0, %s223
    %s225 = sphi 0, %s223
    %s226 = sphi 0, %s225
    %s240 = sphi 0, %s226
    %s246 = sphi 0, %s248
    %s249 = sphi 0, %s246
    %s250 = sphi 0, %s249
    %s266 = sphi 0, %s250
  $region4: #{transformer_forward.10} parent=0 // loop_header_branch
    %19 = sbr.rel (%p17) target = $region8
  $region5: #{transformer_forward.10} parent=0 // loop_body
    %s21 = ssub.s32 %s16, 1
    %s22 = ssub.s32 %s16, 2
    %s23 = sadd.s32 %s16, 1
    %s24 = ssub.s32 %s16, %s23
    %p25 = scmp.eq.s32.totalorder %s24, 0
    %s27 = sadd.s32 %s26, 1
    %s28 = scalar_select %p25, %s26, %s27
    %p31 = pneg %p25
    %p32 = scmp.eq.s32.totalorder %s16, 1
    %p33 = por %p31, %p32
    %p34 = scmp.ne.s32.totalorder %s26, %s29
    %p35 = scmp.eq.s32.totalorder %s16, 0
    %p36 = por %p34, %p35
    %p37 = scmp.ne.s32.totalorder %s26, %s29
    %p38 = scmp.eq.s32.totalorder %s21, 1
    %p39 = por %p37, %p38
    %p40 = scmp.ne.s32.totalorder %s29, %s30
    %p41 = scmp.eq.s32.totalorder %s21, 0
    %p42 = por %p40, %p41
    %p43 = scmp.ne.s32.totalorder %s29, %s30
    %p44 = scmp.eq.s32.totalorder %s22, 1
    %p45 = por %p43, %p44
    %p47 = scmp.ne.s32.totalorder %s30, %s46
    %p48 = scmp.eq.s32.totalorder %s22, 0
    %p49 = por %p47, %p48
    %s50 = ssub.s32 %s16, %s23
    %p51 = scmp.eq.s32.totalorder %s50, 0
    %s53 = sadd.s32 %s52, 1
    %s54 = scalar_select %p51, %s52, %s53
    %p57 = pneg %p51
    %p58 = scmp.eq.s32.totalorder %s16, 1
    %p59 = por %p57, %p58
    %p60 = scmp.ne.s32.totalorder %s52, %s55
    %p61 = scmp.eq.s32.totalorder %s16, 0
    %p62 = por %p60, %p61
    %p63 = scmp.ne.s32.totalorder %s52, %s55
    %p64 = scmp.eq.s32.totalorder %s21, 1
    %p65 = por %p63, %p64
    %p66 = scmp.ne.s32.totalorder %s55, %s56
    %p67 = scmp.eq.s32.totalorder %s21, 0
    %p68 = por %p66, %p67
    %p69 = scmp.ne.s32.totalorder %s55, %s56
    %p70 = scmp.eq.s32.totalorder %s22, 1
    %p71 = por %p69, %p70
    %p73 = scmp.ne.s32.totalorder %s56, %s72
    %p74 = scmp.eq.s32.totalorder %s22, 0
    %p75 = por %p73, %p74
    %s77 = sadd.s32 %s76, 1
    %p80 = scmp.eq.s32.totalorder %s16, 1
    %p81 = scmp.ne.s32.totalorder %s76, %s78
    %p82 = scmp.eq.s32.totalorder %s16, 0
    %p83 = por %p81, %p82
    %p84 = scmp.ne.s32.totalorder %s76, %s78
    %p85 = scmp.eq.s32.totalorder %s21, 1
    %p86 = por %p84, %p85
    %p87 = scmp.ne.s32.totalorder %s78, %s79
    %p88 = scmp.eq.s32.totalorder %s21, 0
    %p89 = por %p87, %p88
    %p90 = scmp.ne.s32.totalorder %s78, %s79
    %p91 = scmp.eq.s32.totalorder %s22, 1
    %p92 = por %p90, %p91
    %p94 = scmp.ne.s32.totalorder %s79, %s93
    %p95 = scmp.eq.s32.totalorder %s22, 0
    %p96 = por %p94, %p95
    %s98 = sadd.s32 %s97, 1
    %p101 = scmp.eq.s32.totalorder %s16, 1
    %p102 = scmp.ne.s32.totalorder %s97, %s99
    %p103 = scmp.eq.s32.totalorder %s16, 0
    %p104 = por %p102, %p103
    %p105 = scmp.ne.s32.totalorder %s97, %s99
    %p106 = scmp.eq.s32.totalorder %s21, 1
    %p107 = por %p105, %p106
    %p108 = scmp.ne.s32.totalorder %s99, %s100
    %p109 = scmp.eq.s32.totalorder %s21, 0
    %p110 = por %p108, %p109
    %p111 = scmp.ne.s32.totalorder %s99, %s100
    %p112 = scmp.eq.s32.totalorder %s22, 1
    %p113 = por %p111, %p112
    %p115 = scmp.ne.s32.totalorder %s100, %s114
    %p116 = scmp.eq.s32.totalorder %s22, 0
    %p117 = por %p115, %p116
    %s119 = sadd.s32 %s118, 1
    %p122 = scmp.eq.s32.totalorder %s16, 1
    %p123 = scmp.ne.s32.totalorder %s118, %s120
    %p124 = scmp.eq.s32.totalorder %s16, 0
    %p125 = por %p123, %p124
    %p126 = scmp.ne.s32.totalorder %s118, %s120
    %p127 = scmp.eq.s32.totalorder %s21, 1
    %p128 = por %p126, %p127
    %p129 = scmp.ne.s32.totalorder %s120, %s121
    %p130 = scmp.eq.s32.totalorder %s21, 0
    %p131 = por %p129, %p130
    %p132 = scmp.ne.s32.totalorder %s120, %s121
    %p133 = scmp.eq.s32.totalorder %s22, 1
    %p134 = por %p132, %p133
    %p136 = scmp.ne.s32.totalorder %s121, %s135
    %p137 = scmp.eq.s32.totalorder %s22, 0
    %p138 = por %p136, %p137
    %s140 = sadd.s32 %s139, 1
    %p143 = scmp.eq.s32.totalorder %s16, 1
    %p144 = scmp.ne.s32.totalorder %s139, %s141
    %p145 = scmp.eq.s32.totalorder %s16, 0
    %p146 = por %p144, %p145
    %p147 = scmp.ne.s32.totalorder %s139, %s141
    %p148 = scmp.eq.s32.totalorder %s21, 1
    %p149 = por %p147, %p148
    %p150 = scmp.ne.s32.totalorder %s141, %s142
    %p151 = scmp.eq.s32.totalorder %s21, 0
    %p152 = por %p150, %p151
    %p153 = scmp.ne.s32.totalorder %s141, %s142
    %p154 = scmp.eq.s32.totalorder %s22, 1
    %p155 = por %p153, %p154
    %p157 = scmp.ne.s32.totalorder %s142, %s156
    %p158 = scmp.eq.s32.totalorder %s22, 0
    %p159 = por %p157, %p158
    %s161 = sadd.s32 %s160, 1
    %p164 = scmp.eq.s32.totalorder %s16, 1
    %p165 = scmp.ne.s32.totalorder %s160, %s162
    %p166 = scmp.eq.s32.totalorder %s16, 0
    %p167 = por %p165, %p166
    %p168 = scmp.ne.s32.totalorder %s160, %s162
    %p169 = scmp.eq.s32.totalorder %s21, 1
    %p170 = por %p168, %p169
    %p171 = scmp.ne.s32.totalorder %s162, %s163
    %p172 = scmp.eq.s32.totalorder %s21, 0
    %p173 = por %p171, %p172
    %p174 = scmp.ne.s32.totalorder %s162, %s163
    %p175 = scmp.eq.s32.totalorder %s22, 1
    %p176 = por %p174, %p175
    %p178 = scmp.ne.s32.totalorder %s163, %s177
    %p179 = scmp.eq.s32.totalorder %s22, 0
    %p180 = por %p178, %p179
    %s182 = sadd.s32 %s181, 1
    %p185 = scmp.eq.s32.totalorder %s16, 1
    %p186 = scmp.ne.s32.totalorder %s181, %s183
    %p187 = scmp.eq.s32.totalorder %s16, 0
    %p188 = por %p186, %p187
    %p189 = scmp.ne.s32.totalorder %s181, %s183
    %p190 = scmp.eq.s32.totalorder %s21, 1
    %p191 = por %p189, %p190
    %p192 = scmp.ne.s32.totalorder %s183, %s184
    %p193 = scmp.eq.s32.totalorder %s21, 0
    %p194 = por %p192, %p193
    %p195 = scmp.ne.s32.totalorder %s183, %s184
    %p196 = scmp.eq.s32.totalorder %s22, 1
    %p197 = por %p195, %p196
    %p199 = scmp.ne.s32.totalorder %s184, %s198
    %p200 = scmp.eq.s32.totalorder %s22, 0
    %p201 = por %p199, %p200
    %s203 = sadd.s32 %s202, 1
    %p206 = scmp.eq.s32.totalorder %s16, 1
    %p207 = scmp.ne.s32.totalorder %s202, %s204
    %p208 = scmp.eq.s32.totalorder %s16, 0
    %p209 = por %p207, %p208
    %p210 = scmp.ne.s32.totalorder %s202, %s204
    %p211 = scmp.eq.s32.totalorder %s21, 1
    %p212 = por %p210, %p211
    %p213 = scmp.ne.s32.totalorder %s204, %s205
    %p214 = scmp.eq.s32.totalorder %s21, 0
    %p215 = por %p213, %p214
    %p216 = scmp.ne.s32.totalorder %s204, %s205
    %p217 = scmp.eq.s32.totalorder %s22, 1
    %p218 = por %p216, %p217
    %p220 = scmp.ne.s32.totalorder %s205, %s219
    %p221 = scmp.eq.s32.totalorder %s22, 0
    %p222 = por %p220, %p221
    %s224 = sadd.s32 %s223, 1
    %p227 = scmp.eq.s32.totalorder %s16, 1
    %p228 = scmp.ne.s32.totalorder %s223, %s225
    %p229 = scmp.eq.s32.totalorder %s16, 0
    %p230 = por %p228, %p229
    %p231 = scmp.ne.s32.totalorder %s223, %s225
    %p232 = scmp.eq.s32.totalorder %s21, 1
    %p233 = por %p231, %p232
    %p234 = scmp.ne.s32.totalorder %s225, %s226
    %p235 = scmp.eq.s32.totalorder %s21, 0
    %p236 = por %p234, %p235
    %p237 = scmp.ne.s32.totalorder %s225, %s226
    %p238 = scmp.eq.s32.totalorder %s22, 1
    %p239 = por %p237, %p238
    %p241 = scmp.ne.s32.totalorder %s226, %s240
    %p242 = scmp.eq.s32.totalorder %s22, 0
    %p243 = por %p241, %p242
    %s244 = ssub.s32 %s16, %s23
    %p245 = scmp.eq.s32.totalorder %s244, 0
    %s247 = sadd.s32 %s246, 1
    %s248 = scalar_select %p245, %s246, %s247
    %p251 = pneg %p245
    %p252 = scmp.eq.s32.totalorder %s16, 1
    %p253 = por %p251, %p252
    %p254 = scmp.ne.s32.totalorder %s246, %s249
    %p255 = scmp.eq.s32.totalorder %s16, 0
    %p256 = por %p254, %p255
    %p257 = scmp.ne.s32.totalorder %s246, %s249
    %p258 = scmp.eq.s32.totalorder %s21, 1
    %p259 = por %p257, %p258
    %p260 = scmp.ne.s32.totalorder %s249, %s250
    %p261 = scmp.eq.s32.totalorder %s21, 0
    %p262 = por %p260, %p261
    %p263 = scmp.ne.s32.totalorder %s249, %s250
    %p264 = scmp.eq.s32.totalorder %s22, 1
    %p265 = por %p263, %p264
    %p267 = scmp.ne.s32.totalorder %s250, %s266
    %p268 = scmp.eq.s32.totalorder %s22, 0
    %p269 = por %p267, %p268
    %p270 = scmp.le.s32.totalorder 1, %s16
    %p271 = scmp.lt.s32.totalorder %s16, 3
    %p272 = pnand %p270, %p271
    %p273 = pneg %p272
    // Predicated region
    $region9: #{transformer_forward.10} parent=5 // pred_check
      _
    $region10: #{transformer_forward.10} parent=5 // pred_check_branch
      %275 = sbr.rel (%p272) target = $region12
    $region11: #{transformer_forward.10} parent=5 // pred_region
      %s276 = ssub.s32 %s16, 1
      // Predicated region
      $region13: #{transformer_forward.10} parent=11 // pred_check
        %p277 = pneg %p89
      $region14: #{transformer_forward.10} parent=11 // pred_check_branch
        %279 = sbr.rel (%p277) target = $region16
      $region15: #{transformer_forward.10} parent=11 // pred_region
        _
      $region16: #{transformer_forward.10} parent=11 // pred_fallthru
        _
      // Predicated region
      $region17: #{transformer_forward.10} parent=11 // pred_check
        %p280 = pneg %p110
      $region18: #{transformer_forward.10} parent=11 // pred_check_branch
        %282 = sbr.rel (%p280) target = $region20
      $region19: #{transformer_forward.10} parent=11 // pred_region
        _
      $region20: #{transformer_forward.10} parent=11 // pred_fallthru
        _
      // Predicated region
      $region21: #{transformer_forward.10} parent=11 // pred_check
        %p283 = pneg %p131
      $region22: #{transformer_forward.10} parent=11 // pred_check_branch
        %285 = sbr.rel (%p283) target = $region24
      $region23: #{transformer_forward.10} parent=11 // pred_region
        _
      $region24: #{transformer_forward.10} parent=11 // pred_fallthru
        _
      // Predicated region
      $region25: #{transformer_forward.10} parent=11 // pred_check
        %p286 = pneg %p152
      $region26: #{transformer_forward.10} parent=11 // pred_check_branch
        %288 = sbr.rel (%p286) target = $region28
      $region27: #{transformer_forward.10} parent=11 // pred_region
        _
      $region28: #{transformer_forward.10} parent=11 // pred_fallthru
        _
      // Predicated region
      $region29: #{transformer_forward.10} parent=11 // pred_check
        %p289 = pneg %p173
      $region30: #{transformer_forward.10} parent=11 // pred_check_branch
        %291 = sbr.rel (%p289) target = $region32
      $region31: #{transformer_forward.10} parent=11 // pred_region
        _
      $region32: #{transformer_forward.10} parent=11 // pred_fallthru
        _
      // Predicated region
      $region33: #{transformer_forward.10} parent=11 // pred_check
        %p292 = pneg %p194
      $region34: #{transformer_forward.10} parent=11 // pred_check_branch
        %294 = sbr.rel (%p292) target = $region36
      $region35: #{transformer_forward.10} parent=11 // pred_region
        _
      $region36: #{transformer_forward.10} parent=11 // pred_fallthru
        _
      // Predicated region
      $region37: #{transformer_forward.10} parent=11 // pred_check
        %p295 = pneg %p215
      $region38: #{transformer_forward.10} parent=11 // pred_check_branch
        %297 = sbr.rel (%p295) target = $region40
      $region39: #{transformer_forward.10} parent=11 // pred_region
        _
      $region40: #{transformer_forward.10} parent=11 // pred_fallthru
        _
      // Predicated region
      $region41: #{transformer_forward.10} parent=11 // pred_check
        %p298 = pneg %p236
      $region42: #{transformer_forward.10} parent=11 // pred_check_branch
        %300 = sbr.rel (%p298) target = $region44
      $region43: #{transformer_forward.10} parent=11 // pred_region
        _
      $region44: #{transformer_forward.10} parent=11 // pred_fallthru
        _
    $region12: #{transformer_forward.10} parent=5 // pred_fallthru
      _
    %p301 = scmp.lt.s32.totalorder %s16, 2
    // Predicated region
    $region45: #{transformer_forward.10} parent=5 // pred_check
      %p302 = pneg %p301
    $region46: #{transformer_forward.10} parent=5 // pred_check_branch
      %304 = sbr.rel (%p302) target = $region48
    $region47: #{transformer_forward.10} parent=5 // pred_region
      // Predicated region
      $region49: #{transformer_forward.10} parent=47 // pred_check
        %p305 = pneg %p36
      $region50: #{transformer_forward.10} parent=47 // pred_check_branch
        %307 = sbr.rel (%p305) target = $region52
      $region51: #{transformer_forward.10} parent=47 // pred_region
        %p308 = scmp.lt.s32.totalorder %s16, 1
        %s309 = scalar_select %p308, %s16, 1
        %s310 = smul.addr %s309, 4
        %s311 = scalar_lea.vmem %s0, %s310
      $region52: #{transformer_forward.10} parent=47 // pred_fallthru
        _
      // Predicated region
      $region53: #{transformer_forward.10} parent=47 // pred_check
        %p312 = pneg %p62
      $region54: #{transformer_forward.10} parent=47 // pred_check_branch
        %314 = sbr.rel (%p312) target = $region56
      $region55: #{transformer_forward.10} parent=47 // pred_region
        %p315 = scmp.lt.s32.totalorder %s16, 1
        %s316 = scalar_select %p315, %s16, 1
        %s317 = smul.addr %s316, 2
        %s318 = smul.addr %s317, 4
        %s319 = scalar_lea.vmem %s1, %s318
      $region56: #{transformer_forward.10} parent=47 // pred_fallthru
        _
    $region48: #{transformer_forward.10} parent=5 // pred_fallthru
      _
    %p320 = scmp.le.s32.totalorder 1, %s16
    %p321 = scmp.lt.s32.totalorder %s16, 3
    %p322 = pnand %p320, %p321
    %p323 = pneg %p322
    // Predicated region
    $region57: #{transformer_forward.10} parent=5 // pred_check
      _
    $region58: #{transformer_forward.10} parent=5 // pred_check_branch
      %325 = sbr.rel (%p322) target = $region60
    $region59: #{transformer_forward.10} parent=5 // pred_region
      %s326 = ssub.s32 %s16, 1
      %p327 = scmp.lt.s32.totalorder %s21, 1
      %s328 = scalar_select %p327, %s21, 1
      %s329 = smul.addr %s328, 4
      %s330 = scalar_lea.vmem %s0, %s329
      %p331 = pneg %p42
      %p332 = pneg %p39
      %p333 = scmp.lt.s32.totalorder %s21, 1
      %s334 = scalar_select %p333, %s21, 1
      %s335 = smul.addr %s334, 2
      %s336 = smul.addr %s335, 4
      %s337 = scalar_lea.vmem %s1, %s336
      %p338 = pneg %p68
      %p339 = pneg %p65
      %p340 = pneg %p89
      %p341 = pneg %p86
      %p342 = pneg %p110
      %p343 = pneg %p107
      %p344 = pneg %p131
      %p345 = pneg %p128
      %p346 = pneg %p152
      %p347 = pneg %p149
      %p348 = pneg %p173
      %p349 = pneg %p170
      %p350 = pneg %p194
      %p351 = pneg %p191
      %p352 = pneg %p215
      %p353 = pneg %p212
      %p354 = pneg %p236
      %p355 = pneg %p233
      %p356 = pneg %p262
      %p357 = pneg %p259
      %p358 = scmp.lt.s32.totalorder %s21, 1
      %s359 = scalar_select %p358, %s21, 1
      %s360 = smul.addr %s359, 4
      %s361 = scalar_lea.vmem %s10, %s360
      %p362 = scmp.lt.s32.totalorder %s21, 1
      %s363 = scalar_select %p362, %s21, 1
      %s364 = smul.addr %s363, 4
      %s365 = scalar_lea.vmem %s0, %s364
      %p366 = scmp.lt.s32.totalorder %s21, 1
      %s367 = scalar_select %p366, %s21, 1
      %s368 = smul.addr %s367, 2
      %s369 = smul.addr %s368, 4
      %s370 = scalar_lea.vmem %s1, %s369
      %p371 = scmp.lt.s32.totalorder %s21, 1
      %s372 = scalar_select %p371, %s21, 1
      %s373 = smul.addr %s372, 4
      %s374 = scalar_lea.vmem %s10, %s373
      %v376 = vld [vmem:[%s365] sm:$0xf]
      %v377 = vld [vmem:[%s370] sm:$0xf]
      %v378 = vld [vmem:[%s370 + $0x4] sm:$0xf]
      %v379 = vld [vmem:[%s2] sm:$0xf]
      %v380 = vld [vmem:[%s2 + $0x4] sm:$0xf]
      %v381 = vld [vmem:[%s2 + $0x8] sm:$0xf]
      %v382 = vld [vmem:[%s2 + $0xc] sm:$0xf]
      %v383 = vld [vmem:[%s3] sm:$0x1]
      %v385 = vperm.slane %v383, 0
      %v391 = vunpack.c.l.b16 %v379
      %v392 = vunpack.c.l.b16 %v380
      %v393 = vunpack.c.l.b16 %v381
      %v394 = vunpack.c.l.b16 %v382
      %v395 = vpack.c.b16 %v392, %v391
      %v396 = vpack.c.b16 %v394, %v393
      %vm397 = vcmask 261120
      %v399 = vsel %vm397, %v376, 0
      %v402 = vsel %vm397, %v395, 0
      %v405 = vsel %vm397, %v396, 0
      %407 = vmatpush.bf16.xpose.msra.mxu0 0
      %408 = vmatpush.bf16.xpose.msra.mxu0 0
      %409 = vmatpush.bf16.xpose.msra.mxu0 0
      %410 = vmatpush.bf16.xpose.msra.mxu0 0
      %411 = vmatpush.bf16.xpose.msra.mxu0 0
      %412 = vmatpush.bf16.xpose.msra.mxu0 0
      %413 = vmatpush.bf16.xpose.msra.mxu0 %v405
      %414 = vmatpush.bf16.xpose.msra.mxu0 %v402
      %415 = vmatmul.bf16.gmra.mxu0 %v399
      %v416 = vpop.f32.mrf.mxu0
      %v417 = vadd.f32 %v385, %v416
      %v418 = vpop.f32.mrf.mxu0
      %419 = vdwg.mxu0
      %v420 = vld [vmem:[%s4] sm:$0xf]
      %v421 = vld [vmem:[%s4 + $0x4] sm:$0xf]
      %v422 = vld [vmem:[%s4 + $0x8] sm:$0xf]
      %v423 = vld [vmem:[%s4 + $0xc] sm:$0xf]
      %v424 = vld [vmem:[%s4 + $0x10] sm:$0xf]
      %v425 = vld [vmem:[%s4 + $0x14] sm:$0xf]
      %v426 = vld [vmem:[%s4 + $0x18] sm:$0xf]
      %v427 = vld [vmem:[%s4 + $0x1c] sm:$0xf]
      %v428 = vld [vmem:[%s5] sm:$0x1]
      %v430 = vperm.slane %v428, 0
      %v434 = vunpack.c.l.b16 %v377
      %v435 = vunpack.c.l.b16 %v378
      %v436 = vpack.c.b16 %v435, %v434
      %v445 = vunpack.c.l.b16 %v420
      %v446 = vunpack.c.l.b16 %v421
      %v447 = vunpack.c.l.b16 %v422
      %v448 = vunpack.c.l.b16 %v423
      %v449 = vunpack.c.l.b16 %v424
      %v450 = vunpack.c.l.b16 %v425
      %v451 = vunpack.c.l.b16 %v426
      %v452 = vunpack.c.l.b16 %v427
      %v453 = vpack.c.b16 %v446, %v445
      %v454 = vpack.c.b16 %v448, %v447
      %v455 = vpack.c.b16 %v450, %v449
      %v456 = vpack.c.b16 %v452, %v451
      %v458 = vsel %vm397, %v436, 0
      %v461 = vsel %vm397, %v453, 0
      %v464 = vsel %vm397, %v454, 0
      %v467 = vsel %vm397, %v455, 0
      %v470 = vsel %vm397, %v456, 0
      %472 = vmatpush.bf16.xpose.msra.mxu0 0
      %473 = vmatpush.bf16.xpose.msra.mxu0 0
      %474 = vmatpush.bf16.xpose.msra.mxu0 0
      %475 = vmatpush.bf16.xpose.msra.mxu0 0
      %476 = vmatpush.bf16.xpose.msra.mxu0 %v470
      %477 = vmatpush.bf16.xpose.msra.mxu0 %v467
      %478 = vmatpush.bf16.xpose.msra.mxu0 %v464
      %479 = vmatpush.bf16.xpose.msra.mxu0 %v461
      %480 = vmatmul.bf16.gmra.mxu0 %v458
      %v481 = vpop.f32.mrf.mxu0
      %v482 = vadd.f32 %v430, %v481
      %v483 = vpop.f32.mrf.mxu0
      %v484 = vadd.f32 %v430, %v483
      %485 = vdwg.mxu0
      %v486 = vld [vmem:[%s6] sm:$0xf]
      %v487 = vld [vmem:[%s6 + $0x4] sm:$0xf]
      %v488 = vld [vmem:[%s6 + $0x8] sm:$0xf]
      %v489 = vld [vmem:[%s6 + $0xc] sm:$0xf]
      %v490 = vpack.c.bf16 %v417, %v417
      %v491 = vpack.c.bf16 %v484, %v482
      %vm492 = vcmask 64512
      %v494 = vsel %vm492, %v490, 0
      %v497 = vsel %vm492, %v491, 0
      %499 = vmatpush.bf16.xpose.msra.mxu0 0
      %500 = vmatpush.bf16.xpose.msra.mxu0 0
      %501 = vmatpush.bf16.xpose.msra.mxu0 0
      %502 = vmatpush.bf16.xpose.msra.mxu0 0
      %503 = vmatpush.bf16.xpose.msra.mxu0 0
      %504 = vmatpush.bf16.xpose.msra.mxu0 0
      %505 = vmatpush.bf16.xpose.msra.mxu0 0
      %506 = vmatpush.bf16.xpose.msra.mxu0 %v497
      %507 = vmatmul.bf16.gmra.mxu0 %v494
      %v508 = vpop.f32.mrf.mxu0
      %v509 = vadd.f32 0.0, %v508
      %v510 = vpop.f32.mrf.mxu0
      %511 = vdwg.mxu0
      %v512 = vmul.f32 %v509, 0.35355338
      %vm513 = vcmask 130048
      %v514 = vsel %vm513, %v512, -inf
      %515 = vmax.xlane.f32.xlu0 %v514
      %v516 = vpop.xlane.xlu0 %515
      %v517 = vsub.f32 %v512, %v516
      %v518 = vmul.f32 %v517, 1.442695
      %v519 = vpow.pop %v518
      %v520 = vsel %vm513, %v519, 0.0
      %521 = vadd.xlane.f32.xlu0 %v520
      %v522 = vpop.xlane.xlu0 %521
      %v523 = vrcp.pop %v522
      %v524 = vmul.f32 %v519, %v523
      %v525 = vpack.c.bf16 %v524, %v524
      %527 = vrot.lane.b32.xlu0 %v491, 96
      %v528 = vpop.permute.xlu0 %527
      %v531 = vsel %vm513, %v525, 0
      %533 = vmatpush.bf16.msra.mxu0 0
      %534 = vmatpush.bf16.msra.mxu0 0
      %535 = vmatpush.bf16.msra.mxu0 0
      %536 = vmatpush.bf16.msra.mxu0 0
      %537 = vmatpush.bf16.msra.mxu0 0
      %538 = vmatpush.bf16.msra.mxu0 0
      %539 = vmatpush.bf16.msra.mxu0 0
      %540 = vmatpush.bf16.msra.mxu0 %v528
      %541 = vmatmul.bf16.gmra.mxu0 %v531
      %v542 = vpop.f32.mrf.mxu0
      %v543 = vadd.f32 0.0, %v542
      %v544 = vpop.f32.mrf.mxu0
      %545 = vdwg.mxu0
      %v546 = vpack.c.bf16 %v543, %v543
      %548 = vrot.lane.b32.xlu0 %v490, 120
      %v549 = vpop.permute.xlu0 %548
      %550 = vrot.lane.b32.xlu0 %v491, 120
      %v551 = vpop.permute.xlu0 %550
      %v553 = vsel %vm492, %v549, 0
      %v556 = vsel %vm492, %v551, 0
      %558 = vmatpush.bf16.xpose.msra.mxu0 0
      %559 = vmatpush.bf16.xpose.msra.mxu0 0
      %560 = vmatpush.bf16.xpose.msra.mxu0 0
      %561 = vmatpush.bf16.xpose.msra.mxu0 0
      %562 = vmatpush.bf16.xpose.msra.mxu0 0
      %563 = vmatpush.bf16.xpose.msra.mxu0 0
      %564 = vmatpush.bf16.xpose.msra.mxu0 0
      %565 = vmatpush.bf16.xpose.msra.mxu0 %v556
      %566 = vmatmul.bf16.gmra.mxu0 %v553
      %v567 = vpop.f32.mrf.mxu0
      %v568 = vadd.f32 0.0, %v567
      %v569 = vpop.f32.mrf.mxu0
      %570 = vdwg.mxu0
      %v571 = vmul.f32 %v568, 0.35355338
      %v572 = vsel %vm513, %v571, -inf
      %573 = vmax.xlane.f32.xlu0 %v572
      %v574 = vpop.xlane.xlu0 %573
      %v575 = vsub.f32 %v571, %v574
      %v576 = vmul.f32 %v575, 1.442695
      %v577 = vpow.pop %v576
      %v578 = vsel %vm513, %v577, 0.0
      %579 = vadd.xlane.f32.xlu0 %v578
      %v580 = vpop.xlane.xlu0 %579
      %v581 = vrcp.pop %v580
      %v582 = vmul.f32 %v577, %v581
      %v583 = vpack.c.bf16 %v582, %v582
      %584 = vrot.lane.b32.xlu0 %v491, 88
      %v585 = vpop.permute.xlu0 %584
      %v588 = vsel %vm513, %v583, 0
      %590 = vmatpush.bf16.msra.mxu0 0
      %591 = vmatpush.bf16.msra.mxu0 0
      %592 = vmatpush.bf16.msra.mxu0 0
      %593 = vmatpush.bf16.msra.mxu0 0
      %594 = vmatpush.bf16.msra.mxu0 0
      %595 = vmatpush.bf16.msra.mxu0 0
      %596 = vmatpush.bf16.msra.mxu0 0
      %597 = vmatpush.bf16.msra.mxu0 %v585
      %598 = vmatmul.bf16.gmra.mxu0 %v588
      %v599 = vpop.f32.mrf.mxu0
      %v600 = vadd.f32 0.0, %v599
      %v601 = vpop.f32.mrf.mxu0
      %602 = vdwg.mxu0
      %v603 = vpack.c.bf16 %v600, %v600
      %v608 = vunpack.c.l.b16 %v486
      %v609 = vunpack.c.l.b16 %v487
      %v610 = vunpack.c.l.b16 %v488
      %v611 = vunpack.c.l.b16 %v489
      %v612 = vpack.c.b16 %v609, %v608
      %v613 = vpack.c.b16 %v611, %v610
      %614 = vrot.lane.b32.xlu0 %v612, 120
      %v615 = vpop.permute.xlu0 %614
      %616 = vrot.lane.b32.xlu0 %v613, 120
      %v617 = vpop.permute.xlu0 %616
      %v619 = vsel %vm492, %v603, 0
      %v622 = vsel %vm492, %v615, 0
      %v625 = vsel %vm492, %v617, 0
      %627 = vmatpush.bf16.xpose.msra.mxu0 0
      %628 = vmatpush.bf16.xpose.msra.mxu0 0
      %629 = vmatpush.bf16.xpose.msra.mxu0 0
      %630 = vmatpush.bf16.xpose.msra.mxu0 0
      %631 = vmatpush.bf16.xpose.msra.mxu0 0
      %632 = vmatpush.bf16.xpose.msra.mxu0 0
      %633 = vmatpush.bf16.xpose.msra.mxu0 %v625
      %634 = vmatpush.bf16.xpose.msra.mxu0 %v622
      %635 = vmatmul.bf16.gmra.mxu0 %v619
      %v636 = vpop.f32.mrf.mxu0
      %v637 = vadd.f32 0.0, %v636
      %v638 = vpop.f32.mrf.mxu0
      %639 = vdwg.mxu0
      %v641 = vsel %vm492, %v546, 0
      %v644 = vsel %vm492, %v612, 0
      %v647 = vsel %vm492, %v613, 0
      %649 = vmatpush.bf16.xpose.msra.mxu0 0
      %650 = vmatpush.bf16.xpose.msra.mxu0 0
      %651 = vmatpush.bf16.xpose.msra.mxu0 0
      %652 = vmatpush.bf16.xpose.msra.mxu0 0
      %653 = vmatpush.bf16.xpose.msra.mxu0 0
      %654 = vmatpush.bf16.xpose.msra.mxu0 0
      %655 = vmatpush.bf16.xpose.msra.mxu0 %v647
      %656 = vmatpush.bf16.xpose.msra.mxu0 %v644
      %657 = vmatmul.bf16.gmra.mxu0 %v641
      %v658 = vpop.f32.mrf.mxu0
      %v659 = vadd.f32 %v637, %v658
      %v660 = vpop.f32.mrf.mxu0
      %661 = vdwg.mxu0
      %662 = vrot.lane.b32.xlu0 %v490, 112
      %v663 = vpop.permute.xlu0 %662
      %664 = vrot.lane.b32.xlu0 %v491, 112
      %v665 = vpop.permute.xlu0 %664
      %v667 = vsel %vm492, %v663, 0
      %v670 = vsel %vm492, %v665, 0
      %672 = vmatpush.bf16.xpose.msra.mxu0 0
      %673 = vmatpush.bf16.xpose.msra.mxu0 0
      %674 = vmatpush.bf16.xpose.msra.mxu0 0
      %675 = vmatpush.bf16.xpose.msra.mxu0 0
      %676 = vmatpush.bf16.xpose.msra.mxu0 0
      %677 = vmatpush.bf16.xpose.msra.mxu0 0
      %678 = vmatpush.bf16.xpose.msra.mxu0 0
      %679 = vmatpush.bf16.xpose.msra.mxu0 %v670
      %680 = vmatmul.bf16.gmra.mxu0 %v667
      %v681 = vpop.f32.mrf.mxu0
      %v682 = vadd.f32 0.0, %v681
      %v683 = vpop.f32.mrf.mxu0
      %684 = vdwg.mxu0
      %v685 = vmul.f32 %v682, 0.35355338
      %v686 = vsel %vm513, %v685, -inf
      %687 = vmax.xlane.f32.xlu0 %v686
      %v688 = vpop.xlane.xlu0 %687
      %v689 = vsub.f32 %v685, %v688
      %v690 = vmul.f32 %v689, 1.442695
      %v691 = vpow.pop %v690
      %v692 = vsel %vm513, %v691, 0.0
      %693 = vadd.xlane.f32.xlu0 %v692
      %v694 = vpop.xlane.xlu0 %693
      %v695 = vrcp.pop %v694
      %v696 = vmul.f32 %v691, %v695
      %v697 = vpack.c.bf16 %v696, %v696
      %698 = vrot.lane.b32.xlu0 %v491, 80
      %v699 = vpop.permute.xlu0 %698
      %v702 = vsel %vm513, %v697, 0
      %704 = vmatpush.bf16.msra.mxu0 0
      %705 = vmatpush.bf16.msra.mxu0 0
      %706 = vmatpush.bf16.msra.mxu0 0
      %707 = vmatpush.bf16.msra.mxu0 0
      %708 = vmatpush.bf16.msra.mxu0 0
      %709 = vmatpush.bf16.msra.mxu0 0
      %710 = vmatpush.bf16.msra.mxu0 0
      %711 = vmatpush.bf16.msra.mxu0 %v699
      %712 = vmatmul.bf16.gmra.mxu0 %v702
      %v713 = vpop.f32.mrf.mxu0
      %v714 = vadd.f32 0.0, %v713
      %v715 = vpop.f32.mrf.mxu0
      %716 = vdwg.mxu0
      %v717 = vpack.c.bf16 %v714, %v714
      %718 = vrot.lane.b32.xlu0 %v612, 112
      %v719 = vpop.permute.xlu0 %718
      %720 = vrot.lane.b32.xlu0 %v613, 112
      %v721 = vpop.permute.xlu0 %720
      %v723 = vsel %vm492, %v717, 0
      %v726 = vsel %vm492, %v719, 0
      %v729 = vsel %vm492, %v721, 0
      %731 = vmatpush.bf16.xpose.msra.mxu0 0
      %732 = vmatpush.bf16.xpose.msra.mxu0 0
      %733 = vmatpush.bf16.xpose.msra.mxu0 0
      %734 = vmatpush.bf16.xpose.msra.mxu0 0
      %735 = vmatpush.bf16.xpose.msra.mxu0 0
      %736 = vmatpush.bf16.xpose.msra.mxu0 0
      %737 = vmatpush.bf16.xpose.msra.mxu0 %v729
      %738 = vmatpush.bf16.xpose.msra.mxu0 %v726
      %739 = vmatmul.bf16.gmra.mxu0 %v723
      %v740 = vpop.f32.mrf.mxu0
      %v741 = vadd.f32 0.0, %v740
      %v742 = vpop.f32.mrf.mxu0
      %743 = vdwg.mxu0
      %v744 = vadd.f32 %v659, %v741
      %745 = vrot.lane.b32.xlu0 %v490, 104
      %v746 = vpop.permute.xlu0 %745
      %747 = vrot.lane.b32.xlu0 %v491, 104
      %v748 = vpop.permute.xlu0 %747
      %v750 = vsel %vm492, %v746, 0
      %v753 = vsel %vm492, %v748, 0
      %755 = vmatpush.bf16.xpose.msra.mxu0 0
      %756 = vmatpush.bf16.xpose.msra.mxu0 0
      %757 = vmatpush.bf16.xpose.msra.mxu0 0
      %758 = vmatpush.bf16.xpose.msra.mxu0 0
      %759 = vmatpush.bf16.xpose.msra.mxu0 0
      %760 = vmatpush.bf16.xpose.msra.mxu0 0
      %761 = vmatpush.bf16.xpose.msra.mxu0 0
      %762 = vmatpush.bf16.xpose.msra.mxu0 %v753
      %763 = vmatmul.bf16.gmra.mxu0 %v750
      %v764 = vpop.f32.mrf.mxu0
      %v765 = vadd.f32 0.0, %v764
      %v766 = vpop.f32.mrf.mxu0
      %767 = vdwg.mxu0
      %v768 = vmul.f32 %v765, 0.35355338
      %v769 = vsel %vm513, %v768, -inf
      %770 = vmax.xlane.f32.xlu0 %v769
      %v771 = vpop.xlane.xlu0 %770
      %v772 = vsub.f32 %v768, %v771
      %v773 = vmul.f32 %v772, 1.442695
      %v774 = vpow.pop %v773
      %v775 = vsel %vm513, %v774, 0.0
      %776 = vadd.xlane.f32.xlu0 %v775
      %v777 = vpop.xlane.xlu0 %776
      %v778 = vrcp.pop %v777
      %v779 = vmul.f32 %v774, %v778
      %v780 = vpack.c.bf16 %v779, %v779
      %781 = vrot.lane.b32.xlu0 %v491, 72
      %v782 = vpop.permute.xlu0 %781
      %v785 = vsel %vm513, %v780, 0
      %787 = vmatpush.bf16.msra.mxu0 0
      %788 = vmatpush.bf16.msra.mxu0 0
      %789 = vmatpush.bf16.msra.mxu0 0
      %790 = vmatpush.bf16.msra.mxu0 0
      %791 = vmatpush.bf16.msra.mxu0 0
      %792 = vmatpush.bf16.msra.mxu0 0
      %793 = vmatpush.bf16.msra.mxu0 0
      %794 = vmatpush.bf16.msra.mxu0 %v782
      %795 = vmatmul.bf16.gmra.mxu0 %v785
      %v796 = vpop.f32.mrf.mxu0
      %v797 = vadd.f32 0.0, %v796
      %v798 = vpop.f32.mrf.mxu0
      %799 = vdwg.mxu0
      %v800 = vpack.c.bf16 %v797, %v797
      %801 = vrot.lane.b32.xlu0 %v612, 104
      %v802 = vpop.permute.xlu0 %801
      %803 = vrot.lane.b32.xlu0 %v613, 104
      %v804 = vpop.permute.xlu0 %803
      %v806 = vsel %vm492, %v800, 0
      %v809 = vsel %vm492, %v802, 0
      %v812 = vsel %vm492, %v804, 0
      %814 = vmatpush.bf16.xpose.msra.mxu0 0
      %815 = vmatpush.bf16.xpose.msra.mxu0 0
      %816 = vmatpush.bf16.xpose.msra.mxu0 0
      %817 = vmatpush.bf16.xpose.msra.mxu0 0
      %818 = vmatpush.bf16.xpose.msra.mxu0 0
      %819 = vmatpush.bf16.xpose.msra.mxu0 0
      %820 = vmatpush.bf16.xpose.msra.mxu0 %v812
      %821 = vmatpush.bf16.xpose.msra.mxu0 %v809
      %822 = vmatmul.bf16.gmra.mxu0 %v806
      %v823 = vpop.f32.mrf.mxu0
      %v824 = vadd.f32 0.0, %v823
      %v825 = vpop.f32.mrf.mxu0
      %826 = vdwg.mxu0
      %v827 = vadd.f32 %v744, %v824
      %v828 = vld [vmem:[%s7] sm:$0x1]
      %v830 = vperm.slane %v828, 0
      %v832 = vadd.f32 %v827, %v830
      %v833 = vunpack.c.l.bf16 %v376
      %v834 = vadd.f32 %v833, %v832
      %v835 = vld [vmem:[%s8] sm:$0x1]
      %v836 = vld [vmem:[%s9] sm:$0x1]
      %v837 = vsel %vm397, %v834, 0.0
      %838 = vadd.xlane.f32.xlu0 %v837
      %v839 = vpop.xlane.xlu0 %838
      %v840 = vrcp.pop 32.0
      %v841 = vmul.f32 32.0, %v840
      %v842 = vsub.f32 1.0, %v841
      %v843 = vmul.f32 %v840, %v842
      %v844 = vadd.f32 %v840, %v843
      %vm845 = vweird.f32 %v840
      %v846 = vsel %vm845, %v840, %v844
      %v847 = vmul.f32 %v839, %v846
      %v848 = vsub.f32 %v834, %v847
      %v849 = vmul.f32 %v848, %v848
      %v850 = vsel %vm397, %v849, 0.0
      %851 = vadd.xlane.f32.xlu0 %v850
      %v852 = vpop.xlane.xlu0 %851
      %v853 = vmul.f32 %v852, %v846
      %v854 = vadd.f32 %v853, 1e-05
      %v855 = vrsqrt.pop %v854
      %v856 = vmul.f32 %v855, %v854
      %v857 = vmul.f32 %v856, %v855
      %v858 = vmul.f32 0.5, %v857
      %v859 = vsub.f32 1.5, %v858
      %v860 = vmul.f32 %v855, %v859
      %vm861 = vweird.f32 %v854
      %vm862 = vweird.f32 %v855
      %vm863 = vmor %vm861, %vm862
      %v864 = vsel %vm863, %v855, %v860
      %v865 = vmul.f32 %v848, %v864
      %v867 = vperm.slane %v835, 0
      %v869 = vmul.f32 %v865, %v867
      %v871 = vperm.slane %v836, 0
      %v873 = vadd.f32 %v869, %v871
      %v874 = vpack.c.bf16 %v873, %v873
      %vm875 = vcmask 257024
      %876 = vst.msk [vmem:[%s374] sm:$0xf] %vm875, %v874
      %p877 = scmp.lt.s32.totalorder %s21, 1
      %s878 = scalar_select %p877, %s21, 1
      %s879 = smul.addr %s878, 4
      %s880 = scalar_lea.vmem %s10, %s879
      // Predicated region
      $region61: #{transformer_forward.10} parent=59 // pred_check
        %p881 = pneg %p259
      $region62: #{transformer_forward.10} parent=59 // pred_check_branch
        %883 = sbr.rel (%p881) target = $region64
      $region63: #{transformer_forward.10} parent=59 // pred_region
        _
      $region64: #{transformer_forward.10} parent=59 // pred_fallthru
        _
    $region60: #{transformer_forward.10} parent=5 // pred_fallthru
      _
    %p884 = scmp.le.s32.totalorder 2, %s16
    // Predicated region
    $region65: #{transformer_forward.10} parent=5 // pred_check
      %p885 = pneg %p884
    $region66: #{transformer_forward.10} parent=5 // pred_check_branch
      %887 = sbr.rel (%p885) target = $region68
    $region67: #{transformer_forward.10} parent=5 // pred_region
      %s888 = ssub.s32 %s16, 2
      // Predicated region
      $region69: #{transformer_forward.10} parent=67 // pred_check
        %p889 = pneg %p265
      $region70: #{transformer_forward.10} parent=67 // pred_check_branch
        %891 = sbr.rel (%p889) target = $region72
      $region71: #{transformer_forward.10} parent=67 // pred_region
        %p892 = scmp.lt.s32.totalorder %s22, 1
        %s893 = scalar_select %p892, %s22, 1
        %s894 = smul.addr %s893, 4
        %s895 = scalar_lea.vmem %s10, %s894
      $region72: #{transformer_forward.10} parent=67 // pred_fallthru
        _
    $region68: #{transformer_forward.10} parent=5 // pred_fallthru
      _
  $region6: #{transformer_forward.10} parent=0 // loop_footer
    %s20 = sadd.s32 1, %s16
  $region7: #{transformer_forward.10} parent=0 // loop_footer_branch
    %15 = sbr.rel target = $region3
  $region8: #{transformer_forward.10} parent=0 // loop_exit
    _

// kernel: transformer_forward.15
$region0: #{transformer_forward.15}
  #allocation0 [shape = 'u32[]', space=smem, size = 0x4, offset = 0x4, fixed_abs, tag = 'smem constant byte address 0x4 - core index']
  #allocation1 [shape = 'u32[72,128]{1,0:T(1,128)}', space=vmem, size = 0x9000, scoped, tag = 'internal scratch']
  #allocation2 [shape = 'f32[8,128]{1,0:T(8,128)}', space=vmem, size = 0x1000, scoped, tag = 'scratch operand']
  %s0 = inlined_call_operand.vmem [shape: bf16[16,32], index: 0, kind: input, shape index: {}]
  %s1 = inlined_call_operand.vmem [shape: bf16[128,32], index: 1, kind: input, shape index: {}]
  %s2 = inlined_call_operand.vmem [shape: f32[1,128], index: 2, kind: input, shape index: {}]
  %s3 = inlined_call_operand.vmem [shape: f32[16,128], index: 3, kind: output, shape index: {}]
  %s4 = sld [smem:[#allocation0]]
  $region53: #{transformer_forward.15} parent=0
    _
  %s6 = ssub.s32 1, %s4
  %s7 = scalar_select 0, %s6, %s4
  loop: start=0, step=1, limit=4
  $region2: #{transformer_forward.15} parent=0 // loop_pre_header
    _
  $region3: #{transformer_forward.15} parent=0 // loop_header
    %s9 = sphi 0, %s13
    %p10 = scmp.ge.s32.totalorder %s9, 4
    %s16 = sphi 0, %s35
    %s17 = sphi 0, %s31
    %s18 = sphi 0, %s27
    %s19 = sphi 0, %s16
    %s20 = sphi 0, %s17
    %s21 = sphi 0, %s18
    %s22 = sphi 0, %s19
    %s23 = sphi 0, %s20
    %s24 = sphi 0, %s21
    %s40 = sphi 0, %s42
    %s43 = sphi 0, %s40
    %s44 = sphi 0, %s43
    %s60 = sphi 0, %s44
    %s68 = sphi 0, %s70
    %s71 = sphi 0, %s68
    %s72 = sphi 0, %s71
    %s88 = sphi 0, %s72
    %s94 = sphi 0, %s96
    %s97 = sphi 0, %s94
    %s98 = sphi 0, %s97
    %s114 = sphi 0, %s98
    %s122 = sphi 0, %s124
    %s125 = sphi 0, %s122
    %s126 = sphi 0, %s125
    %s142 = sphi 0, %s126
  $region4: #{transformer_forward.15} parent=0 // loop_header_branch
    %12 = sbr.rel (%p10) target = $region8
  $region5: #{transformer_forward.15} parent=0 // loop_body
    %s14 = ssub.s32 %s9, 1
    %s15 = ssub.s32 %s9, 2
    %s25 = sadd.s32 1, %s18
    %p26 = scmp.ge.s32.totalorder %s25, 1
    %s27 = scalar_select %p26, 0, %s25
    %s28 = sadd.s32 1, %s17
    %s29 = scalar_select %p26, %s28, %s17
    %p30 = scmp.ge.s32.totalorder %s29, 1
    %s31 = scalar_select %p30, 0, %s29
    %s32 = sadd.s32 1, %s16
    %s33 = scalar_select %p30, %s32, %s16
    %p34 = scmp.ge.s32.totalorder %s33, 2
    %s35 = scalar_select %p34, 0, %s33
    %s36 = ssub.s32 %s16, %s35
    %s37 = ssub.s32 %s18, %s27
    %s38 = sor.u32 %s36, %s37
    %p39 = scmp.eq.s32.totalorder %s38, 0
    %s41 = sadd.s32 %s40, 1
    %s42 = scalar_select %p39, %s40, %s41
    %p45 = pneg %p39
    %p46 = scmp.eq.s32.totalorder %s9, 1
    %p47 = por %p45, %p46
    %p48 = scmp.ne.s32.totalorder %s40, %s43
    %p49 = scmp.eq.s32.totalorder %s9, 0
    %p50 = por %p48, %p49
    %p51 = scmp.ne.s32.totalorder %s40, %s43
    %p52 = scmp.eq.s32.totalorder %s14, 1
    %p53 = por %p51, %p52
    %p54 = scmp.ne.s32.totalorder %s43, %s44
    %p55 = scmp.eq.s32.totalorder %s14, 0
    %p56 = por %p54, %p55
    %p57 = scmp.ne.s32.totalorder %s43, %s44
    %p58 = scmp.eq.s32.totalorder %s15, 1
    %p59 = por %p57, %p58
    %p61 = scmp.ne.s32.totalorder %s44, %s60
    %p62 = scmp.eq.s32.totalorder %s15, 0
    %p63 = por %p61, %p62
    %s64 = ssub.s32 %s17, %s31
    %s65 = ssub.s32 %s18, %s27
    %s66 = sor.u32 %s64, %s65
    %p67 = scmp.eq.s32.totalorder %s66, 0
    %s69 = sadd.s32 %s68, 1
    %s70 = scalar_select %p67, %s68, %s69
    %p73 = pneg %p67
    %p74 = scmp.eq.s32.totalorder %s9, 1
    %p75 = por %p73, %p74
    %p76 = scmp.ne.s32.totalorder %s68, %s71
    %p77 = scmp.eq.s32.totalorder %s9, 0
    %p78 = por %p76, %p77
    %p79 = scmp.ne.s32.totalorder %s68, %s71
    %p80 = scmp.eq.s32.totalorder %s14, 1
    %p81 = por %p79, %p80
    %p82 = scmp.ne.s32.totalorder %s71, %s72
    %p83 = scmp.eq.s32.totalorder %s14, 0
    %p84 = por %p82, %p83
    %p85 = scmp.ne.s32.totalorder %s71, %s72
    %p86 = scmp.eq.s32.totalorder %s15, 1
    %p87 = por %p85, %p86
    %p89 = scmp.ne.s32.totalorder %s72, %s88
    %p90 = scmp.eq.s32.totalorder %s15, 0
    %p91 = por %p89, %p90
    %s92 = ssub.s32 %s17, %s31
    %p93 = scmp.eq.s32.totalorder %s92, 0
    %s95 = sadd.s32 %s94, 1
    %s96 = scalar_select %p93, %s94, %s95
    %p99 = pneg %p93
    %p100 = scmp.eq.s32.totalorder %s9, 1
    %p101 = por %p99, %p100
    %p102 = scmp.ne.s32.totalorder %s94, %s97
    %p103 = scmp.eq.s32.totalorder %s9, 0
    %p104 = por %p102, %p103
    %p105 = scmp.ne.s32.totalorder %s94, %s97
    %p106 = scmp.eq.s32.totalorder %s14, 1
    %p107 = por %p105, %p106
    %p108 = scmp.ne.s32.totalorder %s97, %s98
    %p109 = scmp.eq.s32.totalorder %s14, 0
    %p110 = por %p108, %p109
    %p111 = scmp.ne.s32.totalorder %s97, %s98
    %p112 = scmp.eq.s32.totalorder %s15, 1
    %p113 = por %p111, %p112
    %p115 = scmp.ne.s32.totalorder %s98, %s114
    %p116 = scmp.eq.s32.totalorder %s15, 0
    %p117 = por %p115, %p116
    %s118 = ssub.s32 %s16, %s35
    %s119 = ssub.s32 %s17, %s31
    %s120 = sor.u32 %s118, %s119
    %p121 = scmp.eq.s32.totalorder %s120, 0
    %s123 = sadd.s32 %s122, 1
    %s124 = scalar_select %p121, %s122, %s123
    %p127 = pneg %p121
    %p128 = scmp.eq.s32.totalorder %s9, 1
    %p129 = por %p127, %p128
    %p130 = scmp.ne.s32.totalorder %s122, %s125
    %p131 = scmp.eq.s32.totalorder %s9, 0
    %p132 = por %p130, %p131
    %p133 = scmp.ne.s32.totalorder %s122, %s125
    %p134 = scmp.eq.s32.totalorder %s14, 1
    %p135 = por %p133, %p134
    %p136 = scmp.ne.s32.totalorder %s125, %s126
    %p137 = scmp.eq.s32.totalorder %s14, 0
    %p138 = por %p136, %p137
    %p139 = scmp.ne.s32.totalorder %s125, %s126
    %p140 = scmp.eq.s32.totalorder %s15, 1
    %p141 = por %p139, %p140
    %p143 = scmp.ne.s32.totalorder %s126, %s142
    %p144 = scmp.eq.s32.totalorder %s15, 0
    %p145 = por %p143, %p144
    %p146 = scmp.le.s32.totalorder 1, %s9
    %p147 = scmp.lt.s32.totalorder %s9, 3
    %p148 = pnand %p146, %p147
    %p149 = pneg %p148
    // Predicated region
    $region9: #{transformer_forward.15} parent=5 // pred_check
      _
    $region10: #{transformer_forward.15} parent=5 // pred_check_branch
      %151 = sbr.rel (%p148) target = $region12
    $region11: #{transformer_forward.15} parent=5 // pred_region
      %s152 = ssub.s32 %s9, 1
      // Predicated region
      $region13: #{transformer_forward.15} parent=11 // pred_check
        %p153 = pneg %p84
      $region14: #{transformer_forward.15} parent=11 // pred_check_branch
        %155 = sbr.rel (%p153) target = $region16
      $region15: #{transformer_forward.15} parent=11 // pred_region
        %s156 = smul.u32 16, %s20
        %p157 = scmp.lt.s32.totalorder %s156, 15
        %s158 = scalar_select %p157, %s156, 15
        %p159 = scmp.lt.s32.totalorder %s21, 0
        %s160 = scalar_select %p159, %s21, 0
        %s161 = sadd.s32 %s160, %s158
        %s162 = smul.addr %s161, 4
        %s163 = scalar_lea.vmem %s1, %s162
        %s164 = smul.u32 16, %s20
      $region16: #{transformer_forward.15} parent=11 // pred_fallthru
        _
      // Predicated region
      $region17: #{transformer_forward.15} parent=11 // pred_check
        %p165 = pneg %p110
      $region18: #{transformer_forward.15} parent=11 // pred_check_branch
        %167 = sbr.rel (%p165) target = $region20
      $region19: #{transformer_forward.15} parent=11 // pred_region
        %p168 = scmp.lt.s32.totalorder %s20, 0
        %s169 = scalar_select %p168, %s20, 0
        %s170 = scalar_lea.vmem %s2, %s169
      $region20: #{transformer_forward.15} parent=11 // pred_fallthru
        _
    $region12: #{transformer_forward.15} parent=5 // pred_fallthru
      _
    %p171 = scmp.lt.s32.totalorder %s9, 2
    // Predicated region
    $region21: #{transformer_forward.15} parent=5 // pred_check
      %p172 = pneg %p171
    $region22: #{transformer_forward.15} parent=5 // pred_check_branch
      %174 = sbr.rel (%p172) target = $region24
    $region23: #{transformer_forward.15} parent=5 // pred_region
      // Predicated region
      $region25: #{transformer_forward.15} parent=23 // pred_check
        %p175 = pneg %p50
      $region26: #{transformer_forward.15} parent=23 // pred_check_branch
        %177 = sbr.rel (%p175) target = $region28
      $region27: #{transformer_forward.15} parent=23 // pred_region
        %p178 = scmp.lt.s32.totalorder %s16, 1
        %s179 = scalar_select %p178, %s16, 1
        %p180 = scmp.lt.s32.totalorder %s18, 0
        %s181 = scalar_select %p180, %s18, 0
        %s182 = sadd.s32 %s181, %s179
        %s183 = smul.addr %s182, 4
        %s184 = scalar_lea.vmem %s0, %s183
      $region28: #{transformer_forward.15} parent=23 // pred_fallthru
        _
    $region24: #{transformer_forward.15} parent=5 // pred_fallthru
      _
    %p185 = scmp.le.s32.totalorder 1, %s9
    %p186 = scmp.lt.s32.totalorder %s9, 3
    %p187 = pnand %p185, %p186
    %p188 = pneg %p187
    // Predicated region
    $region29: #{transformer_forward.15} parent=5 // pred_check
      _
    $region30: #{transformer_forward.15} parent=5 // pred_check_branch
      %190 = sbr.rel (%p187) target = $region32
    $region31: #{transformer_forward.15} parent=5 // pred_region
      %s191 = ssub.s32 %s9, 1
      %p192 = scmp.lt.s32.totalorder %s19, 1
      %s193 = scalar_select %p192, %s19, 1
      %p194 = scmp.lt.s32.totalorder %s21, 0
      %s195 = scalar_select %p194, %s21, 0
      %s196 = sadd.s32 %s195, %s193
      %s197 = smul.addr %s196, 4
      %s198 = scalar_lea.vmem %s0, %s197
      %p199 = pneg %p56
      %p200 = pneg %p53
      %s201 = smul.u32 16, %s20
      %p202 = scmp.lt.s32.totalorder %s201, 15
      %s203 = scalar_select %p202, %s201, 15
      %p204 = scmp.lt.s32.totalorder %s21, 0
      %s205 = scalar_select %p204, %s21, 0
      %s206 = sadd.s32 %s205, %s203
      %s207 = smul.addr %s206, 4
      %s208 = scalar_lea.vmem %s1, %s207
      %p209 = pneg %p84
      %p210 = pneg %p81
      %p211 = scmp.lt.s32.totalorder %s20, 0
      %s212 = scalar_select %p211, %s20, 0
      %s213 = scalar_lea.vmem %s2, %s212
      %p214 = pneg %p110
      %p215 = pneg %p107
      %p216 = pneg %p138
      %p217 = pneg %p135
      %p218 = scmp.lt.s32.totalorder %s19, 1
      %s219 = scalar_select %p218, %s19, 1
      %p220 = scmp.lt.s32.totalorder %s20, 0
      %s221 = scalar_select %p220, %s20, 0
      %s222 = sadd.s32 %s221, %s219
      %s223 = smul.addr %s222, 8
      %s224 = scalar_lea.vmem %s3, %s223
      %p225 = scmp.lt.s32.totalorder %s19, 1
      %s226 = scalar_select %p225, %s19, 1
      %p227 = scmp.lt.s32.totalorder %s21, 0
      %s228 = scalar_select %p227, %s21, 0
      %s229 = sadd.s32 %s228, %s226
      %s230 = smul.addr %s229, 4
      %s231 = scalar_lea.vmem %s0, %s230
      %s232 = smul.u32 16, %s20
      %p233 = scmp.lt.s32.totalorder %s232, 15
      %s234 = scalar_select %p233, %s232, 15
      %p235 = scmp.lt.s32.totalorder %s21, 0
      %s236 = scalar_select %p235, %s21, 0
      %s237 = sadd.s32 %s236, %s234
      %s238 = smul.addr %s237, 4
      %s239 = scalar_lea.vmem %s1, %s238
      %s240 = smul.u32 16, %s20
      %p241 = scmp.lt.s32.totalorder %s20, 0
      %s242 = scalar_select %p241, %s20, 0
      %s243 = scalar_lea.vmem %s2, %s242
      %p244 = scmp.lt.s32.totalorder %s19, 1
      %s245 = scalar_select %p244, %s19, 1
      %p246 = scmp.lt.s32.totalorder %s20, 0
      %s247 = scalar_select %p246, %s20, 0
      %s248 = sadd.s32 %s247, %s245
      %s249 = smul.addr %s248, 8
      %s250 = scalar_lea.vmem %s3, %s249
      %p251 = scmp.eq.s32.totalorder %s21, 0
      // Predicated region
      $region33: #{transformer_forward.15} parent=31 // pred_check
        %p252 = pneg %p251
      $region34: #{transformer_forward.15} parent=31 // pred_check_branch
        %254 = sbr.rel (%p252) target = $region36
      $region35: #{transformer_forward.15} parent=31 // pred_region
        %255 = vst [vmem:[#allocation2] sm:$0xff] 0.0
      $region36: #{transformer_forward.15} parent=31 // pred_fallthru
        _
      %v256 = vld [vmem:[#allocation2] sm:$0xff]
      %v257 = vld [vmem:[%s231] sm:$0xf]
      %v258 = vld [vmem:[%s239] sm:$0xf]
      %v259 = vld [vmem:[%s239 + $0x4] sm:$0xf]
      %v260 = vld [vmem:[%s239 + $0x8] sm:$0xf]
      %v261 = vld [vmem:[%s239 + $0xc] sm:$0xf]
      %v262 = vld [vmem:[%s239 + $0x10] sm:$0xf]
      %v263 = vld [vmem:[%s239 + $0x14] sm:$0xf]
      %v264 = vld [vmem:[%s239 + $0x18] sm:$0xf]
      %v265 = vld [vmem:[%s239 + $0x1c] sm:$0xf]
      %v266 = vld [vmem:[%s239 + $0x20] sm:$0xf]
      %v267 = vld [vmem:[%s239 + $0x24] sm:$0xf]
      %v268 = vld [vmem:[%s239 + $0x28] sm:$0xf]
      %v269 = vld [vmem:[%s239 + $0x2c] sm:$0xf]
      %v270 = vld [vmem:[%s239 + $0x30] sm:$0xf]
      %v271 = vld [vmem:[%s239 + $0x34] sm:$0xf]
      %v272 = vld [vmem:[%s239 + $0x38] sm:$0xf]
      %v273 = vld [vmem:[%s239 + $0x3c] sm:$0xf]
      %v290 = vunpack.c.l.b16 %v258
      %v291 = vunpack.c.l.b16 %v259
      %v292 = vunpack.c.l.b16 %v260
      %v293 = vunpack.c.l.b16 %v261
      %v294 = vunpack.c.l.b16 %v262
      %v295 = vunpack.c.l.b16 %v263
      %v296 = vunpack.c.l.b16 %v264
      %v297 = vunpack.c.l.b16 %v265
      %v298 = vunpack.c.l.b16 %v266
      %v299 = vunpack.c.l.b16 %v267
      %v300 = vunpack.c.l.b16 %v268
      %v301 = vunpack.c.l.b16 %v269
      %v302 = vunpack.c.l.b16 %v270
      %v303 = vunpack.c.l.b16 %v271
      %v304 = vunpack.c.l.b16 %v272
      %v305 = vunpack.c.l.b16 %v273
      %v306 = vpack.c.b16 %v291, %v290
      %v307 = vpack.c.b16 %v293, %v292
      %v308 = vpack.c.b16 %v295, %v294
      %v309 = vpack.c.b16 %v297, %v296
      %v310 = vpack.c.b16 %v299, %v298
      %v311 = vpack.c.b16 %v301, %v300
      %v312 = vpack.c.b16 %v303, %v302
      %v313 = vpack.c.b16 %v305, %v304
      %vm314 = vcmask 261120
      %v316 = vsel %vm314, %v257, 0
      %v319 = vsel %vm314, %v306, 0
      %v322 = vsel %vm314, %v307, 0
      %v325 = vsel %vm314, %v308, 0
      %v328 = vsel %vm314, %v309, 0
      %v331 = vsel %vm314, %v310, 0
      %v334 = vsel %vm314, %v311, 0
      %v337 = vsel %vm314, %v312, 0
      %v340 = vsel %vm314, %v313, 0
      %342 = vmatpush.bf16.xpose.msra.mxu0 %v340
      %343 = vmatpush.bf16.xpose.msra.mxu0 %v337
      %344 = vmatpush.bf16.xpose.msra.mxu0 %v334
      %345 = vmatpush.bf16.xpose.msra.mxu0 %v331
      %346 = vmatpush.bf16.xpose.msra.mxu0 %v328
      %347 = vmatpush.bf16.xpose.msra.mxu0 %v325
      %348 = vmatpush.bf16.xpose.msra.mxu0 %v322
      %349 = vmatpush.bf16.xpose.msra.mxu0 %v319
      %350 = vmatmul.bf16.gmra.mxu0 %v316
      %v351 = vpop.f32.mrf.mxu0
      %v352 = vadd.f32 0.0, %v351
      %v353 = vpop.f32.mrf.mxu0
      %354 = vdwg.mxu0
      %v355 = vadd.f32 %v256, %v352
      %356 = vst [vmem:[#allocation2] sm:$0xff] %v355
      // Predicated region
      $region37: #{transformer_forward.15} parent=31 // pred_check
        %p357 = pneg %p251
      $region38: #{transformer_forward.15} parent=31 // pred_check_branch
        %359 = sbr.rel (%p357) target = $region40
      $region39: #{transformer_forward.15} parent=31 // pred_region
        %v360 = vld [vmem:[#allocation2] sm:$0xff]
        %v361 = vld [vmem:[%s243] sm:$0x1]
        %v363 = vperm.slane %v361, 0
        %v365 = vadd.f32 %v360, %v363
        %366 = vst [vmem:[%s250] sm:$0xff] %v365
      $region40: #{transformer_forward.15} parent=31 // pred_fallthru
        _
      %p367 = scmp.lt.s32.totalorder %s19, 1
      %s368 = scalar_select %p367, %s19, 1
      %p369 = scmp.lt.s32.totalorder %s20, 0
      %s370 = scalar_select %p369, %s20, 0
      %s371 = sadd.s32 %s370, %s368
      %s372 = smul.addr %s371, 8
      %s373 = scalar_lea.vmem %s3, %s372
      // Predicated region
      $region41: #{transformer_forward.15} parent=31 // pred_check
        %p374 = pneg %p135
      $region42: #{transformer_forward.15} parent=31 // pred_check_branch
        %376 = sbr.rel (%p374) target = $region44
      $region43: #{transformer_forward.15} parent=31 // pred_region
        _
      $region44: #{transformer_forward.15} parent=31 // pred_fallthru
        _
    $region32: #{transformer_forward.15} parent=5 // pred_fallthru
      _
    %p377 = scmp.le.s32.totalorder 2, %s9
    // Predicated region
    $region45: #{transformer_forward.15} parent=5 // pred_check
      %p378 = pneg %p377
    $region46: #{transformer_forward.15} parent=5 // pred_check_branch
      %380 = sbr.rel (%p378) target = $region48
    $region47: #{transformer_forward.15} parent=5 // pred_region
      %s381 = ssub.s32 %s9, 2
      // Predicated region
      $region49: #{transformer_forward.15} parent=47 // pred_check
        %p382 = pneg %p141
      $region50: #{transformer_forward.15} parent=47 // pred_check_branch
        %384 = sbr.rel (%p382) target = $region52
      $region51: #{transformer_forward.15} parent=47 // pred_region
        %p385 = scmp.lt.s32.totalorder %s22, 1
        %s386 = scalar_select %p385, %s22, 1
        %p387 = scmp.lt.s32.totalorder %s23, 0
        %s388 = scalar_select %p387, %s23, 0
        %s389 = sadd.s32 %s388, %s386
        %s390 = smul.addr %s389, 8
        %s391 = scalar_lea.vmem %s3, %s390
      $region52: #{transformer_forward.15} parent=47 // pred_fallthru
        _
    $region48: #{transformer_forward.15} parent=5 // pred_fallthru
      _
  $region6: #{transformer_forward.15} parent=0 // loop_footer
    %s13 = sadd.s32 1, %s9
  $region7: #{transformer_forward.15} parent=0 // loop_footer_branch
    %8 = sbr.rel target = $region3
  $region8: #{transformer_forward.15} parent=0 // loop_exit
    _

// kernel: transformer_forward.11
$region0: #{transformer_forward.11}
  #allocation0 [shape = 'u32[]', space=smem, size = 0x4, offset = 0x4, fixed_abs, tag = 'smem constant byte address 0x4 - core index']
  #allocation1 [shape = 'u32[72,128]{1,0:T(1,128)}', space=vmem, size = 0x9000, scoped, tag = 'internal scratch']
  %s0 = inlined_call_operand.vmem [shape: bf16[2,8,32], index: 0, kind: input, shape index: {}]
  %s1 = inlined_call_operand.vmem [shape: bf16[2048,32], index: 1, kind: input, shape index: {}]
  %s2 = inlined_call_operand.vmem [shape: f32[1,2048], index: 2, kind: input, shape index: {}]
  %s3 = inlined_call_operand.vmem [shape: bf16[32,2048], index: 3, kind: input, shape index: {}]
  %s4 = inlined_call_operand.vmem [shape: f32[1,32], index: 4, kind: input, shape index: {}]
  %s5 = inlined_call_operand.vmem [shape: f32[1,32], index: 5, kind: input, shape index: {}]
  %s6 = inlined_call_operand.vmem [shape: f32[1,32], index: 6, kind: input, shape index: {}]
  %s7 = inlined_call_operand.vmem [shape: bf16[2,8,32], index: 7, kind: output, shape index: {}]
  %s8 = sld [smem:[#allocation0]]
  $region61: #{transformer_forward.11} parent=0
    _
  %s10 = ssub.s32 1, %s8
  %s11 = scalar_select 0, %s10, %s8
  loop: start=0, step=1, limit=4
  $region2: #{transformer_forward.11} parent=0 // loop_pre_header
    _
  $region3: #{transformer_forward.11} parent=0 // loop_header
    %s13 = sphi 0, %s17
    %p14 = scmp.ge.s32.totalorder %s13, 4
    %s23 = sphi 0, %s25
    %s26 = sphi 0, %s23
    %s27 = sphi 0, %s26
    %s43 = sphi 0, %s27
    %s47 = sphi 0, %s47
    %s49 = sphi 0, %s47
    %s50 = sphi 0, %s49
    %s64 = sphi 0, %s50
    %s68 = sphi 0, %s68
    %s70 = sphi 0, %s68
    %s71 = sphi 0, %s70
    %s85 = sphi 0, %s71
    %s89 = sphi 0, %s89
    %s91 = sphi 0, %s89
    %s92 = sphi 0, %s91
    %s106 = sphi 0, %s92
    %s110 = sphi 0, %s110
    %s112 = sphi 0, %s110
    %s113 = sphi 0, %s112
    %s127 = sphi 0, %s113
    %s131 = sphi 0, %s131
    %s133 = sphi 0, %s131
    %s134 = sphi 0, %s133
    %s148 = sphi 0, %s134
    %s152 = sphi 0, %s152
    %s154 = sphi 0, %s152
    %s155 = sphi 0, %s154
    %s169 = sphi 0, %s155
    %s175 = sphi 0, %s177
    %s178 = sphi 0, %s175
    %s179 = sphi 0, %s178
    %s195 = sphi 0, %s179
  $region4: #{transformer_forward.11} parent=0 // loop_header_branch
    %16 = sbr.rel (%p14) target = $region8
  $region5: #{transformer_forward.11} parent=0 // loop_body
    %s18 = ssub.s32 %s13, 1
    %s19 = ssub.s32 %s13, 2
    %s20 = sadd.s32 %s13, 1
    %s21 = ssub.s32 %s13, %s20
    %p22 = scmp.eq.s32.totalorder %s21, 0
    %s24 = sadd.s32 %s23, 1
    %s25 = scalar_select %p22, %s23, %s24
    %p28 = pneg %p22
    %p29 = scmp.eq.s32.totalorder %s13, 1
    %p30 = por %p28, %p29
    %p31 = scmp.ne.s32.totalorder %s23, %s26
    %p32 = scmp.eq.s32.totalorder %s13, 0
    %p33 = por %p31, %p32
    %p34 = scmp.ne.s32.totalorder %s23, %s26
    %p35 = scmp.eq.s32.totalorder %s18, 1
    %p36 = por %p34, %p35
    %p37 = scmp.ne.s32.totalorder %s26, %s27
    %p38 = scmp.eq.s32.totalorder %s18, 0
    %p39 = por %p37, %p38
    %p40 = scmp.ne.s32.totalorder %s26, %s27
    %p41 = scmp.eq.s32.totalorder %s19, 1
    %p42 = por %p40, %p41
    %p44 = scmp.ne.s32.totalorder %s27, %s43
    %p45 = scmp.eq.s32.totalorder %s19, 0
    %p46 = por %p44, %p45
    %s48 = sadd.s32 %s47, 1
    %p51 = scmp.eq.s32.totalorder %s13, 1
    %p52 = scmp.ne.s32.totalorder %s47, %s49
    %p53 = scmp.eq.s32.totalorder %s13, 0
    %p54 = por %p52, %p53
    %p55 = scmp.ne.s32.totalorder %s47, %s49
    %p56 = scmp.eq.s32.totalorder %s18, 1
    %p57 = por %p55, %p56
    %p58 = scmp.ne.s32.totalorder %s49, %s50
    %p59 = scmp.eq.s32.totalorder %s18, 0
    %p60 = por %p58, %p59
    %p61 = scmp.ne.s32.totalorder %s49, %s50
    %p62 = scmp.eq.s32.totalorder %s19, 1
    %p63 = por %p61, %p62
    %p65 = scmp.ne.s32.totalorder %s50, %s64
    %p66 = scmp.eq.s32.totalorder %s19, 0
    %p67 = por %p65, %p66
    %s69 = sadd.s32 %s68, 1
    %p72 = scmp.eq.s32.totalorder %s13, 1
    %p73 = scmp.ne.s32.totalorder %s68, %s70
    %p74 = scmp.eq.s32.totalorder %s13, 0
    %p75 = por %p73, %p74
    %p76 = scmp.ne.s32.totalorder %s68, %s70
    %p77 = scmp.eq.s32.totalorder %s18, 1
    %p78 = por %p76, %p77
    %p79 = scmp.ne.s32.totalorder %s70, %s71
    %p80 = scmp.eq.s32.totalorder %s18, 0
    %p81 = por %p79, %p80
    %p82 = scmp.ne.s32.totalorder %s70, %s71
    %p83 = scmp.eq.s32.totalorder %s19, 1
    %p84 = por %p82, %p83
    %p86 = scmp.ne.s32.totalorder %s71, %s85
    %p87 = scmp.eq.s32.totalorder %s19, 0
    %p88 = por %p86, %p87
    %s90 = sadd.s32 %s89, 1
    %p93 = scmp.eq.s32.totalorder %s13, 1
    %p94 = scmp.ne.s32.totalorder %s89, %s91
    %p95 = scmp.eq.s32.totalorder %s13, 0
    %p96 = por %p94, %p95
    %p97 = scmp.ne.s32.totalorder %s89, %s91
    %p98 = scmp.eq.s32.totalorder %s18, 1
    %p99 = por %p97, %p98
    %p100 = scmp.ne.s32.totalorder %s91, %s92
    %p101 = scmp.eq.s32.totalorder %s18, 0
    %p102 = por %p100, %p101
    %p103 = scmp.ne.s32.totalorder %s91, %s92
    %p104 = scmp.eq.s32.totalorder %s19, 1
    %p105 = por %p103, %p104
    %p107 = scmp.ne.s32.totalorder %s92, %s106
    %p108 = scmp.eq.s32.totalorder %s19, 0
    %p109 = por %p107, %p108
    %s111 = sadd.s32 %s110, 1
    %p114 = scmp.eq.s32.totalorder %s13, 1
    %p115 = scmp.ne.s32.totalorder %s110, %s112
    %p116 = scmp.eq.s32.totalorder %s13, 0
    %p117 = por %p115, %p116
    %p118 = scmp.ne.s32.totalorder %s110, %s112
    %p119 = scmp.eq.s32.totalorder %s18, 1
    %p120 = por %p118, %p119
    %p121 = scmp.ne.s32.totalorder %s112, %s113
    %p122 = scmp.eq.s32.totalorder %s18, 0
    %p123 = por %p121, %p122
    %p124 = scmp.ne.s32.totalorder %s112, %s113
    %p125 = scmp.eq.s32.totalorder %s19, 1
    %p126 = por %p124, %p125
    %p128 = scmp.ne.s32.totalorder %s113, %s127
    %p129 = scmp.eq.s32.totalorder %s19, 0
    %p130 = por %p128, %p129
    %s132 = sadd.s32 %s131, 1
    %p135 = scmp.eq.s32.totalorder %s13, 1
    %p136 = scmp.ne.s32.totalorder %s131, %s133
    %p137 = scmp.eq.s32.totalorder %s13, 0
    %p138 = por %p136, %p137
    %p139 = scmp.ne.s32.totalorder %s131, %s133
    %p140 = scmp.eq.s32.totalorder %s18, 1
    %p141 = por %p139, %p140
    %p142 = scmp.ne.s32.totalorder %s133, %s134
    %p143 = scmp.eq.s32.totalorder %s18, 0
    %p144 = por %p142, %p143
    %p145 = scmp.ne.s32.totalorder %s133, %s134
    %p146 = scmp.eq.s32.totalorder %s19, 1
    %p147 = por %p145, %p146
    %p149 = scmp.ne.s32.totalorder %s134, %s148
    %p150 = scmp.eq.s32.totalorder %s19, 0
    %p151 = por %p149, %p150
    %s153 = sadd.s32 %s152, 1
    %p156 = scmp.eq.s32.totalorder %s13, 1
    %p157 = scmp.ne.s32.totalorder %s152, %s154
    %p158 = scmp.eq.s32.totalorder %s13, 0
    %p159 = por %p157, %p158
    %p160 = scmp.ne.s32.totalorder %s152, %s154
    %p161 = scmp.eq.s32.totalorder %s18, 1
    %p162 = por %p160, %p161
    %p163 = scmp.ne.s32.totalorder %s154, %s155
    %p164 = scmp.eq.s32.totalorder %s18, 0
    %p165 = por %p163, %p164
    %p166 = scmp.ne.s32.totalorder %s154, %s155
    %p167 = scmp.eq.s32.totalorder %s19, 1
    %p168 = por %p166, %p167
    %p170 = scmp.ne.s32.totalorder %s155, %s169
    %p171 = scmp.eq.s32.totalorder %s19, 0
    %p172 = por %p170, %p171
    %s173 = ssub.s32 %s13, %s20
    %p174 = scmp.eq.s32.totalorder %s173, 0
    %s176 = sadd.s32 %s175, 1
    %s177 = scalar_select %p174, %s175, %s176
    %p180 = pneg %p174
    %p181 = scmp.eq.s32.totalorder %s13, 1
    %p182 = por %p180, %p181
    %p183 = scmp.ne.s32.totalorder %s175, %s178
    %p184 = scmp.eq.s32.totalorder %s13, 0
    %p185 = por %p183, %p184
    %p186 = scmp.ne.s32.totalorder %s175, %s178
    %p187 = scmp.eq.s32.totalorder %s18, 1
    %p188 = por %p186, %p187
    %p189 = scmp.ne.s32.totalorder %s178, %s179
    %p190 = scmp.eq.s32.totalorder %s18, 0
    %p191 = por %p189, %p190
    %p192 = scmp.ne.s32.totalorder %s178, %s179
    %p193 = scmp.eq.s32.totalorder %s19, 1
    %p194 = por %p192, %p193
    %p196 = scmp.ne.s32.totalorder %s179, %s195
    %p197 = scmp.eq.s32.totalorder %s19, 0
    %p198 = por %p196, %p197
    %p199 = scmp.le.s32.totalorder 1, %s13
    %p200 = scmp.lt.s32.totalorder %s13, 3
    %p201 = pnand %p199, %p200
    %p202 = pneg %p201
    // Predicated region
    $region9: #{transformer_forward.11} parent=5 // pred_check
      _
    $region10: #{transformer_forward.11} parent=5 // pred_check_branch
      %204 = sbr.rel (%p201) target = $region12
    $region11: #{transformer_forward.11} parent=5 // pred_region
      %s205 = ssub.s32 %s13, 1
      // Predicated region
      $region13: #{transformer_forward.11} parent=11 // pred_check
        %p206 = pneg %p60
      $region14: #{transformer_forward.11} parent=11 // pred_check_branch
        %208 = sbr.rel (%p206) target = $region16
      $region15: #{transformer_forward.11} parent=11 // pred_region
        _
      $region16: #{transformer_forward.11} parent=11 // pred_fallthru
        _
      // Predicated region
      $region17: #{transformer_forward.11} parent=11 // pred_check
        %p209 = pneg %p81
      $region18: #{transformer_forward.11} parent=11 // pred_check_branch
        %211 = sbr.rel (%p209) target = $region20
      $region19: #{transformer_forward.11} parent=11 // pred_region
        _
      $region20: #{transformer_forward.11} parent=11 // pred_fallthru
        _
      // Predicated region
      $region21: #{transformer_forward.11} parent=11 // pred_check
        %p212 = pneg %p102
      $region22: #{transformer_forward.11} parent=11 // pred_check_branch
        %214 = sbr.rel (%p212) target = $region24
      $region23: #{transformer_forward.11} parent=11 // pred_region
        _
      $region24: #{transformer_forward.11} parent=11 // pred_fallthru
        _
      // Predicated region
      $region25: #{transformer_forward.11} parent=11 // pred_check
        %p215 = pneg %p123
      $region26: #{transformer_forward.11} parent=11 // pred_check_branch
        %217 = sbr.rel (%p215) target = $region28
      $region27: #{transformer_forward.11} parent=11 // pred_region
        _
      $region28: #{transformer_forward.11} parent=11 // pred_fallthru
        _
      // Predicated region
      $region29: #{transformer_forward.11} parent=11 // pred_check
        %p218 = pneg %p144
      $region30: #{transformer_forward.11} parent=11 // pred_check_branch
        %220 = sbr.rel (%p218) target = $region32
      $region31: #{transformer_forward.11} parent=11 // pred_region
        _
      $region32: #{transformer_forward.11} parent=11 // pred_fallthru
        _
      // Predicated region
      $region33: #{transformer_forward.11} parent=11 // pred_check
        %p221 = pneg %p165
      $region34: #{transformer_forward.11} parent=11 // pred_check_branch
        %223 = sbr.rel (%p221) target = $region36
      $region35: #{transformer_forward.11} parent=11 // pred_region
        _
      $region36: #{transformer_forward.11} parent=11 // pred_fallthru
        _
    $region12: #{transformer_forward.11} parent=5 // pred_fallthru
      _
    %p224 = scmp.lt.s32.totalorder %s13, 2
    // Predicated region
    $region37: #{transformer_forward.11} parent=5 // pred_check
      %p225 = pneg %p224
    $region38: #{transformer_forward.11} parent=5 // pred_check_branch
      %227 = sbr.rel (%p225) target = $region40
    $region39: #{transformer_forward.11} parent=5 // pred_region
      // Predicated region
      $region41: #{transformer_forward.11} parent=39 // pred_check
        %p228 = pneg %p33
      $region42: #{transformer_forward.11} parent=39 // pred_check_branch
        %230 = sbr.rel (%p228) target = $region44
      $region43: #{transformer_forward.11} parent=39 // pred_region
        %p231 = scmp.lt.s32.totalorder %s13, 1
        %s232 = scalar_select %p231, %s13, 1
        %s233 = smul.addr %s232, 4
        %s234 = scalar_lea.vmem %s0, %s233
      $region44: #{transformer_forward.11} parent=39 // pred_fallthru
        _
    $region40: #{transformer_forward.11} parent=5 // pred_fallthru
      _
    %p235 = scmp.le.s32.totalorder 1, %s13
    %p236 = scmp.lt.s32.totalorder %s13, 3
    %p237 = pnand %p235, %p236
    %p238 = pneg %p237
    // Predicated region
    $region45: #{transformer_forward.11} parent=5 // pred_check
      _
    $region46: #{transformer_forward.11} parent=5 // pred_check_branch
      %240 = sbr.rel (%p237) target = $region48
    $region47: #{transformer_forward.11} parent=5 // pred_region
      %s241 = ssub.s32 %s13, 1
      %p242 = scmp.lt.s32.totalorder %s18, 1
      %s243 = scalar_select %p242, %s18, 1
      %s244 = smul.addr %s243, 4
      %s245 = scalar_lea.vmem %s0, %s244
      %p246 = pneg %p39
      %p247 = pneg %p36
      %p248 = pneg %p60
      %p249 = pneg %p57
      %p250 = pneg %p81
      %p251 = pneg %p78
      %p252 = pneg %p102
      %p253 = pneg %p99
      %p254 = pneg %p123
      %p255 = pneg %p120
      %p256 = pneg %p144
      %p257 = pneg %p141
      %p258 = pneg %p165
      %p259 = pneg %p162
      %p260 = pneg %p191
      %p261 = pneg %p188
      %p262 = scmp.lt.s32.totalorder %s18, 1
      %s263 = scalar_select %p262, %s18, 1
      %s264 = smul.addr %s263, 4
      %s265 = scalar_lea.vmem %s7, %s264
      %p266 = scmp.lt.s32.totalorder %s18, 1
      %s267 = scalar_select %p266, %s18, 1
      %s268 = smul.addr %s267, 4
      %s269 = scalar_lea.vmem %s0, %s268
      %p270 = scmp.lt.s32.totalorder %s18, 1
      %s271 = scalar_select %p270, %s18, 1
      %s272 = smul.addr %s271, 4
      %s273 = scalar_lea.vmem %s7, %s272
      %v275 = vld [vmem:[%s269] sm:$0xf]
      %v276 = vld [vmem:[%s1] sm:$0xf]
      %v277 = vld [vmem:[%s1 + $0x4] sm:$0xf]
      %v278 = vld [vmem:[%s1 + $0x8] sm:$0xf]
      %v279 = vld [vmem:[%s1 + $0xc] sm:$0xf]
      %v280 = vld [vmem:[%s1 + $0x10] sm:$0xf]
      %v281 = vld [vmem:[%s1 + $0x14] sm:$0xf]
      %v282 = vld [vmem:[%s1 + $0x18] sm:$0xf]
      %v283 = vld [vmem:[%s1 + $0x1c] sm:$0xf]
      %v284 = vld [vmem:[%s1 + $0x20] sm:$0xf]
      %v285 = vld [vmem:[%s1 + $0x24] sm:$0xf]
      %v286 = vld [vmem:[%s1 + $0x28] sm:$0xf]
      %v287 = vld [vmem:[%s1 + $0x2c] sm:$0xf]
      %v288 = vld [vmem:[%s1 + $0x30] sm:$0xf]
      %v289 = vld [vmem:[%s1 + $0x34] sm:$0xf]
      %v290 = vld [vmem:[%s1 + $0x38] sm:$0xf]
      %v291 = vld [vmem:[%s1 + $0x3c] sm:$0xf]
      %v292 = vld [vmem:[%s1 + $0x40] sm:$0xf]
      %v293 = vld [vmem:[%s1 + $0x44] sm:$0xf]
      %v294 = vld [vmem:[%s1 + $0x48] sm:$0xf]
      %v295 = vld [vmem:[%s1 + $0x4c] sm:$0xf]
      %v296 = vld [vmem:[%s1 + $0x50] sm:$0xf]
      %v297 = vld [vmem:[%s1 + $0x54] sm:$0xf]
      %v298 = vld [vmem:[%s1 + $0x58] sm:$0xf]
      %v299 = vld [vmem:[%s1 + $0x5c] sm:$0xf]
      %v300 = vld [vmem:[%s1 + $0x60] sm:$0xf]
      %v301 = vld [vmem:[%s1 + $0x64] sm:$0xf]
      %v302 = vld [vmem:[%s1 + $0x68] sm:$0xf]
      %v303 = vld [vmem:[%s1 + $0x6c] sm:$0xf]
      %v304 = vld [vmem:[%s1 + $0x70] sm:$0xf]
      %v305 = vld [vmem:[%s1 + $0x74] sm:$0xf]
      %v306 = vld [vmem:[%s1 + $0x78] sm:$0xf]
      %v307 = vld [vmem:[%s1 + $0x7c] sm:$0xf]
      %v308 = vld [vmem:[%s1 + $0x80] sm:$0xf]
      %v309 = vld [vmem:[%s1 + $0x84] sm:$0xf]
      %v310 = vld [vmem:[%s1 + $0x88] sm:$0xf]
      %v311 = vld [vmem:[%s1 + $0x8c] sm:$0xf]
      %v312 = vld [vmem:[%s1 + $0x90] sm:$0xf]
      %v313 = vld [vmem:[%s1 + $0x94] sm:$0xf]
      %v314 = vld [vmem:[%s1 + $0x98] sm:$0xf]
      %v315 = vld [vmem:[%s1 + $0x9c] sm:$0xf]
      %v316 = vld [vmem:[%s1 + $0xa0] sm:$0xf]
      %v317 = vld [vmem:[%s1 + $0xa4] sm:$0xf]
      %v318 = vld [vmem:[%s1 + $0xa8] sm:$0xf]
      %v319 = vld [vmem:[%s1 + $0xac] sm:$0xf]
      %v320 = vld [vmem:[%s1 + $0xb0] sm:$0xf]
      %v321 = vld [vmem:[%s1 + $0xb4] sm:$0xf]
      %v322 = vld [vmem:[%s1 + $0xb8] sm:$0xf]
      %v323 = vld [vmem:[%s1 + $0xbc] sm:$0xf]
      %v324 = vld [vmem:[%s1 + $0xc0] sm:$0xf]
      %v325 = vld [vmem:[%s1 + $0xc4] sm:$0xf]
      %v326 = vld [vmem:[%s1 + $0xc8] sm:$0xf]
      %v327 = vld [vmem:[%s1 + $0xcc] sm:$0xf]
      %v328 = vld [vmem:[%s1 + $0xd0] sm:$0xf]
      %v329 = vld [vmem:[%s1 + $0xd4] sm:$0xf]
      %v330 = vld [vmem:[%s1 + $0xd8] sm:$0xf]
      %v331 = vld [vmem:[%s1 + $0xdc] sm:$0xf]
      %v332 = vld [vmem:[%s1 + $0xe0] sm:$0xf]
      %v333 = vld [vmem:[%s1 + $0xe4] sm:$0xf]
      %v334 = vld [vmem:[%s1 + $0xe8] sm:$0xf]
      %v335 = vld [vmem:[%s1 + $0xec] sm:$0xf]
      %v336 = vld [vmem:[%s1 + $0xf0] sm:$0xf]
      %v337 = vld [vmem:[%s1 + $0xf4] sm:$0xf]
      %v338 = vld [vmem:[%s1 + $0xf8] sm:$0xf]
      %v339 = vld [vmem:[%s1 + $0xfc] sm:$0xf]
      %v340 = vld [vmem:[%s1 + $0x100] sm:$0xf]
      %v341 = vld [vmem:[%s1 + $0x104] sm:$0xf]
      %v342 = vld [vmem:[%s1 + $0x108] sm:$0xf]
      %v343 = vld [vmem:[%s1 + $0x10c] sm:$0xf]
      %v344 = vld [vmem:[%s1 + $0x110] sm:$0xf]
      %v345 = vld [vmem:[%s1 + $0x114] sm:$0xf]
      %v346 = vld [vmem:[%s1 + $0x118] sm:$0xf]
      %v347 = vld [vmem:[%s1 + $0x11c] sm:$0xf]
      %v348 = vld [vmem:[%s1 + $0x120] sm:$0xf]
      %v349 = vld [vmem:[%s1 + $0x124] sm:$0xf]
      %v350 = vld [vmem:[%s1 + $0x128] sm:$0xf]
      %v351 = vld [vmem:[%s1 + $0x12c] sm:$0xf]
      %v352 = vld [vmem:[%s1 + $0x130] sm:$0xf]
      %v353 = vld [vmem:[%s1 + $0x134] sm:$0xf]
      %v354 = vld [vmem:[%s1 + $0x138] sm:$0xf]
      %v355 = vld [vmem:[%s1 + $0x13c] sm:$0xf]
      %v356 = vld [vmem:[%s1 + $0x140] sm:$0xf]
      %v357 = vld [vmem:[%s1 + $0x144] sm:$0xf]
      %v358 = vld [vmem:[%s1 + $0x148] sm:$0xf]
      %v359 = vld [vmem:[%s1 + $0x14c] sm:$0xf]
      %v360 = vld [vmem:[%s1 + $0x150] sm:$0xf]
      %v361 = vld [vmem:[%s1 + $0x154] sm:$0xf]
      %v362 = vld [vmem:[%s1 + $0x158] sm:$0xf]
      %v363 = vld [vmem:[%s1 + $0x15c] sm:$0xf]
      %v364 = vld [vmem:[%s1 + $0x160] sm:$0xf]
      %v365 = vld [vmem:[%s1 + $0x164] sm:$0xf]
      %v366 = vld [vmem:[%s1 + $0x168] sm:$0xf]
      %v367 = vld [vmem:[%s1 + $0x16c] sm:$0xf]
      %v368 = vld [vmem:[%s1 + $0x170] sm:$0xf]
      %v369 = vld [vmem:[%s1 + $0x174] sm:$0xf]
      %v370 = vld [vmem:[%s1 + $0x178] sm:$0xf]
      %v371 = vld [vmem:[%s1 + $0x17c] sm:$0xf]
      %v372 = vld [vmem:[%s1 + $0x180] sm:$0xf]
      %v373 = vld [vmem:[%s1 + $0x184] sm:$0xf]
      %v374 = vld [vmem:[%s1 + $0x188] sm:$0xf]
      %v375 = vld [vmem:[%s1 + $0x18c] sm:$0xf]
      %v376 = vld [vmem:[%s1 + $0x190] sm:$0xf]
      %v377 = vld [vmem:[%s1 + $0x194] sm:$0xf]
      %v378 = vld [vmem:[%s1 + $0x198] sm:$0xf]
      %v379 = vld [vmem:[%s1 + $0x19c] sm:$0xf]
      %v380 = vld [vmem:[%s1 + $0x1a0] sm:$0xf]
      %v381 = vld [vmem:[%s1 + $0x1a4] sm:$0xf]
      %v382 = vld [vmem:[%s1 + $0x1a8] sm:$0xf]
      %v383 = vld [vmem:[%s1 + $0x1ac] sm:$0xf]
      %v384 = vld [vmem:[%s1 + $0x1b0] sm:$0xf]
      %v385 = vld [vmem:[%s1 + $0x1b4] sm:$0xf]
      %v386 = vld [vmem:[%s1 + $0x1b8] sm:$0xf]
      %v387 = vld [vmem:[%s1 + $0x1bc] sm:$0xf]
      %v388 = vld [vmem:[%s1 + $0x1c0] sm:$0xf]
      %v389 = vld [vmem:[%s1 + $0x1c4] sm:$0xf]
      %v390 = vld [vmem:[%s1 + $0x1c8] sm:$0xf]
      %v391 = vld [vmem:[%s1 + $0x1cc] sm:$0xf]
      %v392 = vld [vmem:[%s1 + $0x1d0] sm:$0xf]
      %v393 = vld [vmem:[%s1 + $0x1d4] sm:$0xf]
      %v394 = vld [vmem:[%s1 + $0x1d8] sm:$0xf]
      %v395 = vld [vmem:[%s1 + $0x1dc] sm:$0xf]
      %v396 = vld [vmem:[%s1 + $0x1e0] sm:$0xf]
      %v397 = vld [vmem:[%s1 + $0x1e4] sm:$0xf]
      %v398 = vld [vmem:[%s1 + $0x1e8] sm:$0xf]
      %v399 = vld [vmem:[%s1 + $0x1ec] sm:$0xf]
      %v400 = vld [vmem:[%s1 + $0x1f0] sm:$0xf]
      %v401 = vld [vmem:[%s1 + $0x1f4] sm:$0xf]
      %v402 = vld [vmem:[%s1 + $0x1f8] sm:$0xf]
      %v403 = vld [vmem:[%s1 + $0x1fc] sm:$0xf]
      %v404 = vld [vmem:[%s1 + $0x200] sm:$0xf]
      %v405 = vld [vmem:[%s1 + $0x204] sm:$0xf]
      %v406 = vld [vmem:[%s1 + $0x208] sm:$0xf]
      %v407 = vld [vmem:[%s1 + $0x20c] sm:$0xf]
      %v408 = vld [vmem:[%s1 + $0x210] sm:$0xf]
      %v409 = vld [vmem:[%s1 + $0x214] sm:$0xf]
      %v410 = vld [vmem:[%s1 + $0x218] sm:$0xf]
      %v411 = vld [vmem:[%s1 + $0x21c] sm:$0xf]
      %v412 = vld [vmem:[%s1 + $0x220] sm:$0xf]
      %v413 = vld [vmem:[%s1 + $0x224] sm:$0xf]
      %v414 = vld [vmem:[%s1 + $0x228] sm:$0xf]
      %v415 = vld [vmem:[%s1 + $0x22c] sm:$0xf]
      %v416 = vld [vmem:[%s1 + $0x230] sm:$0xf]
      %v417 = vld [vmem:[%s1 + $0x234] sm:$0xf]
      %v418 = vld [vmem:[%s1 + $0x238] sm:$0xf]
      %v419 = vld [vmem:[%s1 + $0x23c] sm:$0xf]
      %v420 = vld [vmem:[%s1 + $0x240] sm:$0xf]
      %v421 = vld [vmem:[%s1 + $0x244] sm:$0xf]
      %v422 = vld [vmem:[%s1 + $0x248] sm:$0xf]
      %v423 = vld [vmem:[%s1 + $0x24c] sm:$0xf]
      %v424 = vld [vmem:[%s1 + $0x250] sm:$0xf]
      %v425 = vld [vmem:[%s1 + $0x254] sm:$0xf]
      %v426 = vld [vmem:[%s1 + $0x258] sm:$0xf]
      %v427 = vld [vmem:[%s1 + $0x25c] sm:$0xf]
      %v428 = vld [vmem:[%s1 + $0x260] sm:$0xf]
      %v429 = vld [vmem:[%s1 + $0x264] sm:$0xf]
      %v430 = vld [vmem:[%s1 + $0x268] sm:$0xf]
      %v431 = vld [vmem:[%s1 + $0x26c] sm:$0xf]
      %v432 = vld [vmem:[%s1 + $0x270] sm:$0xf]
      %v433 = vld [vmem:[%s1 + $0x274] sm:$0xf]
      %v434 = vld [vmem:[%s1 + $0x278] sm:$0xf]
      %v435 = vld [vmem:[%s1 + $0x27c] sm:$0xf]
      %v436 = vld [vmem:[%s1 + $0x280] sm:$0xf]
      %v437 = vld [vmem:[%s1 + $0x284] sm:$0xf]
      %v438 = vld [vmem:[%s1 + $0x288] sm:$0xf]
      %v439 = vld [vmem:[%s1 + $0x28c] sm:$0xf]
      %v440 = vld [vmem:[%s1 + $0x290] sm:$0xf]
      %v441 = vld [vmem:[%s1 + $0x294] sm:$0xf]
      %v442 = vld [vmem:[%s1 + $0x298] sm:$0xf]
      %v443 = vld [vmem:[%s1 + $0x29c] sm:$0xf]
      %v444 = vld [vmem:[%s1 + $0x2a0] sm:$0xf]
      %v445 = vld [vmem:[%s1 + $0x2a4] sm:$0xf]
      %v446 = vld [vmem:[%s1 + $0x2a8] sm:$0xf]
      %v447 = vld [vmem:[%s1 + $0x2ac] sm:$0xf]
      %v448 = vld [vmem:[%s1 + $0x2b0] sm:$0xf]
      %v449 = vld [vmem:[%s1 + $0x2b4] sm:$0xf]
      %v450 = vld [vmem:[%s1 + $0x2b8] sm:$0xf]
      %v451 = vld [vmem:[%s1 + $0x2bc] sm:$0xf]
      %v452 = vld [vmem:[%s1 + $0x2c0] sm:$0xf]
      %v453 = vld [vmem:[%s1 + $0x2c4] sm:$0xf]
      %v454 = vld [vmem:[%s1 + $0x2c8] sm:$0xf]
      %v455 = vld [vmem:[%s1 + $0x2cc] sm:$0xf]
      %v456 = vld [vmem:[%s1 + $0x2d0] sm:$0xf]
      %v457 = vld [vmem:[%s1 + $0x2d4] sm:$0xf]
      %v458 = vld [vmem:[%s1 + $0x2d8] sm:$0xf]
      %v459 = vld [vmem:[%s1 + $0x2dc] sm:$0xf]
      %v460 = vld [vmem:[%s1 + $0x2e0] sm:$0xf]
      %v461 = vld [vmem:[%s1 + $0x2e4] sm:$0xf]
      %v462 = vld [vmem:[%s1 + $0x2e8] sm:$0xf]
      %v463 = vld [vmem:[%s1 + $0x2ec] sm:$0xf]
      %v464 = vld [vmem:[%s1 + $0x2f0] sm:$0xf]
      %v465 = vld [vmem:[%s1 + $0x2f4] sm:$0xf]
      %v466 = vld [vmem:[%s1 + $0x2f8] sm:$0xf]
      %v467 = vld [vmem:[%s1 + $0x2fc] sm:$0xf]
      %v468 = vld [vmem:[%s1 + $0x300] sm:$0xf]
      %v469 = vld [vmem:[%s1 + $0x304] sm:$0xf]
      %v470 = vld [vmem:[%s1 + $0x308] sm:$0xf]
      %v471 = vld [vmem:[%s1 + $0x30c] sm:$0xf]
      %v472 = vld [vmem:[%s1 + $0x310] sm:$0xf]
      %v473 = vld [vmem:[%s1 + $0x314] sm:$0xf]
      %v474 = vld [vmem:[%s1 + $0x318] sm:$0xf]
      %v475 = vld [vmem:[%s1 + $0x31c] sm:$0xf]
      %v476 = vld [vmem:[%s1 + $0x320] sm:$0xf]
      %v477 = vld [vmem:[%s1 + $0x324] sm:$0xf]
      %v478 = vld [vmem:[%s1 + $0x328] sm:$0xf]
      %v479 = vld [vmem:[%s1 + $0x32c] sm:$0xf]
      %v480 = vld [vmem:[%s1 + $0x330] sm:$0xf]
      %v481 = vld [vmem:[%s1 + $0x334] sm:$0xf]
      %v482 = vld [vmem:[%s1 + $0x338] sm:$0xf]
      %v483 = vld [vmem:[%s1 + $0x33c] sm:$0xf]
      %v484 = vld [vmem:[%s1 + $0x340] sm:$0xf]
      %v485 = vld [vmem:[%s1 + $0x344] sm:$0xf]
      %v486 = vld [vmem:[%s1 + $0x348] sm:$0xf]
      %v487 = vld [vmem:[%s1 + $0x34c] sm:$0xf]
      %v488 = vld [vmem:[%s1 + $0x350] sm:$0xf]
      %v489 = vld [vmem:[%s1 + $0x354] sm:$0xf]
      %v490 = vld [vmem:[%s1 + $0x358] sm:$0xf]
      %v491 = vld [vmem:[%s1 + $0x35c] sm:$0xf]
      %v492 = vld [vmem:[%s1 + $0x360] sm:$0xf]
      %v493 = vld [vmem:[%s1 + $0x364] sm:$0xf]
      %v494 = vld [vmem:[%s1 + $0x368] sm:$0xf]
      %v495 = vld [vmem:[%s1 + $0x36c] sm:$0xf]
      %v496 = vld [vmem:[%s1 + $0x370] sm:$0xf]
      %v497 = vld [vmem:[%s1 + $0x374] sm:$0xf]
      %v498 = vld [vmem:[%s1 + $0x378] sm:$0xf]
      %v499 = vld [vmem:[%s1 + $0x37c] sm:$0xf]
      %v500 = vld [vmem:[%s1 + $0x380] sm:$0xf]
      %v501 = vld [vmem:[%s1 + $0x384] sm:$0xf]
      %v502 = vld [vmem:[%s1 + $0x388] sm:$0xf]
      %v503 = vld [vmem:[%s1 + $0x38c] sm:$0xf]
      %v504 = vld [vmem:[%s1 + $0x390] sm:$0xf]
      %v505 = vld [vmem:[%s1 + $0x394] sm:$0xf]
      %v506 = vld [vmem:[%s1 + $0x398] sm:$0xf]
      %v507 = vld [vmem:[%s1 + $0x39c] sm:$0xf]
      %v508 = vld [vmem:[%s1 + $0x3a0] sm:$0xf]
      %v509 = vld [vmem:[%s1 + $0x3a4] sm:$0xf]
      %v510 = vld [vmem:[%s1 + $0x3a8] sm:$0xf]
      %v511 = vld [vmem:[%s1 + $0x3ac] sm:$0xf]
      %v512 = vld [vmem:[%s1 + $0x3b0] sm:$0xf]
      %v513 = vld [vmem:[%s1 + $0x3b4] sm:$0xf]
      %v514 = vld [vmem:[%s1 + $0x3b8] sm:$0xf]
      %v515 = vld [vmem:[%s1 + $0x3bc] sm:$0xf]
      %v516 = vld [vmem:[%s1 + $0x3c0] sm:$0xf]
      %v517 = vld [vmem:[%s1 + $0x3c4] sm:$0xf]
      %v518 = vld [vmem:[%s1 + $0x3c8] sm:$0xf]
      %v519 = vld [vmem:[%s1 + $0x3cc] sm:$0xf]
      %v520 = vld [vmem:[%s1 + $0x3d0] sm:$0xf]
      %v521 = vld [vmem:[%s1 + $0x3d4] sm:$0xf]
      %v522 = vld [vmem:[%s1 + $0x3d8] sm:$0xf]
      %v523 = vld [vmem:[%s1 + $0x3dc] sm:$0xf]
      %v524 = vld [vmem:[%s1 + $0x3e0] sm:$0xf]
      %v525 = vld [vmem:[%s1 + $0x3e4] sm:$0xf]
      %v526 = vld [vmem:[%s1 + $0x3e8] sm:$0xf]
      %v527 = vld [vmem:[%s1 + $0x3ec] sm:$0xf]
      %v528 = vld [vmem:[%s1 + $0x3f0] sm:$0xf]
      %v529 = vld [vmem:[%s1 + $0x3f4] sm:$0xf]
      %v530 = vld [vmem:[%s1 + $0x3f8] sm:$0xf]
      %v531 = vld [vmem:[%s1 + $0x3fc] sm:$0xf]
      %v532 = vld [vmem:[%s2] sm:$0xff]
      %v533 = vld [vmem:[%s2 + $0x8] sm:$0xff]
      %v536 = vperm.slane %v532, 0
      %v537 = vperm.slane %v532, 1
      %v538 = vperm.slane %v532, 2
      %v539 = vperm.slane %v532, 3
      %v540 = vperm.slane %v532, 4
      %v541 = vperm.slane %v532, 5
      %v542 = vperm.slane %v532, 6
      %v543 = vperm.slane %v532, 7
      %v544 = vperm.slane %v533, 0
      %v545 = vperm.slane %v533, 1
      %v546 = vperm.slane %v533, 2
      %v547 = vperm.slane %v533, 3
      %v548 = vperm.slane %v533, 4
      %v549 = vperm.slane %v533, 5
      %v550 = vperm.slane %v533, 6
      %v551 = vperm.slane %v533, 7
      %v824 = vunpack.c.l.b16 %v276
      %v825 = vunpack.c.l.b16 %v277
      %v826 = vunpack.c.l.b16 %v278
      %v827 = vunpack.c.l.b16 %v279
      %v828 = vunpack.c.l.b16 %v280
      %v829 = vunpack.c.l.b16 %v281
      %v830 = vunpack.c.l.b16 %v282
      %v831 = vunpack.c.l.b16 %v283
      %v832 = vunpack.c.l.b16 %v284
      %v833 = vunpack.c.l.b16 %v285
      %v834 = vunpack.c.l.b16 %v286
      %v835 = vunpack.c.l.b16 %v287
      %v836 = vunpack.c.l.b16 %v288
      %v837 = vunpack.c.l.b16 %v289
      %v838 = vunpack.c.l.b16 %v290
      %v839 = vunpack.c.l.b16 %v291
      %v840 = vunpack.c.l.b16 %v292
      %v841 = vunpack.c.l.b16 %v293
      %v842 = vunpack.c.l.b16 %v294
      %v843 = vunpack.c.l.b16 %v295
      %v844 = vunpack.c.l.b16 %v296
      %v845 = vunpack.c.l.b16 %v297
      %v846 = vunpack.c.l.b16 %v298
      %v847 = vunpack.c.l.b16 %v299
      %v848 = vunpack.c.l.b16 %v300
      %v849 = vunpack.c.l.b16 %v301
      %v850 = vunpack.c.l.b16 %v302
      %v851 = vunpack.c.l.b16 %v303
      %v852 = vunpack.c.l.b16 %v304
      %v853 = vunpack.c.l.b16 %v305
      %v854 = vunpack.c.l.b16 %v306
      %v855 = vunpack.c.l.b16 %v307
      %v856 = vunpack.c.l.b16 %v308
      %v857 = vunpack.c.l.b16 %v309
      %v858 = vunpack.c.l.b16 %v310
      %v859 = vunpack.c.l.b16 %v311
      %v860 = vunpack.c.l.b16 %v312
      %v861 = vunpack.c.l.b16 %v313
      %v862 = vunpack.c.l.b16 %v314
      %v863 = vunpack.c.l.b16 %v315
      %v864 = vunpack.c.l.b16 %v316
      %v865 = vunpack.c.l.b16 %v317
      %v866 = vunpack.c.l.b16 %v318
      %v867 = vunpack.c.l.b16 %v319
      %v868 = vunpack.c.l.b16 %v320
      %v869 = vunpack.c.l.b16 %v321
      %v870 = vunpack.c.l.b16 %v322
      %v871 = vunpack.c.l.b16 %v323
      %v872 = vunpack.c.l.b16 %v324
      %v873 = vunpack.c.l.b16 %v325
      %v874 = vunpack.c.l.b16 %v326
      %v875 = vunpack.c.l.b16 %v327
      %v876 = vunpack.c.l.b16 %v328
      %v877 = vunpack.c.l.b16 %v329
      %v878 = vunpack.c.l.b16 %v330
      %v879 = vunpack.c.l.b16 %v331
      %v880 = vunpack.c.l.b16 %v332
      %v881 = vunpack.c.l.b16 %v333
      %v882 = vunpack.c.l.b16 %v334
      %v883 = vunpack.c.l.b16 %v335
      %v884 = vunpack.c.l.b16 %v336
      %v885 = vunpack.c.l.b16 %v337
      %v886 = vunpack.c.l.b16 %v338
      %v887 = vunpack.c.l.b16 %v339
      %v888 = vunpack.c.l.b16 %v340
      %v889 = vunpack.c.l.b16 %v341
      %v890 = vunpack.c.l.b16 %v342
      %v891 = vunpack.c.l.b16 %v343
      %v892 = vunpack.c.l.b16 %v344
      %v893 = vunpack.c.l.b16 %v345
      %v894 = vunpack.c.l.b16 %v346
      %v895 = vunpack.c.l.b16 %v347
      %v896 = vunpack.c.l.b16 %v348
      %v897 = vunpack.c.l.b16 %v349
      %v898 = vunpack.c.l.b16 %v350
      %v899 = vunpack.c.l.b16 %v351
      %v900 = vunpack.c.l.b16 %v352
      %v901 = vunpack.c.l.b16 %v353
      %v902 = vunpack.c.l.b16 %v354
      %v903 = vunpack.c.l.b16 %v355
      %v904 = vunpack.c.l.b16 %v356
      %v905 = vunpack.c.l.b16 %v357
      %v906 = vunpack.c.l.b16 %v358
      %v907 = vunpack.c.l.b16 %v359
      %v908 = vunpack.c.l.b16 %v360
      %v909 = vunpack.c.l.b16 %v361
      %v910 = vunpack.c.l.b16 %v362
      %v911 = vunpack.c.l.b16 %v363
      %v912 = vunpack.c.l.b16 %v364
      %v913 = vunpack.c.l.b16 %v365
      %v914 = vunpack.c.l.b16 %v366
      %v915 = vunpack.c.l.b16 %v367
      %v916 = vunpack.c.l.b16 %v368
      %v917 = vunpack.c.l.b16 %v369
      %v918 = vunpack.c.l.b16 %v370
      %v919 = vunpack.c.l.b16 %v371
      %v920 = vunpack.c.l.b16 %v372
      %v921 = vunpack.c.l.b16 %v373
      %v922 = vunpack.c.l.b16 %v374
      %v923 = vunpack.c.l.b16 %v375
      %v924 = vunpack.c.l.b16 %v376
      %v925 = vunpack.c.l.b16 %v377
      %v926 = vunpack.c.l.b16 %v378
      %v927 = vunpack.c.l.b16 %v379
      %v928 = vunpack.c.l.b16 %v380
      %v929 = vunpack.c.l.b16 %v381
      %v930 = vunpack.c.l.b16 %v382
      %v931 = vunpack.c.l.b16 %v383
      %v932 = vunpack.c.l.b16 %v384
      %v933 = vunpack.c.l.b16 %v385
      %v934 = vunpack.c.l.b16 %v386
      %v935 = vunpack.c.l.b16 %v387
      %v936 = vunpack.c.l.b16 %v388
      %v937 = vunpack.c.l.b16 %v389
      %v938 = vunpack.c.l.b16 %v390
      %v939 = vunpack.c.l.b16 %v391
      %v940 = vunpack.c.l.b16 %v392
      %v941 = vunpack.c.l.b16 %v393
      %v942 = vunpack.c.l.b16 %v394
      %v943 = vunpack.c.l.b16 %v395
      %v944 = vunpack.c.l.b16 %v396
      %v945 = vunpack.c.l.b16 %v397
      %v946 = vunpack.c.l.b16 %v398
      %v947 = vunpack.c.l.b16 %v399
      %v948 = vunpack.c.l.b16 %v400
      %v949 = vunpack.c.l.b16 %v401
      %v950 = vunpack.c.l.b16 %v402
      %v951 = vunpack.c.l.b16 %v403
      %v952 = vunpack.c.l.b16 %v404
      %v953 = vunpack.c.l.b16 %v405
      %v954 = vunpack.c.l.b16 %v406
      %v955 = vunpack.c.l.b16 %v407
      %v956 = vunpack.c.l.b16 %v408
      %v957 = vunpack.c.l.b16 %v409
      %v958 = vunpack.c.l.b16 %v410
      %v959 = vunpack.c.l.b16 %v411
      %v960 = vunpack.c.l.b16 %v412
      %v961 = vunpack.c.l.b16 %v413
      %v962 = vunpack.c.l.b16 %v414
      %v963 = vunpack.c.l.b16 %v415
      %v964 = vunpack.c.l.b16 %v416
      %v965 = vunpack.c.l.b16 %v417
      %v966 = vunpack.c.l.b16 %v418
      %v967 = vunpack.c.l.b16 %v419
      %v968 = vunpack.c.l.b16 %v420
      %v969 = vunpack.c.l.b16 %v421
      %v970 = vunpack.c.l.b16 %v422
      %v971 = vunpack.c.l.b16 %v423
      %v972 = vunpack.c.l.b16 %v424
      %v973 = vunpack.c.l.b16 %v425
      %v974 = vunpack.c.l.b16 %v426
      %v975 = vunpack.c.l.b16 %v427
      %v976 = vunpack.c.l.b16 %v428
      %v977 = vunpack.c.l.b16 %v429
      %v978 = vunpack.c.l.b16 %v430
      %v979 = vunpack.c.l.b16 %v431
      %v980 = vunpack.c.l.b16 %v432
      %v981 = vunpack.c.l.b16 %v433
      %v982 = vunpack.c.l.b16 %v434
      %v983 = vunpack.c.l.b16 %v435
      %v984 = vunpack.c.l.b16 %v436
      %v985 = vunpack.c.l.b16 %v437
      %v986 = vunpack.c.l.b16 %v438
      %v987 = vunpack.c.l.b16 %v439
      %v988 = vunpack.c.l.b16 %v440
      %v989 = vunpack.c.l.b16 %v441
      %v990 = vunpack.c.l.b16 %v442
      %v991 = vunpack.c.l.b16 %v443
      %v992 = vunpack.c.l.b16 %v444
      %v993 = vunpack.c.l.b16 %v445
      %v994 = vunpack.c.l.b16 %v446
      %v995 = vunpack.c.l.b16 %v447
      %v996 = vunpack.c.l.b16 %v448
      %v997 = vunpack.c.l.b16 %v449
      %v998 = vunpack.c.l.b16 %v450
      %v999 = vunpack.c.l.b16 %v451
      %v1000 = vunpack.c.l.b16 %v452
      %v1001 = vunpack.c.l.b16 %v453
      %v1002 = vunpack.c.l.b16 %v454
      %v1003 = vunpack.c.l.b16 %v455
      %v1004 = vunpack.c.l.b16 %v456
      %v1005 = vunpack.c.l.b16 %v457
      %v1006 = vunpack.c.l.b16 %v458
      %v1007 = vunpack.c.l.b16 %v459
      %v1008 = vunpack.c.l.b16 %v460
      %v1009 = vunpack.c.l.b16 %v461
      %v1010 = vunpack.c.l.b16 %v462
      %v1011 = vunpack.c.l.b16 %v463
      %v1012 = vunpack.c.l.b16 %v464
      %v1013 = vunpack.c.l.b16 %v465
      %v1014 = vunpack.c.l.b16 %v466
      %v1015 = vunpack.c.l.b16 %v467
      %v1016 = vunpack.c.l.b16 %v468
      %v1017 = vunpack.c.l.b16 %v469
      %v1018 = vunpack.c.l.b16 %v470
      %v1019 = vunpack.c.l.b16 %v471
      %v1020 = vunpack.c.l.b16 %v472
      %v1021 = vunpack.c.l.b16 %v473
      %v1022 = vunpack.c.l.b16 %v474
      %v1023 = vunpack.c.l.b16 %v475
      %v1024 = vunpack.c.l.b16 %v476
      %v1025 = vunpack.c.l.b16 %v477
      %v1026 = vunpack.c.l.b16 %v478
      %v1027 = vunpack.c.l.b16 %v479
      %v1028 = vunpack.c.l.b16 %v480
      %v1029 = vunpack.c.l.b16 %v481
      %v1030 = vunpack.c.l.b16 %v482
      %v1031 = vunpack.c.l.b16 %v483
      %v1032 = vunpack.c.l.b16 %v484
      %v1033 = vunpack.c.l.b16 %v485
      %v1034 = vunpack.c.l.b16 %v486
      %v1035 = vunpack.c.l.b16 %v487
      %v1036 = vunpack.c.l.b16 %v488
      %v1037 = vunpack.c.l.b16 %v489
      %v1038 = vunpack.c.l.b16 %v490
      %v1039 = vunpack.c.l.b16 %v491
      %v1040 = vunpack.c.l.b16 %v492
      %v1041 = vunpack.c.l.b16 %v493
      %v1042 = vunpack.c.l.b16 %v494
      %v1043 = vunpack.c.l.b16 %v495
      %v1044 = vunpack.c.l.b16 %v496
      %v1045 = vunpack.c.l.b16 %v497
      %v1046 = vunpack.c.l.b16 %v498
      %v1047 = vunpack.c.l.b16 %v499
      %v1048 = vunpack.c.l.b16 %v500
      %v1049 = vunpack.c.l.b16 %v501
      %v1050 = vunpack.c.l.b16 %v502
      %v1051 = vunpack.c.l.b16 %v503
      %v1052 = vunpack.c.l.b16 %v504
      %v1053 = vunpack.c.l.b16 %v505
      %v1054 = vunpack.c.l.b16 %v506
      %v1055 = vunpack.c.l.b16 %v507
      %v1056 = vunpack.c.l.b16 %v508
      %v1057 = vunpack.c.l.b16 %v509
      %v1058 = vunpack.c.l.b16 %v510
      %v1059 = vunpack.c.l.b16 %v511
      %v1060 = vunpack.c.l.b16 %v512
      %v1061 = vunpack.c.l.b16 %v513
      %v1062 = vunpack.c.l.b16 %v514
      %v1063 = vunpack.c.l.b16 %v515
      %v1064 = vunpack.c.l.b16 %v516
      %v1065 = vunpack.c.l.b16 %v517
      %v1066 = vunpack.c.l.b16 %v518
      %v1067 = vunpack.c.l.b16 %v519
      %v1068 = vunpack.c.l.b16 %v520
      %v1069 = vunpack.c.l.b16 %v521
      %v1070 = vunpack.c.l.b16 %v522
      %v1071 = vunpack.c.l.b16 %v523
      %v1072 = vunpack.c.l.b16 %v524
      %v1073 = vunpack.c.l.b16 %v525
      %v1074 = vunpack.c.l.b16 %v526
      %v1075 = vunpack.c.l.b16 %v527
      %v1076 = vunpack.c.l.b16 %v528
      %v1077 = vunpack.c.l.b16 %v529
      %v1078 = vunpack.c.l.b16 %v530
      %v1079 = vunpack.c.l.b16 %v531
      %v1080 = vpack.c.b16 %v825, %v824
      %v1081 = vpack.c.b16 %v827, %v826
      %v1082 = vpack.c.b16 %v829, %v828
      %v1083 = vpack.c.b16 %v831, %v830
      %v1084 = vpack.c.b16 %v833, %v832
      %v1085 = vpack.c.b16 %v835, %v834
      %v1086 = vpack.c.b16 %v837, %v836
      %v1087 = vpack.c.b16 %v839, %v838
      %v1088 = vpack.c.b16 %v841, %v840
      %v1089 = vpack.c.b16 %v843, %v842
      %v1090 = vpack.c.b16 %v845, %v844
      %v1091 = vpack.c.b16 %v847, %v846
      %v1092 = vpack.c.b16 %v849, %v848
      %v1093 = vpack.c.b16 %v851, %v850
      %v1094 = vpack.c.b16 %v853, %v852
      %v1095 = vpack.c.b16 %v855, %v854
      %v1096 = vpack.c.b16 %v857, %v856
      %v1097 = vpack.c.b16 %v859, %v858
      %v1098 = vpack.c.b16 %v861, %v860
      %v1099 = vpack.c.b16 %v863, %v862
      %v1100 = vpack.c.b16 %v865, %v864
      %v1101 = vpack.c.b16 %v867, %v866
      %v1102 = vpack.c.b16 %v869, %v868
      %v1103 = vpack.c.b16 %v871, %v870
      %v1104 = vpack.c.b16 %v873, %v872
      %v1105 = vpack.c.b16 %v875, %v874
      %v1106 = vpack.c.b16 %v877, %v876
      %v1107 = vpack.c.b16 %v879, %v878
      %v1108 = vpack.c.b16 %v881, %v880
      %v1109 = vpack.c.b16 %v883, %v882
      %v1110 = vpack.c.b16 %v885, %v884
      %v1111 = vpack.c.b16 %v887, %v886
      %v1112 = vpack.c.b16 %v889, %v888
      %v1113 = vpack.c.b16 %v891, %v890
      %v1114 = vpack.c.b16 %v893, %v892
      %v1115 = vpack.c.b16 %v895, %v894
      %v1116 = vpack.c.b16 %v897, %v896
      %v1117 = vpack.c.b16 %v899, %v898
      %v1118 = vpack.c.b16 %v901, %v900
      %v1119 = vpack.c.b16 %v903, %v902
      %v1120 = vpack.c.b16 %v905, %v904
      %v1121 = vpack.c.b16 %v907, %v906
      %v1122 = vpack.c.b16 %v909, %v908
      %v1123 = vpack.c.b16 %v911, %v910
      %v1124 = vpack.c.b16 %v913, %v912
      %v1125 = vpack.c.b16 %v915, %v914
      %v1126 = vpack.c.b16 %v917, %v916
      %v1127 = vpack.c.b16 %v919, %v918
      %v1128 = vpack.c.b16 %v921, %v920
      %v1129 = vpack.c.b16 %v923, %v922
      %v1130 = vpack.c.b16 %v925, %v924
      %v1131 = vpack.c.b16 %v927, %v926
      %v1132 = vpack.c.b16 %v929, %v928
      %v1133 = vpack.c.b16 %v931, %v930
      %v1134 = vpack.c.b16 %v933, %v932
      %v1135 = vpack.c.b16 %v935, %v934
      %v1136 = vpack.c.b16 %v937, %v936
      %v1137 = vpack.c.b16 %v939, %v938
      %v1138 = vpack.c.b16 %v941, %v940
      %v1139 = vpack.c.b16 %v943, %v942
      %v1140 = vpack.c.b16 %v945, %v944
      %v1141 = vpack.c.b16 %v947, %v946
      %v1142 = vpack.c.b16 %v949, %v948
      %v1143 = vpack.c.b16 %v951, %v950
      %v1144 = vpack.c.b16 %v953, %v952
      %v1145 = vpack.c.b16 %v955, %v954
      %v1146 = vpack.c.b16 %v957, %v956
      %v1147 = vpack.c.b16 %v959, %v958
      %v1148 = vpack.c.b16 %v961, %v960
      %v1149 = vpack.c.b16 %v963, %v962
      %v1150 = vpack.c.b16 %v965, %v964
      %v1151 = vpack.c.b16 %v967, %v966
      %v1152 = vpack.c.b16 %v969, %v968
      %v1153 = vpack.c.b16 %v971, %v970
      %v1154 = vpack.c.b16 %v973, %v972
      %v1155 = vpack.c.b16 %v975, %v974
      %v1156 = vpack.c.b16 %v977, %v976
      %v1157 = vpack.c.b16 %v979, %v978
      %v1158 = vpack.c.b16 %v981, %v980
      %v1159 = vpack.c.b16 %v983, %v982
      %v1160 = vpack.c.b16 %v985, %v984
      %v1161 = vpack.c.b16 %v987, %v986
      %v1162 = vpack.c.b16 %v989, %v988
      %v1163 = vpack.c.b16 %v991, %v990
      %v1164 = vpack.c.b16 %v993, %v992
      %v1165 = vpack.c.b16 %v995, %v994
      %v1166 = vpack.c.b16 %v997, %v996
      %v1167 = vpack.c.b16 %v999, %v998
      %v1168 = vpack.c.b16 %v1001, %v1000
      %v1169 = vpack.c.b16 %v1003, %v1002
      %v1170 = vpack.c.b16 %v1005, %v1004
      %v1171 = vpack.c.b16 %v1007, %v1006
      %v1172 = vpack.c.b16 %v1009, %v1008
      %v1173 = vpack.c.b16 %v1011, %v1010
      %v1174 = vpack.c.b16 %v1013, %v1012
      %v1175 = vpack.c.b16 %v1015, %v1014
      %v1176 = vpack.c.b16 %v1017, %v1016
      %v1177 = vpack.c.b16 %v1019, %v1018
      %v1178 = vpack.c.b16 %v1021, %v1020
      %v1179 = vpack.c.b16 %v1023, %v1022
      %v1180 = vpack.c.b16 %v1025, %v1024
      %v1181 = vpack.c.b16 %v1027, %v1026
      %v1182 = vpack.c.b16 %v1029, %v1028
      %v1183 = vpack.c.b16 %v1031, %v1030
      %v1184 = vpack.c.b16 %v1033, %v1032
      %v1185 = vpack.c.b16 %v1035, %v1034
      %v1186 = vpack.c.b16 %v1037, %v1036
      %v1187 = vpack.c.b16 %v1039, %v1038
      %v1188 = vpack.c.b16 %v1041, %v1040
      %v1189 = vpack.c.b16 %v1043, %v1042
      %v1190 = vpack.c.b16 %v1045, %v1044
      %v1191 = vpack.c.b16 %v1047, %v1046
      %v1192 = vpack.c.b16 %v1049, %v1048
      %v1193 = vpack.c.b16 %v1051, %v1050
      %v1194 = vpack.c.b16 %v1053, %v1052
      %v1195 = vpack.c.b16 %v1055, %v1054
      %v1196 = vpack.c.b16 %v1057, %v1056
      %v1197 = vpack.c.b16 %v1059, %v1058
      %v1198 = vpack.c.b16 %v1061, %v1060
      %v1199 = vpack.c.b16 %v1063, %v1062
      %v1200 = vpack.c.b16 %v1065, %v1064
      %v1201 = vpack.c.b16 %v1067, %v1066
      %v1202 = vpack.c.b16 %v1069, %v1068
      %v1203 = vpack.c.b16 %v1071, %v1070
      %v1204 = vpack.c.b16 %v1073, %v1072
      %v1205 = vpack.c.b16 %v1075, %v1074
      %v1206 = vpack.c.b16 %v1077, %v1076
      %v1207 = vpack.c.b16 %v1079, %v1078
      %vm1208 = vcmask 261120
      %v1210 = vsel %vm1208, %v275, 0
      %v1213 = vsel %vm1208, %v1080, 0
      %v1216 = vsel %vm1208, %v1081, 0
      %v1219 = vsel %vm1208, %v1082, 0
      %v1222 = vsel %vm1208, %v1083, 0
      %v1225 = vsel %vm1208, %v1084, 0
      %v1228 = vsel %vm1208, %v1085, 0
      %v1231 = vsel %vm1208, %v1086, 0
      %v1234 = vsel %vm1208, %v1087, 0
      %v1237 = vsel %vm1208, %v1088, 0
      %v1240 = vsel %vm1208, %v1089, 0
      %v1243 = vsel %vm1208, %v1090, 0
      %v1246 = vsel %vm1208, %v1091, 0
      %v1249 = vsel %vm1208, %v1092, 0
      %v1252 = vsel %vm1208, %v1093, 0
      %v1255 = vsel %vm1208, %v1094, 0
      %v1258 = vsel %vm1208, %v1095, 0
      %v1261 = vsel %vm1208, %v1096, 0
      %v1264 = vsel %vm1208, %v1097, 0
      %v1267 = vsel %vm1208, %v1098, 0
      %v1270 = vsel %vm1208, %v1099, 0
      %v1273 = vsel %vm1208, %v1100, 0
      %v1276 = vsel %vm1208, %v1101, 0
      %v1279 = vsel %vm1208, %v1102, 0
      %v1282 = vsel %vm1208, %v1103, 0
      %v1285 = vsel %vm1208, %v1104, 0
      %v1288 = vsel %vm1208, %v1105, 0
      %v1291 = vsel %vm1208, %v1106, 0
      %v1294 = vsel %vm1208, %v1107, 0
      %v1297 = vsel %vm1208, %v1108, 0
      %v1300 = vsel %vm1208, %v1109, 0
      %v1303 = vsel %vm1208, %v1110, 0
      %v1306 = vsel %vm1208, %v1111, 0
      %v1309 = vsel %vm1208, %v1112, 0
      %v1312 = vsel %vm1208, %v1113, 0
      %v1315 = vsel %vm1208, %v1114, 0
      %v1318 = vsel %vm1208, %v1115, 0
      %v1321 = vsel %vm1208, %v1116, 0
      %v1324 = vsel %vm1208, %v1117, 0
      %v1327 = vsel %vm1208, %v1118, 0
      %v1330 = vsel %vm1208, %v1119, 0
      %v1333 = vsel %vm1208, %v1120, 0
      %v1336 = vsel %vm1208, %v1121, 0
      %v1339 = vsel %vm1208, %v1122, 0
      %v1342 = vsel %vm1208, %v1123, 0
      %v1345 = vsel %vm1208, %v1124, 0
      %v1348 = vsel %vm1208, %v1125, 0
      %v1351 = vsel %vm1208, %v1126, 0
      %v1354 = vsel %vm1208, %v1127, 0
      %v1357 = vsel %vm1208, %v1128, 0
      %v1360 = vsel %vm1208, %v1129, 0
      %v1363 = vsel %vm1208, %v1130, 0
      %v1366 = vsel %vm1208, %v1131, 0
      %v1369 = vsel %vm1208, %v1132, 0
      %v1372 = vsel %vm1208, %v1133, 0
      %v1375 = vsel %vm1208, %v1134, 0
      %v1378 = vsel %vm1208, %v1135, 0
      %v1381 = vsel %vm1208, %v1136, 0
      %v1384 = vsel %vm1208, %v1137, 0
      %v1387 = vsel %vm1208, %v1138, 0
      %v1390 = vsel %vm1208, %v1139, 0
      %v1393 = vsel %vm1208, %v1140, 0
      %v1396 = vsel %vm1208, %v1141, 0
      %v1399 = vsel %vm1208, %v1142, 0
      %v1402 = vsel %vm1208, %v1143, 0
      %v1405 = vsel %vm1208, %v1144, 0
      %v1408 = vsel %vm1208, %v1145, 0
      %v1411 = vsel %vm1208, %v1146, 0
      %v1414 = vsel %vm1208, %v1147, 0
      %v1417 = vsel %vm1208, %v1148, 0
      %v1420 = vsel %vm1208, %v1149, 0
      %v1423 = vsel %vm1208, %v1150, 0
      %v1426 = vsel %vm1208, %v1151, 0
      %v1429 = vsel %vm1208, %v1152, 0
      %v1432 = vsel %vm1208, %v1153, 0
      %v1435 = vsel %vm1208, %v1154, 0
      %v1438 = vsel %vm1208, %v1155, 0
      %v1441 = vsel %vm1208, %v1156, 0
      %v1444 = vsel %vm1208, %v1157, 0
      %v1447 = vsel %vm1208, %v1158, 0
      %v1450 = vsel %vm1208, %v1159, 0
      %v1453 = vsel %vm1208, %v1160, 0
      %v1456 = vsel %vm1208, %v1161, 0
      %v1459 = vsel %vm1208, %v1162, 0
      %v1462 = vsel %vm1208, %v1163, 0
      %v1465 = vsel %vm1208, %v1164, 0
      %v1468 = vsel %vm1208, %v1165, 0
      %v1471 = vsel %vm1208, %v1166, 0
      %v1474 = vsel %vm1208, %v1167, 0
      %v1477 = vsel %vm1208, %v1168, 0
      %v1480 = vsel %vm1208, %v1169, 0
      %v1483 = vsel %vm1208, %v1170, 0
      %v1486 = vsel %vm1208, %v1171, 0
      %v1489 = vsel %vm1208, %v1172, 0
      %v1492 = vsel %vm1208, %v1173, 0
      %v1495 = vsel %vm1208, %v1174, 0
      %v1498 = vsel %vm1208, %v1175, 0
      %v1501 = vsel %vm1208, %v1176, 0
      %v1504 = vsel %vm1208, %v1177, 0
      %v1507 = vsel %vm1208, %v1178, 0
      %v1510 = vsel %vm1208, %v1179, 0
      %v1513 = vsel %vm1208, %v1180, 0
      %v1516 = vsel %vm1208, %v1181, 0
      %v1519 = vsel %vm1208, %v1182, 0
      %v1522 = vsel %vm1208, %v1183, 0
      %v1525 = vsel %vm1208, %v1184, 0
      %v1528 = vsel %vm1208, %v1185, 0
      %v1531 = vsel %vm1208, %v1186, 0
      %v1534 = vsel %vm1208, %v1187, 0
      %v1537 = vsel %vm1208, %v1188, 0
      %v1540 = vsel %vm1208, %v1189, 0
      %v1543 = vsel %vm1208, %v1190, 0
      %v1546 = vsel %vm1208, %v1191, 0
      %v1549 = vsel %vm1208, %v1192, 0
      %v1552 = vsel %vm1208, %v1193, 0
      %v1555 = vsel %vm1208, %v1194, 0
      %v1558 = vsel %vm1208, %v1195, 0
      %v1561 = vsel %vm1208, %v1196, 0
      %v1564 = vsel %vm1208, %v1197, 0
      %v1567 = vsel %vm1208, %v1198, 0
      %v1570 = vsel %vm1208, %v1199, 0
      %v1573 = vsel %vm1208, %v1200, 0
      %v1576 = vsel %vm1208, %v1201, 0
      %v1579 = vsel %vm1208, %v1202, 0
      %v1582 = vsel %vm1208, %v1203, 0
      %v1585 = vsel %vm1208, %v1204, 0
      %v1588 = vsel %vm1208, %v1205, 0
      %v1591 = vsel %vm1208, %v1206, 0
      %v1594 = vsel %vm1208, %v1207, 0
      %1596 = vmatpush.bf16.xpose.msra.mxu0 %v1234
      %1597 = vmatpush.bf16.xpose.msra.mxu0 %v1231
      %1598 = vmatpush.bf16.xpose.msra.mxu0 %v1228
      %1599 = vmatpush.bf16.xpose.msra.mxu0 %v1225
      %1600 = vmatpush.bf16.xpose.msra.mxu0 %v1222
      %1601 = vmatpush.bf16.xpose.msra.mxu0 %v1219
      %1602 = vmatpush.bf16.xpose.msra.mxu0 %v1216
      %1603 = vmatpush.bf16.xpose.msra.mxu0 %v1213
      %1604 = vmatmul.bf16.gmra.mxu0 %v1210
      %v1605 = vpop.f32.mrf.mxu0
      %v1606 = vadd.f32 %v536, %v1605
      %v1607 = vpop.f32.mrf.mxu0
      %1608 = vdwg.mxu0
      %1609 = vmatpush.bf16.xpose.msra.mxu0 %v1258
      %1610 = vmatpush.bf16.xpose.msra.mxu0 %v1255
      %1611 = vmatpush.bf16.xpose.msra.mxu0 %v1252
      %1612 = vmatpush.bf16.xpose.msra.mxu0 %v1249
      %1613 = vmatpush.bf16.xpose.msra.mxu0 %v1246
      %1614 = vmatpush.bf16.xpose.msra.mxu0 %v1243
      %1615 = vmatpush.bf16.xpose.msra.mxu0 %v1240
      %1616 = vmatpush.bf16.xpose.msra.mxu0 %v1237
      %1617 = vmatmul.bf16.gmra.mxu0 %v1210
      %v1618 = vpop.f32.mrf.mxu0
      %v1619 = vadd.f32 %v537, %v1618
      %v1620 = vpop.f32.mrf.mxu0
      %1621 = vdwg.mxu0
      %1622 = vmatpush.bf16.xpose.msra.mxu0 %v1282
      %1623 = vmatpush.bf16.xpose.msra.mxu0 %v1279
      %1624 = vmatpush.bf16.xpose.msra.mxu0 %v1276
      %1625 = vmatpush.bf16.xpose.msra.mxu0 %v1273
      %1626 = vmatpush.bf16.xpose.msra.mxu0 %v1270
      %1627 = vmatpush.bf16.xpose.msra.mxu0 %v1267
      %1628 = vmatpush.bf16.xpose.msra.mxu0 %v1264
      %1629 = vmatpush.bf16.xpose.msra.mxu0 %v1261
      %1630 = vmatmul.bf16.gmra.mxu0 %v1210
      %v1631 = vpop.f32.mrf.mxu0
      %v1632 = vadd.f32 %v538, %v1631
      %v1633 = vpop.f32.mrf.mxu0
      %1634 = vdwg.mxu0
      %1635 = vmatpush.bf16.xpose.msra.mxu0 %v1306
      %1636 = vmatpush.bf16.xpose.msra.mxu0 %v1303
      %1637 = vmatpush.bf16.xpose.msra.mxu0 %v1300
      %1638 = vmatpush.bf16.xpose.msra.mxu0 %v1297
      %1639 = vmatpush.bf16.xpose.msra.mxu0 %v1294
      %1640 = vmatpush.bf16.xpose.msra.mxu0 %v1291
      %1641 = vmatpush.bf16.xpose.msra.mxu0 %v1288
      %1642 = vmatpush.bf16.xpose.msra.mxu0 %v1285
      %1643 = vmatmul.bf16.gmra.mxu0 %v1210
      %v1644 = vpop.f32.mrf.mxu0
      %v1645 = vadd.f32 %v539, %v1644
      %v1646 = vpop.f32.mrf.mxu0
      %1647 = vdwg.mxu0
      %1648 = vmatpush.bf16.xpose.msra.mxu0 %v1330
      %1649 = vmatpush.bf16.xpose.msra.mxu0 %v1327
      %1650 = vmatpush.bf16.xpose.msra.mxu0 %v1324
      %1651 = vmatpush.bf16.xpose.msra.mxu0 %v1321
      %1652 = vmatpush.bf16.xpose.msra.mxu0 %v1318
      %1653 = vmatpush.bf16.xpose.msra.mxu0 %v1315
      %1654 = vmatpush.bf16.xpose.msra.mxu0 %v1312
      %1655 = vmatpush.bf16.xpose.msra.mxu0 %v1309
      %1656 = vmatmul.bf16.gmra.mxu0 %v1210
      %v1657 = vpop.f32.mrf.mxu0
      %v1658 = vadd.f32 %v540, %v1657
      %v1659 = vpop.f32.mrf.mxu0
      %1660 = vdwg.mxu0
      %1661 = vmatpush.bf16.xpose.msra.mxu0 %v1354
      %1662 = vmatpush.bf16.xpose.msra.mxu0 %v1351
      %1663 = vmatpush.bf16.xpose.msra.mxu0 %v1348
      %1664 = vmatpush.bf16.xpose.msra.mxu0 %v1345
      %1665 = vmatpush.bf16.xpose.msra.mxu0 %v1342
      %1666 = vmatpush.bf16.xpose.msra.mxu0 %v1339
      %1667 = vmatpush.bf16.xpose.msra.mxu0 %v1336
      %1668 = vmatpush.bf16.xpose.msra.mxu0 %v1333
      %1669 = vmatmul.bf16.gmra.mxu0 %v1210
      %v1670 = vpop.f32.mrf.mxu0
      %v1671 = vadd.f32 %v541, %v1670
      %v1672 = vpop.f32.mrf.mxu0
      %1673 = vdwg.mxu0
      %1674 = vmatpush.bf16.xpose.msra.mxu0 %v1378
      %1675 = vmatpush.bf16.xpose.msra.mxu0 %v1375
      %1676 = vmatpush.bf16.xpose.msra.mxu0 %v1372
      %1677 = vmatpush.bf16.xpose.msra.mxu0 %v1369
      %1678 = vmatpush.bf16.xpose.msra.mxu0 %v1366
      %1679 = vmatpush.bf16.xpose.msra.mxu0 %v1363
      %1680 = vmatpush.bf16.xpose.msra.mxu0 %v1360
      %1681 = vmatpush.bf16.xpose.msra.mxu0 %v1357
      %1682 = vmatmul.bf16.gmra.mxu0 %v1210
      %v1683 = vpop.f32.mrf.mxu0
      %v1684 = vadd.f32 %v542, %v1683
      %v1685 = vpop.f32.mrf.mxu0
      %1686 = vdwg.mxu0
      %1687 = vmatpush.bf16.xpose.msra.mxu0 %v1402
      %1688 = vmatpush.bf16.xpose.msra.mxu0 %v1399
      %1689 = vmatpush.bf16.xpose.msra.mxu0 %v1396
      %1690 = vmatpush.bf16.xpose.msra.mxu0 %v1393
      %1691 = vmatpush.bf16.xpose.msra.mxu0 %v1390
      %1692 = vmatpush.bf16.xpose.msra.mxu0 %v1387
      %1693 = vmatpush.bf16.xpose.msra.mxu0 %v1384
      %1694 = vmatpush.bf16.xpose.msra.mxu0 %v1381
      %1695 = vmatmul.bf16.gmra.mxu0 %v1210
      %v1696 = vpop.f32.mrf.mxu0
      %v1697 = vadd.f32 %v543, %v1696
      %v1698 = vpop.f32.mrf.mxu0
      %1699 = vdwg.mxu0
      %1700 = vmatpush.bf16.xpose.msra.mxu0 %v1426
      %1701 = vmatpush.bf16.xpose.msra.mxu0 %v1423
      %1702 = vmatpush.bf16.xpose.msra.mxu0 %v1420
      %1703 = vmatpush.bf16.xpose.msra.mxu0 %v1417
      %1704 = vmatpush.bf16.xpose.msra.mxu0 %v1414
      %1705 = vmatpush.bf16.xpose.msra.mxu0 %v1411
      %1706 = vmatpush.bf16.xpose.msra.mxu0 %v1408
      %1707 = vmatpush.bf16.xpose.msra.mxu0 %v1405
      %1708 = vmatmul.bf16.gmra.mxu0 %v1210
      %v1709 = vpop.f32.mrf.mxu0
      %v1710 = vadd.f32 %v544, %v1709
      %v1711 = vpop.f32.mrf.mxu0
      %1712 = vdwg.mxu0
      %1713 = vmatpush.bf16.xpose.msra.mxu0 %v1450
      %1714 = vmatpush.bf16.xpose.msra.mxu0 %v1447
      %1715 = vmatpush.bf16.xpose.msra.mxu0 %v1444
      %1716 = vmatpush.bf16.xpose.msra.mxu0 %v1441
      %1717 = vmatpush.bf16.xpose.msra.mxu0 %v1438
      %1718 = vmatpush.bf16.xpose.msra.mxu0 %v1435
      %1719 = vmatpush.bf16.xpose.msra.mxu0 %v1432
      %1720 = vmatpush.bf16.xpose.msra.mxu0 %v1429
      %1721 = vmatmul.bf16.gmra.mxu0 %v1210
      %v1722 = vpop.f32.mrf.mxu0
      %v1723 = vadd.f32 %v545, %v1722
      %v1724 = vpop.f32.mrf.mxu0
      %1725 = vdwg.mxu0
      %1726 = vmatpush.bf16.xpose.msra.mxu0 %v1474
      %1727 = vmatpush.bf16.xpose.msra.mxu0 %v1471
      %1728 = vmatpush.bf16.xpose.msra.mxu0 %v1468
      %1729 = vmatpush.bf16.xpose.msra.mxu0 %v1465
      %1730 = vmatpush.bf16.xpose.msra.mxu0 %v1462
      %1731 = vmatpush.bf16.xpose.msra.mxu0 %v1459
      %1732 = vmatpush.bf16.xpose.msra.mxu0 %v1456
      %1733 = vmatpush.bf16.xpose.msra.mxu0 %v1453
      %1734 = vmatmul.bf16.gmra.mxu0 %v1210
      %v1735 = vpop.f32.mrf.mxu0
      %v1736 = vadd.f32 %v546, %v1735
      %v1737 = vpop.f32.mrf.mxu0
      %1738 = vdwg.mxu0
      %1739 = vmatpush.bf16.xpose.msra.mxu0 %v1498
      %1740 = vmatpush.bf16.xpose.msra.mxu0 %v1495
      %1741 = vmatpush.bf16.xpose.msra.mxu0 %v1492
      %1742 = vmatpush.bf16.xpose.msra.mxu0 %v1489
      %1743 = vmatpush.bf16.xpose.msra.mxu0 %v1486
      %1744 = vmatpush.bf16.xpose.msra.mxu0 %v1483
      %1745 = vmatpush.bf16.xpose.msra.mxu0 %v1480
      %1746 = vmatpush.bf16.xpose.msra.mxu0 %v1477
      %1747 = vmatmul.bf16.gmra.mxu0 %v1210
      %v1748 = vpop.f32.mrf.mxu0
      %v1749 = vadd.f32 %v547, %v1748
      %v1750 = vpop.f32.mrf.mxu0
      %1751 = vdwg.mxu0
      %1752 = vmatpush.bf16.xpose.msra.mxu0 %v1522
      %1753 = vmatpush.bf16.xpose.msra.mxu0 %v1519
      %1754 = vmatpush.bf16.xpose.msra.mxu0 %v1516
      %1755 = vmatpush.bf16.xpose.msra.mxu0 %v1513
      %1756 = vmatpush.bf16.xpose.msra.mxu0 %v1510
      %1757 = vmatpush.bf16.xpose.msra.mxu0 %v1507
      %1758 = vmatpush.bf16.xpose.msra.mxu0 %v1504
      %1759 = vmatpush.bf16.xpose.msra.mxu0 %v1501
      %1760 = vmatmul.bf16.gmra.mxu0 %v1210
      %v1761 = vpop.f32.mrf.mxu0
      %v1762 = vadd.f32 %v548, %v1761
      %v1763 = vpop.f32.mrf.mxu0
      %1764 = vdwg.mxu0
      %1765 = vmatpush.bf16.xpose.msra.mxu0 %v1546
      %1766 = vmatpush.bf16.xpose.msra.mxu0 %v1543
      %1767 = vmatpush.bf16.xpose.msra.mxu0 %v1540
      %1768 = vmatpush.bf16.xpose.msra.mxu0 %v1537
      %1769 = vmatpush.bf16.xpose.msra.mxu0 %v1534
      %1770 = vmatpush.bf16.xpose.msra.mxu0 %v1531
      %1771 = vmatpush.bf16.xpose.msra.mxu0 %v1528
      %1772 = vmatpush.bf16.xpose.msra.mxu0 %v1525
      %1773 = vmatmul.bf16.gmra.mxu0 %v1210
      %v1774 = vpop.f32.mrf.mxu0
      %v1775 = vadd.f32 %v549, %v1774
      %v1776 = vpop.f32.mrf.mxu0
      %1777 = vdwg.mxu0
      %1778 = vmatpush.bf16.xpose.msra.mxu0 %v1570
      %1779 = vmatpush.bf16.xpose.msra.mxu0 %v1567
      %1780 = vmatpush.bf16.xpose.msra.mxu0 %v1564
      %1781 = vmatpush.bf16.xpose.msra.mxu0 %v1561
      %1782 = vmatpush.bf16.xpose.msra.mxu0 %v1558
      %1783 = vmatpush.bf16.xpose.msra.mxu0 %v1555
      %1784 = vmatpush.bf16.xpose.msra.mxu0 %v1552
      %1785 = vmatpush.bf16.xpose.msra.mxu0 %v1549
      %1786 = vmatmul.bf16.gmra.mxu0 %v1210
      %v1787 = vpop.f32.mrf.mxu0
      %v1788 = vadd.f32 %v550, %v1787
      %v1789 = vpop.f32.mrf.mxu0
      %1790 = vdwg.mxu0
      %1791 = vmatpush.bf16.xpose.msra.mxu0 %v1594
      %1792 = vmatpush.bf16.xpose.msra.mxu0 %v1591
      %1793 = vmatpush.bf16.xpose.msra.mxu0 %v1588
      %1794 = vmatpush.bf16.xpose.msra.mxu0 %v1585
      %1795 = vmatpush.bf16.xpose.msra.mxu0 %v1582
      %1796 = vmatpush.bf16.xpose.msra.mxu0 %v1579
      %1797 = vmatpush.bf16.xpose.msra.mxu0 %v1576
      %1798 = vmatpush.bf16.xpose.msra.mxu0 %v1573
      %1799 = vmatmul.bf16.gmra.mxu0 %v1210
      %v1800 = vpop.f32.mrf.mxu0
      %v1801 = vadd.f32 %v551, %v1800
      %v1802 = vpop.f32.mrf.mxu0
      %1803 = vdwg.mxu0
      %v1804 = vmax.f32 %v1606, 0.0
      %v1805 = vmax.f32 %v1619, 0.0
      %v1806 = vmax.f32 %v1632, 0.0
      %v1807 = vmax.f32 %v1645, 0.0
      %v1808 = vmax.f32 %v1658, 0.0
      %v1809 = vmax.f32 %v1671, 0.0
      %v1810 = vmax.f32 %v1684, 0.0
      %v1811 = vmax.f32 %v1697, 0.0
      %v1812 = vmax.f32 %v1710, 0.0
      %v1813 = vmax.f32 %v1723, 0.0
      %v1814 = vmax.f32 %v1736, 0.0
      %v1815 = vmax.f32 %v1749, 0.0
      %v1816 = vmax.f32 %v1762, 0.0
      %v1817 = vmax.f32 %v1775, 0.0
      %v1818 = vmax.f32 %v1788, 0.0
      %v1819 = vmax.f32 %v1801, 0.0
      %v1820 = vpack.c.bf16 %v1804, %v1804
      %v1821 = vpack.c.bf16 %v1805, %v1805
      %v1822 = vpack.c.bf16 %v1806, %v1806
      %v1823 = vpack.c.bf16 %v1807, %v1807
      %v1824 = vpack.c.bf16 %v1808, %v1808
      %v1825 = vpack.c.bf16 %v1809, %v1809
      %v1826 = vpack.c.bf16 %v1810, %v1810
      %v1827 = vpack.c.bf16 %v1811, %v1811
      %v1828 = vpack.c.bf16 %v1812, %v1812
      %v1829 = vpack.c.bf16 %v1813, %v1813
      %v1830 = vpack.c.bf16 %v1814, %v1814
      %v1831 = vpack.c.bf16 %v1815, %v1815
      %v1832 = vpack.c.bf16 %v1816, %v1816
      %v1833 = vpack.c.bf16 %v1817, %v1817
      %v1834 = vpack.c.bf16 %v1818, %v1818
      %v1835 = vpack.c.bf16 %v1819, %v1819
      %v1836 = vld [vmem:[%s3] sm:$0xff]
      %v1837 = vld [vmem:[%s3 + $0x8] sm:$0xff]
      %v1838 = vld [vmem:[%s3 + $0x10] sm:$0xff]
      %v1839 = vld [vmem:[%s3 + $0x18] sm:$0xff]
      %v1840 = vld [vmem:[%s3 + $0x20] sm:$0xff]
      %v1841 = vld [vmem:[%s3 + $0x28] sm:$0xff]
      %v1842 = vld [vmem:[%s3 + $0x30] sm:$0xff]
      %v1843 = vld [vmem:[%s3 + $0x38] sm:$0xff]
      %v1844 = vld [vmem:[%s3 + $0x40] sm:$0xff]
      %v1845 = vld [vmem:[%s3 + $0x48] sm:$0xff]
      %v1846 = vld [vmem:[%s3 + $0x50] sm:$0xff]
      %v1847 = vld [vmem:[%s3 + $0x58] sm:$0xff]
      %v1848 = vld [vmem:[%s3 + $0x60] sm:$0xff]
      %v1849 = vld [vmem:[%s3 + $0x68] sm:$0xff]
      %v1850 = vld [vmem:[%s3 + $0x70] sm:$0xff]
      %v1851 = vld [vmem:[%s3 + $0x78] sm:$0xff]
      %v1852 = vld [vmem:[%s3 + $0x80] sm:$0xff]
      %v1853 = vld [vmem:[%s3 + $0x88] sm:$0xff]
      %v1854 = vld [vmem:[%s3 + $0x90] sm:$0xff]
      %v1855 = vld [vmem:[%s3 + $0x98] sm:$0xff]
      %v1856 = vld [vmem:[%s3 + $0xa0] sm:$0xff]
      %v1857 = vld [vmem:[%s3 + $0xa8] sm:$0xff]
      %v1858 = vld [vmem:[%s3 + $0xb0] sm:$0xff]
      %v1859 = vld [vmem:[%s3 + $0xb8] sm:$0xff]
      %v1860 = vld [vmem:[%s3 + $0xc0] sm:$0xff]
      %v1861 = vld [vmem:[%s3 + $0xc8] sm:$0xff]
      %v1862 = vld [vmem:[%s3 + $0xd0] sm:$0xff]
      %v1863 = vld [vmem:[%s3 + $0xd8] sm:$0xff]
      %v1864 = vld [vmem:[%s3 + $0xe0] sm:$0xff]
      %v1865 = vld [vmem:[%s3 + $0xe8] sm:$0xff]
      %v1866 = vld [vmem:[%s3 + $0xf0] sm:$0xff]
      %v1867 = vld [vmem:[%s3 + $0xf8] sm:$0xff]
      %v1868 = vld [vmem:[%s4] sm:$0x1]
      %v1870 = vperm.slane %v1868, 0
      %v1904 = vunpack.c.l.b16 %v1836
      %v1905 = vunpack.c.h.b16 %v1836
      %v1906 = vunpack.c.l.b16 %v1837
      %v1907 = vunpack.c.h.b16 %v1837
      %v1908 = vunpack.c.l.b16 %v1838
      %v1909 = vunpack.c.h.b16 %v1838
      %v1910 = vunpack.c.l.b16 %v1839
      %v1911 = vunpack.c.h.b16 %v1839
      %v1912 = vunpack.c.l.b16 %v1840
      %v1913 = vunpack.c.h.b16 %v1840
      %v1914 = vunpack.c.l.b16 %v1841
      %v1915 = vunpack.c.h.b16 %v1841
      %v1916 = vunpack.c.l.b16 %v1842
      %v1917 = vunpack.c.h.b16 %v1842
      %v1918 = vunpack.c.l.b16 %v1843
      %v1919 = vunpack.c.h.b16 %v1843
      %v1920 = vunpack.c.l.b16 %v1844
      %v1921 = vunpack.c.h.b16 %v1844
      %v1922 = vunpack.c.l.b16 %v1845
      %v1923 = vunpack.c.h.b16 %v1845
      %v1924 = vunpack.c.l.b16 %v1846
      %v1925 = vunpack.c.h.b16 %v1846
      %v1926 = vunpack.c.l.b16 %v1847
      %v1927 = vunpack.c.h.b16 %v1847
      %v1928 = vunpack.c.l.b16 %v1848
      %v1929 = vunpack.c.h.b16 %v1848
      %v1930 = vunpack.c.l.b16 %v1849
      %v1931 = vunpack.c.h.b16 %v1849
      %v1932 = vunpack.c.l.b16 %v1850
      %v1933 = vunpack.c.h.b16 %v1850
      %v1934 = vunpack.c.l.b16 %v1851
      %v1935 = vunpack.c.h.b16 %v1851
      %v1936 = vunpack.c.l.b16 %v1852
      %v1937 = vunpack.c.h.b16 %v1852
      %v1938 = vunpack.c.l.b16 %v1853
      %v1939 = vunpack.c.h.b16 %v1853
      %v1940 = vunpack.c.l.b16 %v1854
      %v1941 = vunpack.c.h.b16 %v1854
      %v1942 = vunpack.c.l.b16 %v1855
      %v1943 = vunpack.c.h.b16 %v1855
      %v1944 = vunpack.c.l.b16 %v1856
      %v1945 = vunpack.c.h.b16 %v1856
      %v1946 = vunpack.c.l.b16 %v1857
      %v1947 = vunpack.c.h.b16 %v1857
      %v1948 = vunpack.c.l.b16 %v1858
      %v1949 = vunpack.c.h.b16 %v1858
      %v1950 = vunpack.c.l.b16 %v1859
      %v1951 = vunpack.c.h.b16 %v1859
      %v1952 = vunpack.c.l.b16 %v1860
      %v1953 = vunpack.c.h.b16 %v1860
      %v1954 = vunpack.c.l.b16 %v1861
      %v1955 = vunpack.c.h.b16 %v1861
      %v1956 = vunpack.c.l.b16 %v1862
      %v1957 = vunpack.c.h.b16 %v1862
      %v1958 = vunpack.c.l.b16 %v1863
      %v1959 = vunpack.c.h.b16 %v1863
      %v1960 = vunpack.c.l.b16 %v1864
      %v1961 = vunpack.c.h.b16 %v1864
      %v1962 = vunpack.c.l.b16 %v1865
      %v1963 = vunpack.c.h.b16 %v1865
      %v1964 = vunpack.c.l.b16 %v1866
      %v1965 = vunpack.c.h.b16 %v1866
      %v1966 = vunpack.c.l.b16 %v1867
      %v1967 = vunpack.c.h.b16 %v1867
      %v1968 = vpack.c.b16 %v1920, %v1904
      %v1969 = vpack.c.b16 %v1921, %v1905
      %v1970 = vpack.c.b16 %v1922, %v1906
      %v1971 = vpack.c.b16 %v1923, %v1907
      %v1972 = vpack.c.b16 %v1924, %v1908
      %v1973 = vpack.c.b16 %v1925, %v1909
      %v1974 = vpack.c.b16 %v1926, %v1910
      %v1975 = vpack.c.b16 %v1927, %v1911
      %v1976 = vpack.c.b16 %v1928, %v1912
      %v1977 = vpack.c.b16 %v1929, %v1913
      %v1978 = vpack.c.b16 %v1930, %v1914
      %v1979 = vpack.c.b16 %v1931, %v1915
      %v1980 = vpack.c.b16 %v1932, %v1916
      %v1981 = vpack.c.b16 %v1933, %v1917
      %v1982 = vpack.c.b16 %v1934, %v1918
      %v1983 = vpack.c.b16 %v1935, %v1919
      %v1984 = vpack.c.b16 %v1952, %v1936
      %v1985 = vpack.c.b16 %v1953, %v1937
      %v1986 = vpack.c.b16 %v1954, %v1938
      %v1987 = vpack.c.b16 %v1955, %v1939
      %v1988 = vpack.c.b16 %v1956, %v1940
      %v1989 = vpack.c.b16 %v1957, %v1941
      %v1990 = vpack.c.b16 %v1958, %v1942
      %v1991 = vpack.c.b16 %v1959, %v1943
      %v1992 = vpack.c.b16 %v1960, %v1944
      %v1993 = vpack.c.b16 %v1961, %v1945
      %v1994 = vpack.c.b16 %v1962, %v1946
      %v1995 = vpack.c.b16 %v1963, %v1947
      %v1996 = vpack.c.b16 %v1964, %v1948
      %v1997 = vpack.c.b16 %v1965, %v1949
      %v1998 = vpack.c.b16 %v1966, %v1950
      %v1999 = vpack.c.b16 %v1967, %v1951
      %2032 = vmatpush.bf16.xpose.msra.mxu0 0
      %2033 = vmatpush.bf16.xpose.msra.mxu0 0
      %2034 = vmatpush.bf16.xpose.msra.mxu0 0
      %2035 = vmatpush.bf16.xpose.msra.mxu0 0
      %2036 = vmatpush.bf16.xpose.msra.mxu0 0
      %2037 = vmatpush.bf16.xpose.msra.mxu0 0
      %2038 = vmatpush.bf16.xpose.msra.mxu0 %v1984
      %2039 = vmatpush.bf16.xpose.msra.mxu0 %v1968
      %2040 = vmatmul.bf16.gmra.mxu0 %v1820
      %v2041 = vpop.f32.mrf.mxu0
      %v2042 = vadd.f32 %v1870, %v2041
      %v2043 = vpop.f32.mrf.mxu0
      %2044 = vdwg.mxu0
      %2045 = vmatpush.bf16.xpose.msra.mxu0 0
      %2046 = vmatpush.bf16.xpose.msra.mxu0 0
      %2047 = vmatpush.bf16.xpose.msra.mxu0 0
      %2048 = vmatpush.bf16.xpose.msra.mxu0 0
      %2049 = vmatpush.bf16.xpose.msra.mxu0 0
      %2050 = vmatpush.bf16.xpose.msra.mxu0 0
      %2051 = vmatpush.bf16.xpose.msra.mxu0 %v1985
      %2052 = vmatpush.bf16.xpose.msra.mxu0 %v1969
      %2053 = vmatmul.bf16.gmra.mxu0 %v1821
      %v2054 = vpop.f32.mrf.mxu0
      %v2055 = vadd.f32 %v2042, %v2054
      %v2056 = vpop.f32.mrf.mxu0
      %2057 = vdwg.mxu0
      %2058 = vmatpush.bf16.xpose.msra.mxu0 0
      %2059 = vmatpush.bf16.xpose.msra.mxu0 0
      %2060 = vmatpush.bf16.xpose.msra.mxu0 0
      %2061 = vmatpush.bf16.xpose.msra.mxu0 0
      %2062 = vmatpush.bf16.xpose.msra.mxu0 0
      %2063 = vmatpush.bf16.xpose.msra.mxu0 0
      %2064 = vmatpush.bf16.xpose.msra.mxu0 %v1986
      %2065 = vmatpush.bf16.xpose.msra.mxu0 %v1970
      %2066 = vmatmul.bf16.gmra.mxu0 %v1822
      %v2067 = vpop.f32.mrf.mxu0
      %v2068 = vadd.f32 %v2055, %v2067
      %v2069 = vpop.f32.mrf.mxu0
      %2070 = vdwg.mxu0
      %2071 = vmatpush.bf16.xpose.msra.mxu0 0
      %2072 = vmatpush.bf16.xpose.msra.mxu0 0
      %2073 = vmatpush.bf16.xpose.msra.mxu0 0
      %2074 = vmatpush.bf16.xpose.msra.mxu0 0
      %2075 = vmatpush.bf16.xpose.msra.mxu0 0
      %2076 = vmatpush.bf16.xpose.msra.mxu0 0
      %2077 = vmatpush.bf16.xpose.msra.mxu0 %v1987
      %2078 = vmatpush.bf16.xpose.msra.mxu0 %v1971
      %2079 = vmatmul.bf16.gmra.mxu0 %v1823
      %v2080 = vpop.f32.mrf.mxu0
      %v2081 = vadd.f32 %v2068, %v2080
      %v2082 = vpop.f32.mrf.mxu0
      %2083 = vdwg.mxu0
      %2084 = vmatpush.bf16.xpose.msra.mxu0 0
      %2085 = vmatpush.bf16.xpose.msra.mxu0 0
      %2086 = vmatpush.bf16.xpose.msra.mxu0 0
      %2087 = vmatpush.bf16.xpose.msra.mxu0 0
      %2088 = vmatpush.bf16.xpose.msra.mxu0 0
      %2089 = vmatpush.bf16.xpose.msra.mxu0 0
      %2090 = vmatpush.bf16.xpose.msra.mxu0 %v1988
      %2091 = vmatpush.bf16.xpose.msra.mxu0 %v1972
      %2092 = vmatmul.bf16.gmra.mxu0 %v1824
      %v2093 = vpop.f32.mrf.mxu0
      %v2094 = vadd.f32 %v2081, %v2093
      %v2095 = vpop.f32.mrf.mxu0
      %2096 = vdwg.mxu0
      %2097 = vmatpush.bf16.xpose.msra.mxu0 0
      %2098 = vmatpush.bf16.xpose.msra.mxu0 0
      %2099 = vmatpush.bf16.xpose.msra.mxu0 0
      %2100 = vmatpush.bf16.xpose.msra.mxu0 0
      %2101 = vmatpush.bf16.xpose.msra.mxu0 0
      %2102 = vmatpush.bf16.xpose.msra.mxu0 0
      %2103 = vmatpush.bf16.xpose.msra.mxu0 %v1989
      %2104 = vmatpush.bf16.xpose.msra.mxu0 %v1973
      %2105 = vmatmul.bf16.gmra.mxu0 %v1825
      %v2106 = vpop.f32.mrf.mxu0
      %v2107 = vadd.f32 %v2094, %v2106
      %v2108 = vpop.f32.mrf.mxu0
      %2109 = vdwg.mxu0
      %2110 = vmatpush.bf16.xpose.msra.mxu0 0
      %2111 = vmatpush.bf16.xpose.msra.mxu0 0
      %2112 = vmatpush.bf16.xpose.msra.mxu0 0
      %2113 = vmatpush.bf16.xpose.msra.mxu0 0
      %2114 = vmatpush.bf16.xpose.msra.mxu0 0
      %2115 = vmatpush.bf16.xpose.msra.mxu0 0
      %2116 = vmatpush.bf16.xpose.msra.mxu0 %v1990
      %2117 = vmatpush.bf16.xpose.msra.mxu0 %v1974
      %2118 = vmatmul.bf16.gmra.mxu0 %v1826
      %v2119 = vpop.f32.mrf.mxu0
      %v2120 = vadd.f32 %v2107, %v2119
      %v2121 = vpop.f32.mrf.mxu0
      %2122 = vdwg.mxu0
      %2123 = vmatpush.bf16.xpose.msra.mxu0 0
      %2124 = vmatpush.bf16.xpose.msra.mxu0 0
      %2125 = vmatpush.bf16.xpose.msra.mxu0 0
      %2126 = vmatpush.bf16.xpose.msra.mxu0 0
      %2127 = vmatpush.bf16.xpose.msra.mxu0 0
      %2128 = vmatpush.bf16.xpose.msra.mxu0 0
      %2129 = vmatpush.bf16.xpose.msra.mxu0 %v1991
      %2130 = vmatpush.bf16.xpose.msra.mxu0 %v1975
      %2131 = vmatmul.bf16.gmra.mxu0 %v1827
      %v2132 = vpop.f32.mrf.mxu0
      %v2133 = vadd.f32 %v2120, %v2132
      %v2134 = vpop.f32.mrf.mxu0
      %2135 = vdwg.mxu0
      %2136 = vmatpush.bf16.xpose.msra.mxu0 0
      %2137 = vmatpush.bf16.xpose.msra.mxu0 0
      %2138 = vmatpush.bf16.xpose.msra.mxu0 0
      %2139 = vmatpush.bf16.xpose.msra.mxu0 0
      %2140 = vmatpush.bf16.xpose.msra.mxu0 0
      %2141 = vmatpush.bf16.xpose.msra.mxu0 0
      %2142 = vmatpush.bf16.xpose.msra.mxu0 %v1992
      %2143 = vmatpush.bf16.xpose.msra.mxu0 %v1976
      %2144 = vmatmul.bf16.gmra.mxu0 %v1828
      %v2145 = vpop.f32.mrf.mxu0
      %v2146 = vadd.f32 %v2133, %v2145
      %v2147 = vpop.f32.mrf.mxu0
      %2148 = vdwg.mxu0
      %2149 = vmatpush.bf16.xpose.msra.mxu0 0
      %2150 = vmatpush.bf16.xpose.msra.mxu0 0
      %2151 = vmatpush.bf16.xpose.msra.mxu0 0
      %2152 = vmatpush.bf16.xpose.msra.mxu0 0
      %2153 = vmatpush.bf16.xpose.msra.mxu0 0
      %2154 = vmatpush.bf16.xpose.msra.mxu0 0
      %2155 = vmatpush.bf16.xpose.msra.mxu0 %v1993
      %2156 = vmatpush.bf16.xpose.msra.mxu0 %v1977
      %2157 = vmatmul.bf16.gmra.mxu0 %v1829
      %v2158 = vpop.f32.mrf.mxu0
      %v2159 = vadd.f32 %v2146, %v2158
      %v2160 = vpop.f32.mrf.mxu0
      %2161 = vdwg.mxu0
      %2162 = vmatpush.bf16.xpose.msra.mxu0 0
      %2163 = vmatpush.bf16.xpose.msra.mxu0 0
      %2164 = vmatpush.bf16.xpose.msra.mxu0 0
      %2165 = vmatpush.bf16.xpose.msra.mxu0 0
      %2166 = vmatpush.bf16.xpose.msra.mxu0 0
      %2167 = vmatpush.bf16.xpose.msra.mxu0 0
      %2168 = vmatpush.bf16.xpose.msra.mxu0 %v1994
      %2169 = vmatpush.bf16.xpose.msra.mxu0 %v1978
      %2170 = vmatmul.bf16.gmra.mxu0 %v1830
      %v2171 = vpop.f32.mrf.mxu0
      %v2172 = vadd.f32 %v2159, %v2171
      %v2173 = vpop.f32.mrf.mxu0
      %2174 = vdwg.mxu0
      %2175 = vmatpush.bf16.xpose.msra.mxu0 0
      %2176 = vmatpush.bf16.xpose.msra.mxu0 0
      %2177 = vmatpush.bf16.xpose.msra.mxu0 0
      %2178 = vmatpush.bf16.xpose.msra.mxu0 0
      %2179 = vmatpush.bf16.xpose.msra.mxu0 0
      %2180 = vmatpush.bf16.xpose.msra.mxu0 0
      %2181 = vmatpush.bf16.xpose.msra.mxu0 %v1995
      %2182 = vmatpush.bf16.xpose.msra.mxu0 %v1979
      %2183 = vmatmul.bf16.gmra.mxu0 %v1831
      %v2184 = vpop.f32.mrf.mxu0
      %v2185 = vadd.f32 %v2172, %v2184
      %v2186 = vpop.f32.mrf.mxu0
      %2187 = vdwg.mxu0
      %2188 = vmatpush.bf16.xpose.msra.mxu0 0
      %2189 = vmatpush.bf16.xpose.msra.mxu0 0
      %2190 = vmatpush.bf16.xpose.msra.mxu0 0
      %2191 = vmatpush.bf16.xpose.msra.mxu0 0
      %2192 = vmatpush.bf16.xpose.msra.mxu0 0
      %2193 = vmatpush.bf16.xpose.msra.mxu0 0
      %2194 = vmatpush.bf16.xpose.msra.mxu0 %v1996
      %2195 = vmatpush.bf16.xpose.msra.mxu0 %v1980
      %2196 = vmatmul.bf16.gmra.mxu0 %v1832
      %v2197 = vpop.f32.mrf.mxu0
      %v2198 = vadd.f32 %v2185, %v2197
      %v2199 = vpop.f32.mrf.mxu0
      %2200 = vdwg.mxu0
      %2201 = vmatpush.bf16.xpose.msra.mxu0 0
      %2202 = vmatpush.bf16.xpose.msra.mxu0 0
      %2203 = vmatpush.bf16.xpose.msra.mxu0 0
      %2204 = vmatpush.bf16.xpose.msra.mxu0 0
      %2205 = vmatpush.bf16.xpose.msra.mxu0 0
      %2206 = vmatpush.bf16.xpose.msra.mxu0 0
      %2207 = vmatpush.bf16.xpose.msra.mxu0 %v1997
      %2208 = vmatpush.bf16.xpose.msra.mxu0 %v1981
      %2209 = vmatmul.bf16.gmra.mxu0 %v1833
      %v2210 = vpop.f32.mrf.mxu0
      %v2211 = vadd.f32 %v2198, %v2210
      %v2212 = vpop.f32.mrf.mxu0
      %2213 = vdwg.mxu0
      %2214 = vmatpush.bf16.xpose.msra.mxu0 0
      %2215 = vmatpush.bf16.xpose.msra.mxu0 0
      %2216 = vmatpush.bf16.xpose.msra.mxu0 0
      %2217 = vmatpush.bf16.xpose.msra.mxu0 0
      %2218 = vmatpush.bf16.xpose.msra.mxu0 0
      %2219 = vmatpush.bf16.xpose.msra.mxu0 0
      %2220 = vmatpush.bf16.xpose.msra.mxu0 %v1998
      %2221 = vmatpush.bf16.xpose.msra.mxu0 %v1982
      %2222 = vmatmul.bf16.gmra.mxu0 %v1834
      %v2223 = vpop.f32.mrf.mxu0
      %v2224 = vadd.f32 %v2211, %v2223
      %v2225 = vpop.f32.mrf.mxu0
      %2226 = vdwg.mxu0
      %2227 = vmatpush.bf16.xpose.msra.mxu0 0
      %2228 = vmatpush.bf16.xpose.msra.mxu0 0
      %2229 = vmatpush.bf16.xpose.msra.mxu0 0
      %2230 = vmatpush.bf16.xpose.msra.mxu0 0
      %2231 = vmatpush.bf16.xpose.msra.mxu0 0
      %2232 = vmatpush.bf16.xpose.msra.mxu0 0
      %2233 = vmatpush.bf16.xpose.msra.mxu0 %v1999
      %2234 = vmatpush.bf16.xpose.msra.mxu0 %v1983
      %2235 = vmatmul.bf16.gmra.mxu0 %v1835
      %v2236 = vpop.f32.mrf.mxu0
      %v2237 = vadd.f32 %v2224, %v2236
      %v2238 = vpop.f32.mrf.mxu0
      %2239 = vdwg.mxu0
      %v2240 = vunpack.c.l.bf16 %v275
      %v2241 = vadd.f32 %v2240, %v2237
      %v2242 = vld [vmem:[%s5] sm:$0x1]
      %v2243 = vld [vmem:[%s6] sm:$0x1]
      %v2244 = vsel %vm1208, %v2241, 0.0
      %2245 = vadd.xlane.f32.xlu0 %v2244
      %v2246 = vpop.xlane.xlu0 %2245
      %v2247 = vrcp.pop 32.0
      %v2248 = vmul.f32 32.0, %v2247
      %v2249 = vsub.f32 1.0, %v2248
      %v2250 = vmul.f32 %v2247, %v2249
      %v2251 = vadd.f32 %v2247, %v2250
      %vm2252 = vweird.f32 %v2247
      %v2253 = vsel %vm2252, %v2247, %v2251
      %v2254 = vmul.f32 %v2246, %v2253
      %v2255 = vsub.f32 %v2241, %v2254
      %v2256 = vmul.f32 %v2255, %v2255
      %v2257 = vsel %vm1208, %v2256, 0.0
      %2258 = vadd.xlane.f32.xlu0 %v2257
      %v2259 = vpop.xlane.xlu0 %2258
      %v2260 = vmul.f32 %v2259, %v2253
      %v2261 = vadd.f32 %v2260, 1e-05
      %v2262 = vrsqrt.pop %v2261
      %v2263 = vmul.f32 %v2262, %v2261
      %v2264 = vmul.f32 %v2263, %v2262
      %v2265 = vmul.f32 0.5, %v2264
      %v2266 = vsub.f32 1.5, %v2265
      %v2267 = vmul.f32 %v2262, %v2266
      %vm2268 = vweird.f32 %v2261
      %vm2269 = vweird.f32 %v2262
      %vm2270 = vmor %vm2268, %vm2269
      %v2271 = vsel %vm2270, %v2262, %v2267
      %v2272 = vmul.f32 %v2255, %v2271
      %v2274 = vperm.slane %v2242, 0
      %v2276 = vmul.f32 %v2272, %v2274
      %v2278 = vperm.slane %v2243, 0
      %v2280 = vadd.f32 %v2276, %v2278
      %v2281 = vpack.c.bf16 %v2280, %v2280
      %vm2282 = vcmask 257024
      %2283 = vst.msk [vmem:[%s273] sm:$0xf] %vm2282, %v2281
      %p2284 = scmp.lt.s32.totalorder %s18, 1
      %s2285 = scalar_select %p2284, %s18, 1
      %s2286 = smul.addr %s2285, 4
      %s2287 = scalar_lea.vmem %s7, %s2286
      // Predicated region
      $region49: #{transformer_forward.11} parent=47 // pred_check
        %p2288 = pneg %p188
      $region50: #{transformer_forward.11} parent=47 // pred_check_branch
        %2290 = sbr.rel (%p2288) target = $region52
      $region51: #{transformer_forward.11} parent=47 // pred_region
        _
      $region52: #{transformer_forward.11} parent=47 // pred_fallthru
        _
    $region48: #{transformer_forward.11} parent=5 // pred_fallthru
      _
    %p2291 = scmp.le.s32.totalorder 2, %s13
    // Predicated region
    $region53: #{transformer_forward.11} parent=5 // pred_check
      %p2292 = pneg %p2291
    $region54: #{transformer_forward.11} parent=5 // pred_check_branch
      %2294 = sbr.rel (%p2292) target = $region56
    $region55: #{transformer_forward.11} parent=5 // pred_region
      %s2295 = ssub.s32 %s13, 2
      // Predicated region
      $region57: #{transformer_forward.11} parent=55 // pred_check
        %p2296 = pneg %p194
      $region58: #{transformer_forward.11} parent=55 // pred_check_branch
        %2298 = sbr.rel (%p2296) target = $region60
      $region59: #{transformer_forward.11} parent=55 // pred_region
        %p2299 = scmp.lt.s32.totalorder %s19, 1
        %s2300 = scalar_select %p2299, %s19, 1
        %s2301 = smul.addr %s2300, 4
        %s2302 = scalar_lea.vmem %s7, %s2301
      $region60: #{transformer_forward.11} parent=55 // pred_fallthru
        _
    $region56: #{transformer_forward.11} parent=5 // pred_fallthru
      _
  $region6: #{transformer_forward.11} parent=0 // loop_footer
    %s17 = sadd.s32 1, %s13
  $region7: #{transformer_forward.11} parent=0 // loop_footer_branch
    %12 = sbr.rel target = $region3
  $region8: #{transformer_forward.11} parent=0 // loop_exit
    _

</llo_original>
